<compile_context>
chip_gen: v6e
topology: v6e:2x2x1
jax: 0.10.0
libtpu: 0.0.40
codegen_flags: <defaults>
</compile_context>

<pallas_src>
import functools
import math

import jax
import jax.numpy as jnp
from jax import lax
from jax.experimental import pallas as pl

# ---- synthetic small GPT-2 config (deterministic init; no checkpoint load) ----
VOCAB = 64
N_LAYER = 2
N_HEAD = 4
N_EMBD = 32
N_POS = 32
LN_EPS = 1e-5
LANE = 128
VOCAB_PAD = ((VOCAB + LANE - 1) // LANE) * LANE  # 128 -> lane-dense LM-head output

# row layout of the packed "small params" slab (per layer; 9 rows each, then 2 global)
R_LN1G, R_LN1B, R_LN2G, R_LN2B, R_BQ, R_BK, R_BV, R_BPROJ, R_BMLP = range(9)
ROWS_PER_LAYER = 9


def _gelu_new(x):
    # GPT-2 "gelu_new" (tanh approximation), kept in f32 (VPU/EUP friendly on all gens)
    return 0.5 * x * (1.0 + jnp.tanh(
        math.sqrt(2.0 / math.pi) * (x + 0.044715 * x * x * x)))


def _layernorm(x, g, b):
    mu = jnp.mean(x, axis=-1, keepdims=True)
    var = jnp.mean(jnp.square(x - mu), axis=-1, keepdims=True)
    return (x - mu) * lax.rsqrt(var + LN_EPS) * g + b


# --------------------------- the fused Pallas kernel --------------------------

def _decoder_kernel(emb_ref, mask_ref, small_ref, bfc_ref,
                    wqkv_ref, wproj_ref, wfc_ref, wmlp_ref, wlm_ref,
                    out_ref, *, n_head):
    B, S = mask_ref.shape
    H = emb_ref.shape[1]
    dH = H // n_head
    n_layer = wqkv_ref.shape[0]

    # residual stream stays resident for the whole forward (positional add was
    # folded into emb in the wrapper)
    h = emb_ref[...]                                     # (B*S, H) f32

    # combined causal + padding masks, built once per batch and reused by every
    # layer/head (hoisted out of the layer loop; JAX does not CSE broadcasts)
    row = lax.broadcasted_iota(jnp.int32, (S, S), 0)
    col = lax.broadcasted_iota(jnp.int32, (S, S), 1)
    causal = col <= row
    keep = [jnp.logical_and(causal, mask_ref[b:b + 1, :] > 0.5) for b in range(B)]

    def vec(r):
        # one packed 32-wide parameter row -> (1, H), broadcasts against (B*S, H)
        return small_ref[r:r + 1, :]

    for l in range(n_layer):                             # static (unrolled) layer loop
        base = l * ROWS_PER_LAYER

        # ---------------- attention sub-block (pre-LN) ----------------
        x = _layernorm(h, vec(base + R_LN1G), vec(base + R_LN1B))
        qkv = jnp.dot(x, wqkv_ref[l], preferred_element_type=jnp.float32)
        # 1/sqrt(dH) is already folded into the Q columns of wqkv and into b_q
        q = qkv[:, 0 * H:1 * H] + vec(base + R_BQ)
        k = qkv[:, 1 * H:2 * H] + vec(base + R_BK)
        v = qkv[:, 2 * H:3 * H] + vec(base + R_BV)

        batch_out = []
        for b in range(B):                               # static in-register slicing
            qb = q[b * S:(b + 1) * S, :]                 # (S, H)
            vb = v[b * S:(b + 1) * S, :]                 # (S, H)
            kbT = k[b * S:(b + 1) * S, :].T              # one transpose per (layer,batch)
            head_out = []
            for hd in range(n_head):
                qh = qb[:, hd * dH:(hd + 1) * dH]        # (S, dH)
                khT = kbT[hd * dH:(hd + 1) * dH, :]      # (dH, S) -- plain contraction
                vh = vb[:, hd * dH:(hd + 1) * dH]        # (S, dH)
                s = jnp.dot(qh, khT, preferred_element_type=jnp.float32)   # (S, S)
                s = jnp.where(keep[b], s, -1e9)
                s_max = jnp.max(s, axis=-1, keepdims=True)
                p = jnp.exp(s - s_max)
                denom = jnp.sum(p, axis=-1, keepdims=True)
                o = jnp.dot(p, vh, preferred_element_type=jnp.float32)     # (S, dH)
                # deferred softmax normalization on the small output (EUP slot)
                head_out.append(o * pl.reciprocal(denom, approx=True))
            batch_out.append(jnp.concatenate(head_out, axis=-1))           # (S, H)
        attn = jnp.concatenate(batch_out, axis=0)        # (B*S, H), stays in registers

        h = h + jnp.dot(attn, wproj_ref[l],
                        preferred_element_type=jnp.float32) + vec(base + R_BPROJ)

        # ---------------- MLP sub-block (pre-LN) ----------------
        x = _layernorm(h, vec(base + R_LN2G), vec(base + R_LN2B))
        m = jnp.dot(x, wfc_ref[l], preferred_element_type=jnp.float32) + bfc_ref[l:l + 1, :]
        m = _gelu_new(m)
        h = h + jnp.dot(m, wmlp_ref[l],
                        preferred_element_type=jnp.float32) + vec(base + R_BMLP)

    # ---------------- final LN + tied LM head (lane-dense, padded) ----------------
    gbase = n_layer * ROWS_PER_LAYER
    hf = _layernorm(h, vec(gbase + 0), vec(gbase + 1))
    out_ref[...] = jnp.dot(hf, wlm_ref[...], preferred_element_type=jnp.float32)


# --------------------------- params & wrapper --------------------------------

def init_params(key):
    keys = jax.random.split(key, 4 + N_LAYER)

    def nrm(k, shape):
        return 0.02 * jax.random.normal(k, shape, jnp.float32)

    wte = nrm(keys[0], (VOCAB, N_EMBD))
    wpe = nrm(keys[1], (N_POS, N_EMBD))
    lnf_g = 1.0 + nrm(keys[2], (1, N_EMBD))
    lnf_b = nrm(keys[3], (1, N_EMBD))

    layers = []
    for l in range(N_LAYER):
        lk = jax.random.split(keys[4 + l], 12)
        layers.append(dict(
            ln1_g=1.0 + nrm(lk[0], (1, N_EMBD)),
            ln1_b=nrm(lk[1], (1, N_EMBD)),
            w_qkv=nrm(lk[2], (N_EMBD, 3 * N_EMBD)),
            b_qkv=nrm(lk[3], (1, 3 * N_EMBD)),
            w_proj=nrm(lk[4], (N_EMBD, N_EMBD)),
            b_proj=nrm(lk[5], (1, N_EMBD)),
            ln2_g=1.0 + nrm(lk[6], (1, N_EMBD)),
            ln2_b=nrm(lk[7], (1, N_EMBD)),
            w_fc=nrm(lk[8], (N_EMBD, 4 * N_EMBD)),
            b_fc=nrm(lk[9], (1, 4 * N_EMBD)),
            w_mlp=nrm(lk[10], (4 * N_EMBD, N_EMBD)),
            b_mlp=nrm(lk[11], (1, N_EMBD)),
        ))

    # raw per-layer stacks (kept for the pure-JAX reference)
    raw = {name: jnp.stack([layers[l][name] for l in range(N_LAYER)], axis=0)
           for name in layers[0]}

    # ----- kernel-packed / pre-folded forms -----
    scale = 1.0 / math.sqrt(N_EMBD // N_HEAD)
    # fold attention scale into the Q columns of w_qkv (and b_q below)
    col_scale = jnp.concatenate([jnp.full((N_EMBD,), scale, jnp.float32),
                                 jnp.ones((2 * N_EMBD,), jnp.float32)])
    w_qkv_s = raw["w_qkv"] * col_scale[None, None, :]

    small_rows = []
    for l in range(N_LAYER):
        p = layers[l]
        b_q = p["b_qkv"][0, 0:N_EMBD] * scale
        b_k = p["b_qkv"][0, N_EMBD:2 * N_EMBD]
        b_v = p["b_qkv"][0, 2 * N_EMBD:3 * N_EMBD]
        small_rows += [p["ln1_g"][0], p["ln1_b"][0], p["ln2_g"][0], p["ln2_b"][0],
                       b_q, b_k, b_v, p["b_proj"][0], p["b_mlp"][0]]
    small_rows += [lnf_g[0], lnf_b[0]]
    small = jnp.stack(small_rows, axis=0)                 # (9*N_LAYER + 2, H)

    b_fc_slab = raw["b_fc"][:, 0, :]                      # (N_LAYER, 4H) -- lane-dense

    # Tied LM head: pre-transposed and zero-padded to (H, 128) at init time
    wlm_T = jnp.zeros((N_EMBD, VOCAB_PAD), jnp.float32).at[:, :VOCAB].set(wte.T)

    params = dict(
        wte=wte, wpe=wpe, ln_f_g=lnf_g, ln_f_b=lnf_b,
        # kernel inputs (packed / pre-folded)
        small=small, b_fc_slab=b_fc_slab,
        w_qkv_s=w_qkv_s, w_proj_s=raw["w_proj"], w_fc_s=raw["w_fc"],
        w_mlp_s=raw["w_mlp"], wlm_T=wlm_T,
    )
    params.update({"raw_" + k: v for k, v in raw.items()})
    return params


def text_decoder_forward(params, embedding, attention_mask=None):
    """Equivalent of TextDecoder.forward: GPT2LMHeadModel(inputs_embeds=...) -> logits."""
    B, S, H = embedding.shape
    if S > N_POS:
        raise ValueError(f"sequence length {S} exceeds n_positions {N_POS}")
    if attention_mask is None:
        attention_mask = jnp.ones((B, S), jnp.float32)
    mask = attention_mask.astype(jnp.float32)

    # positional add folded into the wrapper (one fewer kernel input / DMA + VPU add)
    emb2d = (embedding.astype(jnp.float32).reshape(B * S, H)
             + jnp.tile(params["wpe"][:S], (B, 1)))

    kern = functools.partial(_decoder_kernel, n_head=N_HEAD)
    logits_pad = pl.pallas_call(
        kern,
        out_shape=jax.ShapeDtypeStruct((B * S, VOCAB_PAD), jnp.float32),
    )(emb2d, mask, params["small"], params["b_fc_slab"],
      params["w_qkv_s"], params["w_proj_s"], params["w_fc_s"],
      params["w_mlp_s"], params["wlm_T"])

    return logits_pad[:, :VOCAB].reshape(B, S, VOCAB)


# --------------------------- pure-JAX reference (for self-check) --------------

def text_decoder_reference(params, embedding, attention_mask=None):
    B, S, H = embedding.shape
    dH = H // N_HEAD
    if attention_mask is None:
        attention_mask = jnp.ones((B, S), jnp.float32)
    mask = attention_mask.astype(jnp.float32)

    def ln(x, g, b):
        mu = jnp.mean(x, -1, keepdims=True)
        var = jnp.mean(jnp.square(x - mu), -1, keepdims=True)
        return (x - mu) * lax.rsqrt(var + LN_EPS) * g + b

    h = embedding.astype(jnp.float32) + params["wpe"][:S][None]
    causal = jnp.tril(jnp.ones((S, S), bool))
    keep = causal[None, None] & (mask[:, None, None, :] > 0.5)  # (B,1,S,S)

    for l in range(N_LAYER):
        x = ln(h, params["raw_ln1_g"][l], params["raw_ln1_b"][l])
        qkv = x @ params["raw_w_qkv"][l] + params["raw_b_qkv"][l]
        q, k, v = jnp.split(qkv, 3, axis=-1)

        def heads(t):
            return t.reshape(B, S, N_HEAD, dH).transpose(0, 2, 1, 3)

        qh, kh, vh = heads(q), heads(k), heads(v)
        s = jnp.einsum("bhqd,bhkd->bhqk", qh, kh) / math.sqrt(dH)
        s = jnp.where(keep, s, -1e9)
        p = jax.nn.softmax(s, axis=-1)
        a = jnp.einsum("bhqk,bhkd->bhqd", p, vh).transpose(0, 2, 1, 3).reshape(B, S, H)
        h = h + (a @ params["raw_w_proj"][l] + params["raw_b_proj"][l])

        x = ln(h, params["raw_ln2_g"][l], params["raw_ln2_b"][l])
        m = _gelu_new(x @ params["raw_w_fc"][l] + params["raw_b_fc"][l])
        h = h + (m @ params["raw_w_mlp"][l] + params["raw_b_mlp"][l])

    hf = ln(h, params["ln_f_g"], params["ln_f_b"])
    return hf @ params["wte"].T


if __name__ == "__main__":
    B, S = 2, 8
    key = jax.random.PRNGKey(0)
    k_param, k_emb = jax.random.split(key)

    params = init_params(k_param)
    embedding = jax.random.normal(k_emb, (B, S, N_EMBD), jnp.float32)
    # attention_mask: batch 0 fully valid, batch 1 has 2 padding positions
    attention_mask = jnp.array(
        [[1] * S, [1] * (S - 2) + [0, 0]], dtype=jnp.float32)

    fwd = jax.jit(text_decoder_forward)
    logits = fwd(params, embedding, attention_mask)
    jax.block_until_ready(logits)

    assert logits.shape == (B, S, VOCAB), logits.shape
    assert bool(jnp.all(jnp.isfinite(logits)))

    ref = text_decoder_reference(params, embedding, attention_mask)
    max_err = float(jnp.max(jnp.abs(logits - ref)))
    assert max_err < 2e-2, f"max abs error vs reference: {max_err}"

    print("KERNEL_OK")
</pallas_src>

<mosaic_0001>
module attributes {stable_mosaic.version = 11 : i64} {
  func.func @_decoder_kernel(%arg0: memref<16x32xf32, #tpu.memory_space<vmem>>, %arg1: memref<2x8xf32, #tpu.memory_space<vmem>>, %arg2: memref<20x32xf32, #tpu.memory_space<vmem>>, %arg3: memref<2x128xf32, #tpu.memory_space<vmem>>, %arg4: memref<2x32x96xf32, #tpu.memory_space<vmem>>, %arg5: memref<2x32x32xf32, #tpu.memory_space<vmem>>, %arg6: memref<2x32x128xf32, #tpu.memory_space<vmem>>, %arg7: memref<2x128x32xf32, #tpu.memory_space<vmem>>, %arg8: memref<32x128xf32, #tpu.memory_space<vmem>>, %arg9: memref<16x128xf32, #tpu.memory_space<vmem>>) attributes {dimension_semantics = [], scalar_prefetch = 0 : i64, scratch_operands = 0 : i64, tpu.core_type = #tpu.core_type<tc>} {
    %c0 = arith.constant 0 : index
    %c0_0 = arith.constant 0 : index
    %0 = vector.load %arg0[%c0, %c0_0] : memref<16x32xf32, #tpu.memory_space<vmem>>, vector<16x32xf32>
    %1 = tpu.iota {dimensions = array<i32: 0>} : vector<8x8xi32>
    %2 = tpu.iota {dimensions = array<i32: 1>} : vector<8x8xi32>
    %3 = arith.cmpi sle, %2, %1 : vector<8x8xi32>
    %c0_1 = arith.constant 0 : index
    %c0_2 = arith.constant 0 : index
    %4 = vector.load %arg1[%c0_1, %c0_2] : memref<2x8xf32, #tpu.memory_space<vmem>>, vector<1x8xf32>
    %cst = arith.constant 5.000000e-01 : f32
    %5 = vector.broadcast %cst : f32 to vector<1x8xf32>
    %6 = arith.cmpf ogt, %4, %5 : vector<1x8xf32>
    %7 = vector.broadcast %6 : vector<1x8xi1> to vector<8x8xi1>
    %8 = arith.andi %3, %7 : vector<8x8xi1>
    %c1 = arith.constant 1 : index
    %c0_3 = arith.constant 0 : index
    %9 = vector.load %arg1[%c1, %c0_3] : memref<2x8xf32, #tpu.memory_space<vmem>>, vector<1x8xf32>
    %cst_4 = arith.constant 5.000000e-01 : f32
    %10 = vector.broadcast %cst_4 : f32 to vector<1x8xf32>
    %11 = arith.cmpf ogt, %9, %10 : vector<1x8xf32>
    %12 = vector.broadcast %11 : vector<1x8xi1> to vector<8x8xi1>
    %13 = arith.andi %3, %12 : vector<8x8xi1>
    %c0_5 = arith.constant 0 : index
    %c0_6 = arith.constant 0 : index
    %14 = vector.load %arg2[%c0_5, %c0_6] : memref<20x32xf32, #tpu.memory_space<vmem>>, vector<1x32xf32>
    %c1_7 = arith.constant 1 : index
    %c0_8 = arith.constant 0 : index
    %15 = vector.load %arg2[%c1_7, %c0_8] : memref<20x32xf32, #tpu.memory_space<vmem>>, vector<1x32xf32>
    %cst_9 = arith.constant dense<0.000000e+00> : vector<16xf32>
    %16 = vector.multi_reduction <add>, %0, %cst_9 [1] : vector<16x32xf32> to vector<16xf32>
    %17 = vector.shape_cast %16 : vector<16xf32> to vector<16x1xf32>
    %cst_10 = arith.constant 3.200000e+01 : f32
    %18 = vector.broadcast %cst_10 : f32 to vector<16x1xf32>
    %19 = arith.divf %17, %18 : vector<16x1xf32>
    %20 = vector.broadcast %19 : vector<16x1xf32> to vector<16x32xf32>
    %21 = arith.subf %0, %20 : vector<16x32xf32>
    %22 = arith.mulf %21, %21 : vector<16x32xf32>
    %cst_11 = arith.constant dense<0.000000e+00> : vector<16xf32>
    %23 = vector.multi_reduction <add>, %22, %cst_11 [1] : vector<16x32xf32> to vector<16xf32>
    %24 = vector.shape_cast %23 : vector<16xf32> to vector<16x1xf32>
    %cst_12 = arith.constant 3.200000e+01 : f32
    %25 = vector.broadcast %cst_12 : f32 to vector<16x1xf32>
    %26 = arith.divf %24, %25 : vector<16x1xf32>
    %27 = vector.broadcast %19 : vector<16x1xf32> to vector<16x32xf32>
    %28 = arith.subf %0, %27 : vector<16x32xf32>
    %cst_13 = arith.constant 9.99999974E-6 : f32
    %29 = vector.broadcast %cst_13 : f32 to vector<16x1xf32>
    %30 = arith.addf %26, %29 : vector<16x1xf32>
    %31 = math.rsqrt %30 : vector<16x1xf32>
    %32 = vector.broadcast %31 : vector<16x1xf32> to vector<16x32xf32>
    %33 = arith.mulf %28, %32 : vector<16x32xf32>
    %34 = vector.broadcast %14 : vector<1x32xf32> to vector<16x32xf32>
    %35 = arith.mulf %33, %34 : vector<16x32xf32>
    %36 = vector.broadcast %15 : vector<1x32xf32> to vector<16x32xf32>
    %37 = arith.addf %35, %36 : vector<16x32xf32>
    %c0_14 = arith.constant 0 : index
    %c0_15 = arith.constant 0 : index
    %c0_16 = arith.constant 0 : index
    %38 = vector.load %arg4[%c0_14, %c0_15, %c0_16] : memref<2x32x96xf32, #tpu.memory_space<vmem>>, vector<1x32x96xf32>
    %39 = vector.shape_cast %38 : vector<1x32x96xf32> to vector<32x96xf32>
    %cst_17 = arith.constant dense<0.000000e+00> : vector<16x96xf32>
    %40 = tpu.matmul %37, %39, %cst_17 {dimension_numbers = #tpu.dot_dimension_numbers<[1], [0], [0], [1], [0, 0, 1, 1], [], []>} : vector<16x32xf32>, vector<32x96xf32>, vector<16x96xf32> -> vector<16x96xf32>
    %41 = vector.extract_strided_slice %40 {offsets = [0, 0], sizes = [16, 32], strides = [1, 1]} : vector<16x96xf32> to vector<16x32xf32>
    %c4 = arith.constant 4 : index
    %c0_18 = arith.constant 0 : index
    %42 = vector.load %arg2[%c4, %c0_18] : memref<20x32xf32, #tpu.memory_space<vmem>>, vector<1x32xf32>
    %43 = vector.broadcast %42 : vector<1x32xf32> to vector<16x32xf32>
    %44 = arith.addf %41, %43 : vector<16x32xf32>
    %45 = vector.extract_strided_slice %40 {offsets = [0, 32], sizes = [16, 32], strides = [1, 1]} : vector<16x96xf32> to vector<16x32xf32>
    %c5 = arith.constant 5 : index
    %c0_19 = arith.constant 0 : index
    %46 = vector.load %arg2[%c5, %c0_19] : memref<20x32xf32, #tpu.memory_space<vmem>>, vector<1x32xf32>
    %47 = vector.broadcast %46 : vector<1x32xf32> to vector<16x32xf32>
    %48 = arith.addf %45, %47 : vector<16x32xf32>
    %49 = vector.extract_strided_slice %40 {offsets = [0, 64], sizes = [16, 32], strides = [1, 1]} : vector<16x96xf32> to vector<16x32xf32>
    %c6 = arith.constant 6 : index
    %c0_20 = arith.constant 0 : index
    %50 = vector.load %arg2[%c6, %c0_20] : memref<20x32xf32, #tpu.memory_space<vmem>>, vector<1x32xf32>
    %51 = vector.broadcast %50 : vector<1x32xf32> to vector<16x32xf32>
    %52 = arith.addf %49, %51 : vector<16x32xf32>
    %53 = vector.extract_strided_slice %44 {offsets = [0, 0], sizes = [8, 32], strides = [1, 1]} : vector<16x32xf32> to vector<8x32xf32>
    %54 = vector.extract_strided_slice %52 {offsets = [0, 0], sizes = [8, 32], strides = [1, 1]} : vector<16x32xf32> to vector<8x32xf32>
    %55 = vector.extract_strided_slice %48 {offsets = [0, 0], sizes = [8, 32], strides = [1, 1]} : vector<16x32xf32> to vector<8x32xf32>
    %56 = tpu.transpose %55, [1, 0] : vector<8x32xf32> -> vector<32x8xf32>
    %57 = vector.extract_strided_slice %53 {offsets = [0, 0], sizes = [8, 8], strides = [1, 1]} : vector<8x32xf32> to vector<8x8xf32>
    %58 = vector.extract_strided_slice %56 {offsets = [0, 0], sizes = [8, 8], strides = [1, 1]} : vector<32x8xf32> to vector<8x8xf32>
    %59 = vector.extract_strided_slice %54 {offsets = [0, 0], sizes = [8, 8], strides = [1, 1]} : vector<8x32xf32> to vector<8x8xf32>
    %cst_21 = arith.constant dense<0.000000e+00> : vector<8x8xf32>
    %60 = tpu.matmul %57, %58, %cst_21 {dimension_numbers = #tpu.dot_dimension_numbers<[1], [0], [0], [1], [0, 0, 1, 1], [], []>} : vector<8x8xf32>, vector<8x8xf32>, vector<8x8xf32> -> vector<8x8xf32>
    %cst_22 = arith.constant -1.000000e+09 : f32
    %61 = vector.broadcast %cst_22 : f32 to vector<8x8xf32>
    %62 = arith.select %8, %60, %61 : vector<8x8xi1>, vector<8x8xf32>
    %cst_23 = arith.constant dense<0xFF800000> : vector<8xf32>
    %63 = vector.multi_reduction <maximumf>, %62, %cst_23 [1] : vector<8x8xf32> to vector<8xf32>
    %64 = vector.shape_cast %63 : vector<8xf32> to vector<8x1xf32>
    %65 = vector.broadcast %64 : vector<8x1xf32> to vector<8x8xf32>
    %66 = arith.subf %62, %65 : vector<8x8xf32>
    %67 = math.exp %66 : vector<8x8xf32>
    %cst_24 = arith.constant dense<0.000000e+00> : vector<8xf32>
    %68 = vector.multi_reduction <add>, %67, %cst_24 [1] : vector<8x8xf32> to vector<8xf32>
    %69 = vector.shape_cast %68 : vector<8xf32> to vector<8x1xf32>
    %cst_25 = arith.constant dense<0.000000e+00> : vector<8x8xf32>
    %70 = tpu.matmul %67, %59, %cst_25 {dimension_numbers = #tpu.dot_dimension_numbers<[1], [0], [0], [1], [0, 0, 1, 1], [], []>} : vector<8x8xf32>, vector<8x8xf32>, vector<8x8xf32> -> vector<8x8xf32>
    %71 = tpu.reciprocal %69 {approx = true} : vector<8x1xf32> -> vector<8x1xf32>
    %72 = vector.broadcast %71 : vector<8x1xf32> to vector<8x8xf32>
    %73 = arith.mulf %70, %72 : vector<8x8xf32>
    %74 = vector.extract_strided_slice %53 {offsets = [0, 8], sizes = [8, 8], strides = [1, 1]} : vector<8x32xf32> to vector<8x8xf32>
    %75 = vector.extract_strided_slice %56 {offsets = [8, 0], sizes = [8, 8], strides = [1, 1]} : vector<32x8xf32> to vector<8x8xf32>
    %76 = vector.extract_strided_slice %54 {offsets = [0, 8], sizes = [8, 8], strides = [1, 1]} : vector<8x32xf32> to vector<8x8xf32>
    %cst_26 = arith.constant dense<0.000000e+00> : vector<8x8xf32>
    %77 = tpu.matmul %74, %75, %cst_26 {dimension_numbers = #tpu.dot_dimension_numbers<[1], [0], [0], [1], [0, 0, 1, 1], [], []>} : vector<8x8xf32>, vector<8x8xf32>, vector<8x8xf32> -> vector<8x8xf32>
    %cst_27 = arith.constant -1.000000e+09 : f32
    %78 = vector.broadcast %cst_27 : f32 to vector<8x8xf32>
    %79 = arith.select %8, %77, %78 : vector<8x8xi1>, vector<8x8xf32>
    %cst_28 = arith.constant dense<0xFF800000> : vector<8xf32>
    %80 = vector.multi_reduction <maximumf>, %79, %cst_28 [1] : vector<8x8xf32> to vector<8xf32>
    %81 = vector.shape_cast %80 : vector<8xf32> to vector<8x1xf32>
    %82 = vector.broadcast %81 : vector<8x1xf32> to vector<8x8xf32>
    %83 = arith.subf %79, %82 : vector<8x8xf32>
    %84 = math.exp %83 : vector<8x8xf32>
    %cst_29 = arith.constant dense<0.000000e+00> : vector<8xf32>
    %85 = vector.multi_reduction <add>, %84, %cst_29 [1] : vector<8x8xf32> to vector<8xf32>
    %86 = vector.shape_cast %85 : vector<8xf32> to vector<8x1xf32>
    %cst_30 = arith.constant dense<0.000000e+00> : vector<8x8xf32>
    %87 = tpu.matmul %84, %76, %cst_30 {dimension_numbers = #tpu.dot_dimension_numbers<[1], [0], [0], [1], [0, 0, 1, 1], [], []>} : vector<8x8xf32>, vector<8x8xf32>, vector<8x8xf32> -> vector<8x8xf32>
    %88 = tpu.reciprocal %86 {approx = true} : vector<8x1xf32> -> vector<8x1xf32>
    %89 = vector.broadcast %88 : vector<8x1xf32> to vector<8x8xf32>
    %90 = arith.mulf %87, %89 : vector<8x8xf32>
    %91 = vector.extract_strided_slice %53 {offsets = [0, 16], sizes = [8, 8], strides = [1, 1]} : vector<8x32xf32> to vector<8x8xf32>
    %92 = vector.extract_strided_slice %56 {offsets = [16, 0], sizes = [8, 8], strides = [1, 1]} : vector<32x8xf32> to vector<8x8xf32>
    %93 = vector.extract_strided_slice %54 {offsets = [0, 16], sizes = [8, 8], strides = [1, 1]} : vector<8x32xf32> to vector<8x8xf32>
    %cst_31 = arith.constant dense<0.000000e+00> : vector<8x8xf32>
    %94 = tpu.matmul %91, %92, %cst_31 {dimension_numbers = #tpu.dot_dimension_numbers<[1], [0], [0], [1], [0, 0, 1, 1], [], []>} : vector<8x8xf32>, vector<8x8xf32>, vector<8x8xf32> -> vector<8x8xf32>
    %cst_32 = arith.constant -1.000000e+09 : f32
    %95 = vector.broadcast %cst_32 : f32 to vector<8x8xf32>
    %96 = arith.select %8, %94, %95 : vector<8x8xi1>, vector<8x8xf32>
    %cst_33 = arith.constant dense<0xFF800000> : vector<8xf32>
    %97 = vector.multi_reduction <maximumf>, %96, %cst_33 [1] : vector<8x8xf32> to vector<8xf32>
    %98 = vector.shape_cast %97 : vector<8xf32> to vector<8x1xf32>
    %99 = vector.broadcast %98 : vector<8x1xf32> to vector<8x8xf32>
    %100 = arith.subf %96, %99 : vector<8x8xf32>
    %101 = math.exp %100 : vector<8x8xf32>
    %cst_34 = arith.constant dense<0.000000e+00> : vector<8xf32>
    %102 = vector.multi_reduction <add>, %101, %cst_34 [1] : vector<8x8xf32> to vector<8xf32>
    %103 = vector.shape_cast %102 : vector<8xf32> to vector<8x1xf32>
    %cst_35 = arith.constant dense<0.000000e+00> : vector<8x8xf32>
    %104 = tpu.matmul %101, %93, %cst_35 {dimension_numbers = #tpu.dot_dimension_numbers<[1], [0], [0], [1], [0, 0, 1, 1], [], []>} : vector<8x8xf32>, vector<8x8xf32>, vector<8x8xf32> -> vector<8x8xf32>
    %105 = tpu.reciprocal %103 {approx = true} : vector<8x1xf32> -> vector<8x1xf32>
    %106 = vector.broadcast %105 : vector<8x1xf32> to vector<8x8xf32>
    %107 = arith.mulf %104, %106 : vector<8x8xf32>
    %108 = vector.extract_strided_slice %53 {offsets = [0, 24], sizes = [8, 8], strides = [1, 1]} : vector<8x32xf32> to vector<8x8xf32>
    %109 = vector.extract_strided_slice %56 {offsets = [24, 0], sizes = [8, 8], strides = [1, 1]} : vector<32x8xf32> to vector<8x8xf32>
    %110 = vector.extract_strided_slice %54 {offsets = [0, 24], sizes = [8, 8], strides = [1, 1]} : vector<8x32xf32> to vector<8x8xf32>
    %cst_36 = arith.constant dense<0.000000e+00> : vector<8x8xf32>
    %111 = tpu.matmul %108, %109, %cst_36 {dimension_numbers = #tpu.dot_dimension_numbers<[1], [0], [0], [1], [0, 0, 1, 1], [], []>} : vector<8x8xf32>, vector<8x8xf32>, vector<8x8xf32> -> vector<8x8xf32>
    %cst_37 = arith.constant -1.000000e+09 : f32
    %112 = vector.broadcast %cst_37 : f32 to vector<8x8xf32>
    %113 = arith.select %8, %111, %112 : vector<8x8xi1>, vector<8x8xf32>
    %cst_38 = arith.constant dense<0xFF800000> : vector<8xf32>
    %114 = vector.multi_reduction <maximumf>, %113, %cst_38 [1] : vector<8x8xf32> to vector<8xf32>
    %115 = vector.shape_cast %114 : vector<8xf32> to vector<8x1xf32>
    %116 = vector.broadcast %115 : vector<8x1xf32> to vector<8x8xf32>
    %117 = arith.subf %113, %116 : vector<8x8xf32>
    %118 = math.exp %117 : vector<8x8xf32>
    %cst_39 = arith.constant dense<0.000000e+00> : vector<8xf32>
    %119 = vector.multi_reduction <add>, %118, %cst_39 [1] : vector<8x8xf32> to vector<8xf32>
    %120 = vector.shape_cast %119 : vector<8xf32> to vector<8x1xf32>
    %cst_40 = arith.constant dense<0.000000e+00> : vector<8x8xf32>
    %121 = tpu.matmul %118, %110, %cst_40 {dimension_numbers = #tpu.dot_dimension_numbers<[1], [0], [0], [1], [0, 0, 1, 1], [], []>} : vector<8x8xf32>, vector<8x8xf32>, vector<8x8xf32> -> vector<8x8xf32>
    %122 = tpu.reciprocal %120 {approx = true} : vector<8x1xf32> -> vector<8x1xf32>
    %123 = vector.broadcast %122 : vector<8x1xf32> to vector<8x8xf32>
    %124 = arith.mulf %121, %123 : vector<8x8xf32>
    %125 = tpu.concatenate %73, %90, %107, %124 in 1 : vector<8x8xf32>, vector<8x8xf32>, vector<8x8xf32>, vector<8x8xf32> -> vector<8x32xf32>
    %126 = vector.extract_strided_slice %44 {offsets = [8, 0], sizes = [8, 32], strides = [1, 1]} : vector<16x32xf32> to vector<8x32xf32>
    %127 = vector.extract_strided_slice %52 {offsets = [8, 0], sizes = [8, 32], strides = [1, 1]} : vector<16x32xf32> to vector<8x32xf32>
    %128 = vector.extract_strided_slice %48 {offsets = [8, 0], sizes = [8, 32], strides = [1, 1]} : vector<16x32xf32> to vector<8x32xf32>
    %129 = tpu.transpose %128, [1, 0] : vector<8x32xf32> -> vector<32x8xf32>
    %130 = vector.extract_strided_slice %126 {offsets = [0, 0], sizes = [8, 8], strides = [1, 1]} : vector<8x32xf32> to vector<8x8xf32>
    %131 = vector.extract_strided_slice %129 {offsets = [0, 0], sizes = [8, 8], strides = [1, 1]} : vector<32x8xf32> to vector<8x8xf32>
    %132 = vector.extract_strided_slice %127 {offsets = [0, 0], sizes = [8, 8], strides = [1, 1]} : vector<8x32xf32> to vector<8x8xf32>
    %cst_41 = arith.constant dense<0.000000e+00> : vector<8x8xf32>
    %133 = tpu.matmul %130, %131, %cst_41 {dimension_numbers = #tpu.dot_dimension_numbers<[1], [0], [0], [1], [0, 0, 1, 1], [], []>} : vector<8x8xf32>, vector<8x8xf32>, vector<8x8xf32> -> vector<8x8xf32>
    %cst_42 = arith.constant -1.000000e+09 : f32
    %134 = vector.broadcast %cst_42 : f32 to vector<8x8xf32>
    %135 = arith.select %13, %133, %134 : vector<8x8xi1>, vector<8x8xf32>
    %cst_43 = arith.constant dense<0xFF800000> : vector<8xf32>
    %136 = vector.multi_reduction <maximumf>, %135, %cst_43 [1] : vector<8x8xf32> to vector<8xf32>
    %137 = vector.shape_cast %136 : vector<8xf32> to vector<8x1xf32>
    %138 = vector.broadcast %137 : vector<8x1xf32> to vector<8x8xf32>
    %139 = arith.subf %135, %138 : vector<8x8xf32>
    %140 = math.exp %139 : vector<8x8xf32>
    %cst_44 = arith.constant dense<0.000000e+00> : vector<8xf32>
    %141 = vector.multi_reduction <add>, %140, %cst_44 [1] : vector<8x8xf32> to vector<8xf32>
    %142 = vector.shape_cast %141 : vector<8xf32> to vector<8x1xf32>
    %cst_45 = arith.constant dense<0.000000e+00> : vector<8x8xf32>
    %143 = tpu.matmul %140, %132, %cst_45 {dimension_numbers = #tpu.dot_dimension_numbers<[1], [0], [0], [1], [0, 0, 1, 1], [], []>} : vector<8x8xf32>, vector<8x8xf32>, vector<8x8xf32> -> vector<8x8xf32>
    %144 = tpu.reciprocal %142 {approx = true} : vector<8x1xf32> -> vector<8x1xf32>
    %145 = vector.broadcast %144 : vector<8x1xf32> to vector<8x8xf32>
    %146 = arith.mulf %143, %145 : vector<8x8xf32>
    %147 = vector.extract_strided_slice %126 {offsets = [0, 8], sizes = [8, 8], strides = [1, 1]} : vector<8x32xf32> to vector<8x8xf32>
    %148 = vector.extract_strided_slice %129 {offsets = [8, 0], sizes = [8, 8], strides = [1, 1]} : vector<32x8xf32> to vector<8x8xf32>
    %149 = vector.extract_strided_slice %127 {offsets = [0, 8], sizes = [8, 8], strides = [1, 1]} : vector<8x32xf32> to vector<8x8xf32>
    %cst_46 = arith.constant dense<0.000000e+00> : vector<8x8xf32>
    %150 = tpu.matmul %147, %148, %cst_46 {dimension_numbers = #tpu.dot_dimension_numbers<[1], [0], [0], [1], [0, 0, 1, 1], [], []>} : vector<8x8xf32>, vector<8x8xf32>, vector<8x8xf32> -> vector<8x8xf32>
    %cst_47 = arith.constant -1.000000e+09 : f32
    %151 = vector.broadcast %cst_47 : f32 to vector<8x8xf32>
    %152 = arith.select %13, %150, %151 : vector<8x8xi1>, vector<8x8xf32>
    %cst_48 = arith.constant dense<0xFF800000> : vector<8xf32>
    %153 = vector.multi_reduction <maximumf>, %152, %cst_48 [1] : vector<8x8xf32> to vector<8xf32>
    %154 = vector.shape_cast %153 : vector<8xf32> to vector<8x1xf32>
    %155 = vector.broadcast %154 : vector<8x1xf32> to vector<8x8xf32>
    %156 = arith.subf %152, %155 : vector<8x8xf32>
    %157 = math.exp %156 : vector<8x8xf32>
    %cst_49 = arith.constant dense<0.000000e+00> : vector<8xf32>
    %158 = vector.multi_reduction <add>, %157, %cst_49 [1] : vector<8x8xf32> to vector<8xf32>
    %159 = vector.shape_cast %158 : vector<8xf32> to vector<8x1xf32>
    %cst_50 = arith.constant dense<0.000000e+00> : vector<8x8xf32>
    %160 = tpu.matmul %157, %149, %cst_50 {dimension_numbers = #tpu.dot_dimension_numbers<[1], [0], [0], [1], [0, 0, 1, 1], [], []>} : vector<8x8xf32>, vector<8x8xf32>, vector<8x8xf32> -> vector<8x8xf32>
    %161 = tpu.reciprocal %159 {approx = true} : vector<8x1xf32> -> vector<8x1xf32>
    %162 = vector.broadcast %161 : vector<8x1xf32> to vector<8x8xf32>
    %163 = arith.mulf %160, %162 : vector<8x8xf32>
    %164 = vector.extract_strided_slice %126 {offsets = [0, 16], sizes = [8, 8], strides = [1, 1]} : vector<8x32xf32> to vector<8x8xf32>
    %165 = vector.extract_strided_slice %129 {offsets = [16, 0], sizes = [8, 8], strides = [1, 1]} : vector<32x8xf32> to vector<8x8xf32>
    %166 = vector.extract_strided_slice %127 {offsets = [0, 16], sizes = [8, 8], strides = [1, 1]} : vector<8x32xf32> to vector<8x8xf32>
    %cst_51 = arith.constant dense<0.000000e+00> : vector<8x8xf32>
    %167 = tpu.matmul %164, %165, %cst_51 {dimension_numbers = #tpu.dot_dimension_numbers<[1], [0], [0], [1], [0, 0, 1, 1], [], []>} : vector<8x8xf32>, vector<8x8xf32>, vector<8x8xf32> -> vector<8x8xf32>
    %cst_52 = arith.constant -1.000000e+09 : f32
    %168 = vector.broadcast %cst_52 : f32 to vector<8x8xf32>
    %169 = arith.select %13, %167, %168 : vector<8x8xi1>, vector<8x8xf32>
    %cst_53 = arith.constant dense<0xFF800000> : vector<8xf32>
    %170 = vector.multi_reduction <maximumf>, %169, %cst_53 [1] : vector<8x8xf32> to vector<8xf32>
    %171 = vector.shape_cast %170 : vector<8xf32> to vector<8x1xf32>
    %172 = vector.broadcast %171 : vector<8x1xf32> to vector<8x8xf32>
    %173 = arith.subf %169, %172 : vector<8x8xf32>
    %174 = math.exp %173 : vector<8x8xf32>
    %cst_54 = arith.constant dense<0.000000e+00> : vector<8xf32>
    %175 = vector.multi_reduction <add>, %174, %cst_54 [1] : vector<8x8xf32> to vector<8xf32>
    %176 = vector.shape_cast %175 : vector<8xf32> to vector<8x1xf32>
    %cst_55 = arith.constant dense<0.000000e+00> : vector<8x8xf32>
    %177 = tpu.matmul %174, %166, %cst_55 {dimension_numbers = #tpu.dot_dimension_numbers<[1], [0], [0], [1], [0, 0, 1, 1], [], []>} : vector<8x8xf32>, vector<8x8xf32>, vector<8x8xf32> -> vector<8x8xf32>
    %178 = tpu.reciprocal %176 {approx = true} : vector<8x1xf32> -> vector<8x1xf32>
    %179 = vector.broadcast %178 : vector<8x1xf32> to vector<8x8xf32>
    %180 = arith.mulf %177, %179 : vector<8x8xf32>
    %181 = vector.extract_strided_slice %126 {offsets = [0, 24], sizes = [8, 8], strides = [1, 1]} : vector<8x32xf32> to vector<8x8xf32>
    %182 = vector.extract_strided_slice %129 {offsets = [24, 0], sizes = [8, 8], strides = [1, 1]} : vector<32x8xf32> to vector<8x8xf32>
    %183 = vector.extract_strided_slice %127 {offsets = [0, 24], sizes = [8, 8], strides = [1, 1]} : vector<8x32xf32> to vector<8x8xf32>
    %cst_56 = arith.constant dense<0.000000e+00> : vector<8x8xf32>
    %184 = tpu.matmul %181, %182, %cst_56 {dimension_numbers = #tpu.dot_dimension_numbers<[1], [0], [0], [1], [0, 0, 1, 1], [], []>} : vector<8x8xf32>, vector<8x8xf32>, vector<8x8xf32> -> vector<8x8xf32>
    %cst_57 = arith.constant -1.000000e+09 : f32
    %185 = vector.broadcast %cst_57 : f32 to vector<8x8xf32>
    %186 = arith.select %13, %184, %185 : vector<8x8xi1>, vector<8x8xf32>
    %cst_58 = arith.constant dense<0xFF800000> : vector<8xf32>
    %187 = vector.multi_reduction <maximumf>, %186, %cst_58 [1] : vector<8x8xf32> to vector<8xf32>
    %188 = vector.shape_cast %187 : vector<8xf32> to vector<8x1xf32>
    %189 = vector.broadcast %188 : vector<8x1xf32> to vector<8x8xf32>
    %190 = arith.subf %186, %189 : vector<8x8xf32>
    %191 = math.exp %190 : vector<8x8xf32>
    %cst_59 = arith.constant dense<0.000000e+00> : vector<8xf32>
    %192 = vector.multi_reduction <add>, %191, %cst_59 [1] : vector<8x8xf32> to vector<8xf32>
    %193 = vector.shape_cast %192 : vector<8xf32> to vector<8x1xf32>
    %cst_60 = arith.constant dense<0.000000e+00> : vector<8x8xf32>
    %194 = tpu.matmul %191, %183, %cst_60 {dimension_numbers = #tpu.dot_dimension_numbers<[1], [0], [0], [1], [0, 0, 1, 1], [], []>} : vector<8x8xf32>, vector<8x8xf32>, vector<8x8xf32> -> vector<8x8xf32>
    %195 = tpu.reciprocal %193 {approx = true} : vector<8x1xf32> -> vector<8x1xf32>
    %196 = vector.broadcast %195 : vector<8x1xf32> to vector<8x8xf32>
    %197 = arith.mulf %194, %196 : vector<8x8xf32>
    %198 = tpu.concatenate %146, %163, %180, %197 in 1 : vector<8x8xf32>, vector<8x8xf32>, vector<8x8xf32>, vector<8x8xf32> -> vector<8x32xf32>
    %199 = tpu.concatenate %125, %198 in 0 : vector<8x32xf32>, vector<8x32xf32> -> vector<16x32xf32>
    %c0_61 = arith.constant 0 : index
    %c0_62 = arith.constant 0 : index
    %c0_63 = arith.constant 0 : index
    %200 = vector.load %arg5[%c0_61, %c0_62, %c0_63] : memref<2x32x32xf32, #tpu.memory_space<vmem>>, vector<1x32x32xf32>
    %201 = vector.shape_cast %200 : vector<1x32x32xf32> to vector<32x32xf32>
    %cst_64 = arith.constant dense<0.000000e+00> : vector<16x32xf32>
    %202 = tpu.matmul %199, %201, %cst_64 {dimension_numbers = #tpu.dot_dimension_numbers<[1], [0], [0], [1], [0, 0, 1, 1], [], []>} : vector<16x32xf32>, vector<32x32xf32>, vector<16x32xf32> -> vector<16x32xf32>
    %203 = arith.addf %0, %202 : vector<16x32xf32>
    %c7 = arith.constant 7 : index
    %c0_65 = arith.constant 0 : index
    %204 = vector.load %arg2[%c7, %c0_65] : memref<20x32xf32, #tpu.memory_space<vmem>>, vector<1x32xf32>
    %205 = vector.broadcast %204 : vector<1x32xf32> to vector<16x32xf32>
    %206 = arith.addf %203, %205 : vector<16x32xf32>
    %c2 = arith.constant 2 : index
    %c0_66 = arith.constant 0 : index
    %207 = vector.load %arg2[%c2, %c0_66] : memref<20x32xf32, #tpu.memory_space<vmem>>, vector<1x32xf32>
    %c3 = arith.constant 3 : index
    %c0_67 = arith.constant 0 : index
    %208 = vector.load %arg2[%c3, %c0_67] : memref<20x32xf32, #tpu.memory_space<vmem>>, vector<1x32xf32>
    %cst_68 = arith.constant dense<0.000000e+00> : vector<16xf32>
    %209 = vector.multi_reduction <add>, %206, %cst_68 [1] : vector<16x32xf32> to vector<16xf32>
    %210 = vector.shape_cast %209 : vector<16xf32> to vector<16x1xf32>
    %cst_69 = arith.constant 3.200000e+01 : f32
    %211 = vector.broadcast %cst_69 : f32 to vector<16x1xf32>
    %212 = arith.divf %210, %211 : vector<16x1xf32>
    %213 = vector.broadcast %212 : vector<16x1xf32> to vector<16x32xf32>
    %214 = arith.subf %206, %213 : vector<16x32xf32>
    %215 = arith.mulf %214, %214 : vector<16x32xf32>
    %cst_70 = arith.constant dense<0.000000e+00> : vector<16xf32>
    %216 = vector.multi_reduction <add>, %215, %cst_70 [1] : vector<16x32xf32> to vector<16xf32>
    %217 = vector.shape_cast %216 : vector<16xf32> to vector<16x1xf32>
    %cst_71 = arith.constant 3.200000e+01 : f32
    %218 = vector.broadcast %cst_71 : f32 to vector<16x1xf32>
    %219 = arith.divf %217, %218 : vector<16x1xf32>
    %220 = vector.broadcast %212 : vector<16x1xf32> to vector<16x32xf32>
    %221 = arith.subf %206, %220 : vector<16x32xf32>
    %cst_72 = arith.constant 9.99999974E-6 : f32
    %222 = vector.broadcast %cst_72 : f32 to vector<16x1xf32>
    %223 = arith.addf %219, %222 : vector<16x1xf32>
    %224 = math.rsqrt %223 : vector<16x1xf32>
    %225 = vector.broadcast %224 : vector<16x1xf32> to vector<16x32xf32>
    %226 = arith.mulf %221, %225 : vector<16x32xf32>
    %227 = vector.broadcast %207 : vector<1x32xf32> to vector<16x32xf32>
    %228 = arith.mulf %226, %227 : vector<16x32xf32>
    %229 = vector.broadcast %208 : vector<1x32xf32> to vector<16x32xf32>
    %230 = arith.addf %228, %229 : vector<16x32xf32>
    %c0_73 = arith.constant 0 : index
    %c0_74 = arith.constant 0 : index
    %c0_75 = arith.constant 0 : index
    %231 = vector.load %arg6[%c0_73, %c0_74, %c0_75] : memref<2x32x128xf32, #tpu.memory_space<vmem>>, vector<1x32x128xf32>
    %232 = vector.shape_cast %231 : vector<1x32x128xf32> to vector<32x128xf32>
    %cst_76 = arith.constant dense<0.000000e+00> : vector<16x128xf32>
    %233 = tpu.matmul %230, %232, %cst_76 {dimension_numbers = #tpu.dot_dimension_numbers<[1], [0], [0], [1], [0, 0, 1, 1], [], []>} : vector<16x32xf32>, vector<32x128xf32>, vector<16x128xf32> -> vector<16x128xf32>
    %c0_77 = arith.constant 0 : index
    %c0_78 = arith.constant 0 : index
    %234 = vector.load %arg3[%c0_77, %c0_78] : memref<2x128xf32, #tpu.memory_space<vmem>>, vector<1x128xf32>
    %235 = vector.broadcast %234 : vector<1x128xf32> to vector<16x128xf32>
    %236 = arith.addf %233, %235 : vector<16x128xf32>
    %cst_79 = arith.constant 5.000000e-01 : f32
    %237 = vector.broadcast %cst_79 : f32 to vector<16x128xf32>
    %238 = arith.mulf %237, %236 : vector<16x128xf32>
    %cst_80 = arith.constant 4.471500e-02 : f32
    %239 = vector.broadcast %cst_80 : f32 to vector<16x128xf32>
    %240 = arith.mulf %239, %236 : vector<16x128xf32>
    %241 = arith.mulf %240, %236 : vector<16x128xf32>
    %242 = arith.mulf %241, %236 : vector<16x128xf32>
    %243 = arith.addf %236, %242 : vector<16x128xf32>
    %cst_81 = arith.constant 0.797884583 : f32
    %244 = vector.broadcast %cst_81 : f32 to vector<16x128xf32>
    %245 = arith.mulf %244, %243 : vector<16x128xf32>
    %246 = math.tanh %245 : vector<16x128xf32>
    %cst_82 = arith.constant 1.000000e+00 : f32
    %247 = vector.broadcast %cst_82 : f32 to vector<16x128xf32>
    %248 = arith.addf %247, %246 : vector<16x128xf32>
    %249 = arith.mulf %238, %248 : vector<16x128xf32>
    %c0_83 = arith.constant 0 : index
    %c0_84 = arith.constant 0 : index
    %c0_85 = arith.constant 0 : index
    %250 = vector.load %arg7[%c0_83, %c0_84, %c0_85] : memref<2x128x32xf32, #tpu.memory_space<vmem>>, vector<1x128x32xf32>
    %251 = vector.shape_cast %250 : vector<1x128x32xf32> to vector<128x32xf32>
    %cst_86 = arith.constant dense<0.000000e+00> : vector<16x32xf32>
    %252 = tpu.matmul %249, %251, %cst_86 {dimension_numbers = #tpu.dot_dimension_numbers<[1], [0], [0], [1], [0, 0, 1, 1], [], []>} : vector<16x128xf32>, vector<128x32xf32>, vector<16x32xf32> -> vector<16x32xf32>
    %253 = arith.addf %206, %252 : vector<16x32xf32>
    %c8 = arith.constant 8 : index
    %c0_87 = arith.constant 0 : index
    %254 = vector.load %arg2[%c8, %c0_87] : memref<20x32xf32, #tpu.memory_space<vmem>>, vector<1x32xf32>
    %255 = vector.broadcast %254 : vector<1x32xf32> to vector<16x32xf32>
    %256 = arith.addf %253, %255 : vector<16x32xf32>
    %c9 = arith.constant 9 : index
    %c0_88 = arith.constant 0 : index
    %257 = vector.load %arg2[%c9, %c0_88] : memref<20x32xf32, #tpu.memory_space<vmem>>, vector<1x32xf32>
    %c10 = arith.constant 10 : index
    %c0_89 = arith.constant 0 : index
    %258 = vector.load %arg2[%c10, %c0_89] : memref<20x32xf32, #tpu.memory_space<vmem>>, vector<1x32xf32>
    %cst_90 = arith.constant dense<0.000000e+00> : vector<16xf32>
    %259 = vector.multi_reduction <add>, %256, %cst_90 [1] : vector<16x32xf32> to vector<16xf32>
    %260 = vector.shape_cast %259 : vector<16xf32> to vector<16x1xf32>
    %cst_91 = arith.constant 3.200000e+01 : f32
    %261 = vector.broadcast %cst_91 : f32 to vector<16x1xf32>
    %262 = arith.divf %260, %261 : vector<16x1xf32>
    %263 = vector.broadcast %262 : vector<16x1xf32> to vector<16x32xf32>
    %264 = arith.subf %256, %263 : vector<16x32xf32>
    %265 = arith.mulf %264, %264 : vector<16x32xf32>
    %cst_92 = arith.constant dense<0.000000e+00> : vector<16xf32>
    %266 = vector.multi_reduction <add>, %265, %cst_92 [1] : vector<16x32xf32> to vector<16xf32>
    %267 = vector.shape_cast %266 : vector<16xf32> to vector<16x1xf32>
    %cst_93 = arith.constant 3.200000e+01 : f32
    %268 = vector.broadcast %cst_93 : f32 to vector<16x1xf32>
    %269 = arith.divf %267, %268 : vector<16x1xf32>
    %270 = vector.broadcast %262 : vector<16x1xf32> to vector<16x32xf32>
    %271 = arith.subf %256, %270 : vector<16x32xf32>
    %cst_94 = arith.constant 9.99999974E-6 : f32
    %272 = vector.broadcast %cst_94 : f32 to vector<16x1xf32>
    %273 = arith.addf %269, %272 : vector<16x1xf32>
    %274 = math.rsqrt %273 : vector<16x1xf32>
    %275 = vector.broadcast %274 : vector<16x1xf32> to vector<16x32xf32>
    %276 = arith.mulf %271, %275 : vector<16x32xf32>
    %277 = vector.broadcast %257 : vector<1x32xf32> to vector<16x32xf32>
    %278 = arith.mulf %276, %277 : vector<16x32xf32>
    %279 = vector.broadcast %258 : vector<1x32xf32> to vector<16x32xf32>
    %280 = arith.addf %278, %279 : vector<16x32xf32>
    %c1_95 = arith.constant 1 : index
    %c0_96 = arith.constant 0 : index
    %c0_97 = arith.constant 0 : index
    %281 = vector.load %arg4[%c1_95, %c0_96, %c0_97] : memref<2x32x96xf32, #tpu.memory_space<vmem>>, vector<1x32x96xf32>
    %282 = vector.shape_cast %281 : vector<1x32x96xf32> to vector<32x96xf32>
    %cst_98 = arith.constant dense<0.000000e+00> : vector<16x96xf32>
    %283 = tpu.matmul %280, %282, %cst_98 {dimension_numbers = #tpu.dot_dimension_numbers<[1], [0], [0], [1], [0, 0, 1, 1], [], []>} : vector<16x32xf32>, vector<32x96xf32>, vector<16x96xf32> -> vector<16x96xf32>
    %284 = vector.extract_strided_slice %283 {offsets = [0, 0], sizes = [16, 32], strides = [1, 1]} : vector<16x96xf32> to vector<16x32xf32>
    %c13 = arith.constant 13 : index
    %c0_99 = arith.constant 0 : index
    %285 = vector.load %arg2[%c13, %c0_99] : memref<20x32xf32, #tpu.memory_space<vmem>>, vector<1x32xf32>
    %286 = vector.broadcast %285 : vector<1x32xf32> to vector<16x32xf32>
    %287 = arith.addf %284, %286 : vector<16x32xf32>
    %288 = vector.extract_strided_slice %283 {offsets = [0, 32], sizes = [16, 32], strides = [1, 1]} : vector<16x96xf32> to vector<16x32xf32>
    %c14 = arith.constant 14 : index
    %c0_100 = arith.constant 0 : index
    %289 = vector.load %arg2[%c14, %c0_100] : memref<20x32xf32, #tpu.memory_space<vmem>>, vector<1x32xf32>
    %290 = vector.broadcast %289 : vector<1x32xf32> to vector<16x32xf32>
    %291 = arith.addf %288, %290 : vector<16x32xf32>
    %292 = vector.extract_strided_slice %283 {offsets = [0, 64], sizes = [16, 32], strides = [1, 1]} : vector<16x96xf32> to vector<16x32xf32>
    %c15 = arith.constant 15 : index
    %c0_101 = arith.constant 0 : index
    %293 = vector.load %arg2[%c15, %c0_101] : memref<20x32xf32, #tpu.memory_space<vmem>>, vector<1x32xf32>
    %294 = vector.broadcast %293 : vector<1x32xf32> to vector<16x32xf32>
    %295 = arith.addf %292, %294 : vector<16x32xf32>
    %296 = vector.extract_strided_slice %287 {offsets = [0, 0], sizes = [8, 32], strides = [1, 1]} : vector<16x32xf32> to vector<8x32xf32>
    %297 = vector.extract_strided_slice %295 {offsets = [0, 0], sizes = [8, 32], strides = [1, 1]} : vector<16x32xf32> to vector<8x32xf32>
    %298 = vector.extract_strided_slice %291 {offsets = [0, 0], sizes = [8, 32], strides = [1, 1]} : vector<16x32xf32> to vector<8x32xf32>
    %299 = tpu.transpose %298, [1, 0] : vector<8x32xf32> -> vector<32x8xf32>
    %300 = vector.extract_strided_slice %296 {offsets = [0, 0], sizes = [8, 8], strides = [1, 1]} : vector<8x32xf32> to vector<8x8xf32>
    %301 = vector.extract_strided_slice %299 {offsets = [0, 0], sizes = [8, 8], strides = [1, 1]} : vector<32x8xf32> to vector<8x8xf32>
    %302 = vector.extract_strided_slice %297 {offsets = [0, 0], sizes = [8, 8], strides = [1, 1]} : vector<8x32xf32> to vector<8x8xf32>
    %cst_102 = arith.constant dense<0.000000e+00> : vector<8x8xf32>
    %303 = tpu.matmul %300, %301, %cst_102 {dimension_numbers = #tpu.dot_dimension_numbers<[1], [0], [0], [1], [0, 0, 1, 1], [], []>} : vector<8x8xf32>, vector<8x8xf32>, vector<8x8xf32> -> vector<8x8xf32>
    %cst_103 = arith.constant -1.000000e+09 : f32
    %304 = vector.broadcast %cst_103 : f32 to vector<8x8xf32>
    %305 = arith.select %8, %303, %304 : vector<8x8xi1>, vector<8x8xf32>
    %cst_104 = arith.constant dense<0xFF800000> : vector<8xf32>
    %306 = vector.multi_reduction <maximumf>, %305, %cst_104 [1] : vector<8x8xf32> to vector<8xf32>
    %307 = vector.shape_cast %306 : vector<8xf32> to vector<8x1xf32>
    %308 = vector.broadcast %307 : vector<8x1xf32> to vector<8x8xf32>
    %309 = arith.subf %305, %308 : vector<8x8xf32>
    %310 = math.exp %309 : vector<8x8xf32>
    %cst_105 = arith.constant dense<0.000000e+00> : vector<8xf32>
    %311 = vector.multi_reduction <add>, %310, %cst_105 [1] : vector<8x8xf32> to vector<8xf32>
    %312 = vector.shape_cast %311 : vector<8xf32> to vector<8x1xf32>
    %cst_106 = arith.constant dense<0.000000e+00> : vector<8x8xf32>
    %313 = tpu.matmul %310, %302, %cst_106 {dimension_numbers = #tpu.dot_dimension_numbers<[1], [0], [0], [1], [0, 0, 1, 1], [], []>} : vector<8x8xf32>, vector<8x8xf32>, vector<8x8xf32> -> vector<8x8xf32>
    %314 = tpu.reciprocal %312 {approx = true} : vector<8x1xf32> -> vector<8x1xf32>
    %315 = vector.broadcast %314 : vector<8x1xf32> to vector<8x8xf32>
    %316 = arith.mulf %313, %315 : vector<8x8xf32>
    %317 = vector.extract_strided_slice %296 {offsets = [0, 8], sizes = [8, 8], strides = [1, 1]} : vector<8x32xf32> to vector<8x8xf32>
    %318 = vector.extract_strided_slice %299 {offsets = [8, 0], sizes = [8, 8], strides = [1, 1]} : vector<32x8xf32> to vector<8x8xf32>
    %319 = vector.extract_strided_slice %297 {offsets = [0, 8], sizes = [8, 8], strides = [1, 1]} : vector<8x32xf32> to vector<8x8xf32>
    %cst_107 = arith.constant dense<0.000000e+00> : vector<8x8xf32>
    %320 = tpu.matmul %317, %318, %cst_107 {dimension_numbers = #tpu.dot_dimension_numbers<[1], [0], [0], [1], [0, 0, 1, 1], [], []>} : vector<8x8xf32>, vector<8x8xf32>, vector<8x8xf32> -> vector<8x8xf32>
    %cst_108 = arith.constant -1.000000e+09 : f32
    %321 = vector.broadcast %cst_108 : f32 to vector<8x8xf32>
    %322 = arith.select %8, %320, %321 : vector<8x8xi1>, vector<8x8xf32>
    %cst_109 = arith.constant dense<0xFF800000> : vector<8xf32>
    %323 = vector.multi_reduction <maximumf>, %322, %cst_109 [1] : vector<8x8xf32> to vector<8xf32>
    %324 = vector.shape_cast %323 : vector<8xf32> to vector<8x1xf32>
    %325 = vector.broadcast %324 : vector<8x1xf32> to vector<8x8xf32>
    %326 = arith.subf %322, %325 : vector<8x8xf32>
    %327 = math.exp %326 : vector<8x8xf32>
    %cst_110 = arith.constant dense<0.000000e+00> : vector<8xf32>
    %328 = vector.multi_reduction <add>, %327, %cst_110 [1] : vector<8x8xf32> to vector<8xf32>
    %329 = vector.shape_cast %328 : vector<8xf32> to vector<8x1xf32>
    %cst_111 = arith.constant dense<0.000000e+00> : vector<8x8xf32>
    %330 = tpu.matmul %327, %319, %cst_111 {dimension_numbers = #tpu.dot_dimension_numbers<[1], [0], [0], [1], [0, 0, 1, 1], [], []>} : vector<8x8xf32>, vector<8x8xf32>, vector<8x8xf32> -> vector<8x8xf32>
    %331 = tpu.reciprocal %329 {approx = true} : vector<8x1xf32> -> vector<8x1xf32>
    %332 = vector.broadcast %331 : vector<8x1xf32> to vector<8x8xf32>
    %333 = arith.mulf %330, %332 : vector<8x8xf32>
    %334 = vector.extract_strided_slice %296 {offsets = [0, 16], sizes = [8, 8], strides = [1, 1]} : vector<8x32xf32> to vector<8x8xf32>
    %335 = vector.extract_strided_slice %299 {offsets = [16, 0], sizes = [8, 8], strides = [1, 1]} : vector<32x8xf32> to vector<8x8xf32>
    %336 = vector.extract_strided_slice %297 {offsets = [0, 16], sizes = [8, 8], strides = [1, 1]} : vector<8x32xf32> to vector<8x8xf32>
    %cst_112 = arith.constant dense<0.000000e+00> : vector<8x8xf32>
    %337 = tpu.matmul %334, %335, %cst_112 {dimension_numbers = #tpu.dot_dimension_numbers<[1], [0], [0], [1], [0, 0, 1, 1], [], []>} : vector<8x8xf32>, vector<8x8xf32>, vector<8x8xf32> -> vector<8x8xf32>
    %cst_113 = arith.constant -1.000000e+09 : f32
    %338 = vector.broadcast %cst_113 : f32 to vector<8x8xf32>
    %339 = arith.select %8, %337, %338 : vector<8x8xi1>, vector<8x8xf32>
    %cst_114 = arith.constant dense<0xFF800000> : vector<8xf32>
    %340 = vector.multi_reduction <maximumf>, %339, %cst_114 [1] : vector<8x8xf32> to vector<8xf32>
    %341 = vector.shape_cast %340 : vector<8xf32> to vector<8x1xf32>
    %342 = vector.broadcast %341 : vector<8x1xf32> to vector<8x8xf32>
    %343 = arith.subf %339, %342 : vector<8x8xf32>
    %344 = math.exp %343 : vector<8x8xf32>
    %cst_115 = arith.constant dense<0.000000e+00> : vector<8xf32>
    %345 = vector.multi_reduction <add>, %344, %cst_115 [1] : vector<8x8xf32> to vector<8xf32>
    %346 = vector.shape_cast %345 : vector<8xf32> to vector<8x1xf32>
    %cst_116 = arith.constant dense<0.000000e+00> : vector<8x8xf32>
    %347 = tpu.matmul %344, %336, %cst_116 {dimension_numbers = #tpu.dot_dimension_numbers<[1], [0], [0], [1], [0, 0, 1, 1], [], []>} : vector<8x8xf32>, vector<8x8xf32>, vector<8x8xf32> -> vector<8x8xf32>
    %348 = tpu.reciprocal %346 {approx = true} : vector<8x1xf32> -> vector<8x1xf32>
    %349 = vector.broadcast %348 : vector<8x1xf32> to vector<8x8xf32>
    %350 = arith.mulf %347, %349 : vector<8x8xf32>
    %351 = vector.extract_strided_slice %296 {offsets = [0, 24], sizes = [8, 8], strides = [1, 1]} : vector<8x32xf32> to vector<8x8xf32>
    %352 = vector.extract_strided_slice %299 {offsets = [24, 0], sizes = [8, 8], strides = [1, 1]} : vector<32x8xf32> to vector<8x8xf32>
    %353 = vector.extract_strided_slice %297 {offsets = [0, 24], sizes = [8, 8], strides = [1, 1]} : vector<8x32xf32> to vector<8x8xf32>
    %cst_117 = arith.constant dense<0.000000e+00> : vector<8x8xf32>
    %354 = tpu.matmul %351, %352, %cst_117 {dimension_numbers = #tpu.dot_dimension_numbers<[1], [0], [0], [1], [0, 0, 1, 1], [], []>} : vector<8x8xf32>, vector<8x8xf32>, vector<8x8xf32> -> vector<8x8xf32>
    %cst_118 = arith.constant -1.000000e+09 : f32
    %355 = vector.broadcast %cst_118 : f32 to vector<8x8xf32>
    %356 = arith.select %8, %354, %355 : vector<8x8xi1>, vector<8x8xf32>
    %cst_119 = arith.constant dense<0xFF800000> : vector<8xf32>
    %357 = vector.multi_reduction <maximumf>, %356, %cst_119 [1] : vector<8x8xf32> to vector<8xf32>
    %358 = vector.shape_cast %357 : vector<8xf32> to vector<8x1xf32>
    %359 = vector.broadcast %358 : vector<8x1xf32> to vector<8x8xf32>
    %360 = arith.subf %356, %359 : vector<8x8xf32>
    %361 = math.exp %360 : vector<8x8xf32>
    %cst_120 = arith.constant dense<0.000000e+00> : vector<8xf32>
    %362 = vector.multi_reduction <add>, %361, %cst_120 [1] : vector<8x8xf32> to vector<8xf32>
    %363 = vector.shape_cast %362 : vector<8xf32> to vector<8x1xf32>
    %cst_121 = arith.constant dense<0.000000e+00> : vector<8x8xf32>
    %364 = tpu.matmul %361, %353, %cst_121 {dimension_numbers = #tpu.dot_dimension_numbers<[1], [0], [0], [1], [0, 0, 1, 1], [], []>} : vector<8x8xf32>, vector<8x8xf32>, vector<8x8xf32> -> vector<8x8xf32>
    %365 = tpu.reciprocal %363 {approx = true} : vector<8x1xf32> -> vector<8x1xf32>
    %366 = vector.broadcast %365 : vector<8x1xf32> to vector<8x8xf32>
    %367 = arith.mulf %364, %366 : vector<8x8xf32>
    %368 = tpu.concatenate %316, %333, %350, %367 in 1 : vector<8x8xf32>, vector<8x8xf32>, vector<8x8xf32>, vector<8x8xf32> -> vector<8x32xf32>
    %369 = vector.extract_strided_slice %287 {offsets = [8, 0], sizes = [8, 32], strides = [1, 1]} : vector<16x32xf32> to vector<8x32xf32>
    %370 = vector.extract_strided_slice %295 {offsets = [8, 0], sizes = [8, 32], strides = [1, 1]} : vector<16x32xf32> to vector<8x32xf32>
    %371 = vector.extract_strided_slice %291 {offsets = [8, 0], sizes = [8, 32], strides = [1, 1]} : vector<16x32xf32> to vector<8x32xf32>
    %372 = tpu.transpose %371, [1, 0] : vector<8x32xf32> -> vector<32x8xf32>
    %373 = vector.extract_strided_slice %369 {offsets = [0, 0], sizes = [8, 8], strides = [1, 1]} : vector<8x32xf32> to vector<8x8xf32>
    %374 = vector.extract_strided_slice %372 {offsets = [0, 0], sizes = [8, 8], strides = [1, 1]} : vector<32x8xf32> to vector<8x8xf32>
    %375 = vector.extract_strided_slice %370 {offsets = [0, 0], sizes = [8, 8], strides = [1, 1]} : vector<8x32xf32> to vector<8x8xf32>
    %cst_122 = arith.constant dense<0.000000e+00> : vector<8x8xf32>
    %376 = tpu.matmul %373, %374, %cst_122 {dimension_numbers = #tpu.dot_dimension_numbers<[1], [0], [0], [1], [0, 0, 1, 1], [], []>} : vector<8x8xf32>, vector<8x8xf32>, vector<8x8xf32> -> vector<8x8xf32>
    %cst_123 = arith.constant -1.000000e+09 : f32
    %377 = vector.broadcast %cst_123 : f32 to vector<8x8xf32>
    %378 = arith.select %13, %376, %377 : vector<8x8xi1>, vector<8x8xf32>
    %cst_124 = arith.constant dense<0xFF800000> : vector<8xf32>
    %379 = vector.multi_reduction <maximumf>, %378, %cst_124 [1] : vector<8x8xf32> to vector<8xf32>
    %380 = vector.shape_cast %379 : vector<8xf32> to vector<8x1xf32>
    %381 = vector.broadcast %380 : vector<8x1xf32> to vector<8x8xf32>
    %382 = arith.subf %378, %381 : vector<8x8xf32>
    %383 = math.exp %382 : vector<8x8xf32>
    %cst_125 = arith.constant dense<0.000000e+00> : vector<8xf32>
    %384 = vector.multi_reduction <add>, %383, %cst_125 [1] : vector<8x8xf32> to vector<8xf32>
    %385 = vector.shape_cast %384 : vector<8xf32> to vector<8x1xf32>
    %cst_126 = arith.constant dense<0.000000e+00> : vector<8x8xf32>
    %386 = tpu.matmul %383, %375, %cst_126 {dimension_numbers = #tpu.dot_dimension_numbers<[1], [0], [0], [1], [0, 0, 1, 1], [], []>} : vector<8x8xf32>, vector<8x8xf32>, vector<8x8xf32> -> vector<8x8xf32>
    %387 = tpu.reciprocal %385 {approx = true} : vector<8x1xf32> -> vector<8x1xf32>
    %388 = vector.broadcast %387 : vector<8x1xf32> to vector<8x8xf32>
    %389 = arith.mulf %386, %388 : vector<8x8xf32>
    %390 = vector.extract_strided_slice %369 {offsets = [0, 8], sizes = [8, 8], strides = [1, 1]} : vector<8x32xf32> to vector<8x8xf32>
    %391 = vector.extract_strided_slice %372 {offsets = [8, 0], sizes = [8, 8], strides = [1, 1]} : vector<32x8xf32> to vector<8x8xf32>
    %392 = vector.extract_strided_slice %370 {offsets = [0, 8], sizes = [8, 8], strides = [1, 1]} : vector<8x32xf32> to vector<8x8xf32>
    %cst_127 = arith.constant dense<0.000000e+00> : vector<8x8xf32>
    %393 = tpu.matmul %390, %391, %cst_127 {dimension_numbers = #tpu.dot_dimension_numbers<[1], [0], [0], [1], [0, 0, 1, 1], [], []>} : vector<8x8xf32>, vector<8x8xf32>, vector<8x8xf32> -> vector<8x8xf32>
    %cst_128 = arith.constant -1.000000e+09 : f32
    %394 = vector.broadcast %cst_128 : f32 to vector<8x8xf32>
    %395 = arith.select %13, %393, %394 : vector<8x8xi1>, vector<8x8xf32>
    %cst_129 = arith.constant dense<0xFF800000> : vector<8xf32>
    %396 = vector.multi_reduction <maximumf>, %395, %cst_129 [1] : vector<8x8xf32> to vector<8xf32>
    %397 = vector.shape_cast %396 : vector<8xf32> to vector<8x1xf32>
    %398 = vector.broadcast %397 : vector<8x1xf32> to vector<8x8xf32>
    %399 = arith.subf %395, %398 : vector<8x8xf32>
    %400 = math.exp %399 : vector<8x8xf32>
    %cst_130 = arith.constant dense<0.000000e+00> : vector<8xf32>
    %401 = vector.multi_reduction <add>, %400, %cst_130 [1] : vector<8x8xf32> to vector<8xf32>
    %402 = vector.shape_cast %401 : vector<8xf32> to vector<8x1xf32>
    %cst_131 = arith.constant dense<0.000000e+00> : vector<8x8xf32>
    %403 = tpu.matmul %400, %392, %cst_131 {dimension_numbers = #tpu.dot_dimension_numbers<[1], [0], [0], [1], [0, 0, 1, 1], [], []>} : vector<8x8xf32>, vector<8x8xf32>, vector<8x8xf32> -> vector<8x8xf32>
    %404 = tpu.reciprocal %402 {approx = true} : vector<8x1xf32> -> vector<8x1xf32>
    %405 = vector.broadcast %404 : vector<8x1xf32> to vector<8x8xf32>
    %406 = arith.mulf %403, %405 : vector<8x8xf32>
    %407 = vector.extract_strided_slice %369 {offsets = [0, 16], sizes = [8, 8], strides = [1, 1]} : vector<8x32xf32> to vector<8x8xf32>
    %408 = vector.extract_strided_slice %372 {offsets = [16, 0], sizes = [8, 8], strides = [1, 1]} : vector<32x8xf32> to vector<8x8xf32>
    %409 = vector.extract_strided_slice %370 {offsets = [0, 16], sizes = [8, 8], strides = [1, 1]} : vector<8x32xf32> to vector<8x8xf32>
    %cst_132 = arith.constant dense<0.000000e+00> : vector<8x8xf32>
    %410 = tpu.matmul %407, %408, %cst_132 {dimension_numbers = #tpu.dot_dimension_numbers<[1], [0], [0], [1], [0, 0, 1, 1], [], []>} : vector<8x8xf32>, vector<8x8xf32>, vector<8x8xf32> -> vector<8x8xf32>
    %cst_133 = arith.constant -1.000000e+09 : f32
    %411 = vector.broadcast %cst_133 : f32 to vector<8x8xf32>
    %412 = arith.select %13, %410, %411 : vector<8x8xi1>, vector<8x8xf32>
    %cst_134 = arith.constant dense<0xFF800000> : vector<8xf32>
    %413 = vector.multi_reduction <maximumf>, %412, %cst_134 [1] : vector<8x8xf32> to vector<8xf32>
    %414 = vector.shape_cast %413 : vector<8xf32> to vector<8x1xf32>
    %415 = vector.broadcast %414 : vector<8x1xf32> to vector<8x8xf32>
    %416 = arith.subf %412, %415 : vector<8x8xf32>
    %417 = math.exp %416 : vector<8x8xf32>
    %cst_135 = arith.constant dense<0.000000e+00> : vector<8xf32>
    %418 = vector.multi_reduction <add>, %417, %cst_135 [1] : vector<8x8xf32> to vector<8xf32>
    %419 = vector.shape_cast %418 : vector<8xf32> to vector<8x1xf32>
    %cst_136 = arith.constant dense<0.000000e+00> : vector<8x8xf32>
    %420 = tpu.matmul %417, %409, %cst_136 {dimension_numbers = #tpu.dot_dimension_numbers<[1], [0], [0], [1], [0, 0, 1, 1], [], []>} : vector<8x8xf32>, vector<8x8xf32>, vector<8x8xf32> -> vector<8x8xf32>
    %421 = tpu.reciprocal %419 {approx = true} : vector<8x1xf32> -> vector<8x1xf32>
    %422 = vector.broadcast %421 : vector<8x1xf32> to vector<8x8xf32>
    %423 = arith.mulf %420, %422 : vector<8x8xf32>
    %424 = vector.extract_strided_slice %369 {offsets = [0, 24], sizes = [8, 8], strides = [1, 1]} : vector<8x32xf32> to vector<8x8xf32>
    %425 = vector.extract_strided_slice %372 {offsets = [24, 0], sizes = [8, 8], strides = [1, 1]} : vector<32x8xf32> to vector<8x8xf32>
    %426 = vector.extract_strided_slice %370 {offsets = [0, 24], sizes = [8, 8], strides = [1, 1]} : vector<8x32xf32> to vector<8x8xf32>
    %cst_137 = arith.constant dense<0.000000e+00> : vector<8x8xf32>
    %427 = tpu.matmul %424, %425, %cst_137 {dimension_numbers = #tpu.dot_dimension_numbers<[1], [0], [0], [1], [0, 0, 1, 1], [], []>} : vector<8x8xf32>, vector<8x8xf32>, vector<8x8xf32> -> vector<8x8xf32>
    %cst_138 = arith.constant -1.000000e+09 : f32
    %428 = vector.broadcast %cst_138 : f32 to vector<8x8xf32>
    %429 = arith.select %13, %427, %428 : vector<8x8xi1>, vector<8x8xf32>
    %cst_139 = arith.constant dense<0xFF800000> : vector<8xf32>
    %430 = vector.multi_reduction <maximumf>, %429, %cst_139 [1] : vector<8x8xf32> to vector<8xf32>
    %431 = vector.shape_cast %430 : vector<8xf32> to vector<8x1xf32>
    %432 = vector.broadcast %431 : vector<8x1xf32> to vector<8x8xf32>
    %433 = arith.subf %429, %432 : vector<8x8xf32>
    %434 = math.exp %433 : vector<8x8xf32>
    %cst_140 = arith.constant dense<0.000000e+00> : vector<8xf32>
    %435 = vector.multi_reduction <add>, %434, %cst_140 [1] : vector<8x8xf32> to vector<8xf32>
    %436 = vector.shape_cast %435 : vector<8xf32> to vector<8x1xf32>
    %cst_141 = arith.constant dense<0.000000e+00> : vector<8x8xf32>
    %437 = tpu.matmul %434, %426, %cst_141 {dimension_numbers = #tpu.dot_dimension_numbers<[1], [0], [0], [1], [0, 0, 1, 1], [], []>} : vector<8x8xf32>, vector<8x8xf32>, vector<8x8xf32> -> vector<8x8xf32>
    %438 = tpu.reciprocal %436 {approx = true} : vector<8x1xf32> -> vector<8x1xf32>
    %439 = vector.broadcast %438 : vector<8x1xf32> to vector<8x8xf32>
    %440 = arith.mulf %437, %439 : vector<8x8xf32>
    %441 = tpu.concatenate %389, %406, %423, %440 in 1 : vector<8x8xf32>, vector<8x8xf32>, vector<8x8xf32>, vector<8x8xf32> -> vector<8x32xf32>
    %442 = tpu.concatenate %368, %441 in 0 : vector<8x32xf32>, vector<8x32xf32> -> vector<16x32xf32>
    %c1_142 = arith.constant 1 : index
    %c0_143 = arith.constant 0 : index
    %c0_144 = arith.constant 0 : index
    %443 = vector.load %arg5[%c1_142, %c0_143, %c0_144] : memref<2x32x32xf32, #tpu.memory_space<vmem>>, vector<1x32x32xf32>
    %444 = vector.shape_cast %443 : vector<1x32x32xf32> to vector<32x32xf32>
    %cst_145 = arith.constant dense<0.000000e+00> : vector<16x32xf32>
    %445 = tpu.matmul %442, %444, %cst_145 {dimension_numbers = #tpu.dot_dimension_numbers<[1], [0], [0], [1], [0, 0, 1, 1], [], []>} : vector<16x32xf32>, vector<32x32xf32>, vector<16x32xf32> -> vector<16x32xf32>
    %446 = arith.addf %256, %445 : vector<16x32xf32>
    %c16 = arith.constant 16 : index
    %c0_146 = arith.constant 0 : index
    %447 = vector.load %arg2[%c16, %c0_146] : memref<20x32xf32, #tpu.memory_space<vmem>>, vector<1x32xf32>
    %448 = vector.broadcast %447 : vector<1x32xf32> to vector<16x32xf32>
    %449 = arith.addf %446, %448 : vector<16x32xf32>
    %c11 = arith.constant 11 : index
    %c0_147 = arith.constant 0 : index
    %450 = vector.load %arg2[%c11, %c0_147] : memref<20x32xf32, #tpu.memory_space<vmem>>, vector<1x32xf32>
    %c12 = arith.constant 12 : index
    %c0_148 = arith.constant 0 : index
    %451 = vector.load %arg2[%c12, %c0_148] : memref<20x32xf32, #tpu.memory_space<vmem>>, vector<1x32xf32>
    %cst_149 = arith.constant dense<0.000000e+00> : vector<16xf32>
    %452 = vector.multi_reduction <add>, %449, %cst_149 [1] : vector<16x32xf32> to vector<16xf32>
    %453 = vector.shape_cast %452 : vector<16xf32> to vector<16x1xf32>
    %cst_150 = arith.constant 3.200000e+01 : f32
    %454 = vector.broadcast %cst_150 : f32 to vector<16x1xf32>
    %455 = arith.divf %453, %454 : vector<16x1xf32>
    %456 = vector.broadcast %455 : vector<16x1xf32> to vector<16x32xf32>
    %457 = arith.subf %449, %456 : vector<16x32xf32>
    %458 = arith.mulf %457, %457 : vector<16x32xf32>
    %cst_151 = arith.constant dense<0.000000e+00> : vector<16xf32>
    %459 = vector.multi_reduction <add>, %458, %cst_151 [1] : vector<16x32xf32> to vector<16xf32>
    %460 = vector.shape_cast %459 : vector<16xf32> to vector<16x1xf32>
    %cst_152 = arith.constant 3.200000e+01 : f32
    %461 = vector.broadcast %cst_152 : f32 to vector<16x1xf32>
    %462 = arith.divf %460, %461 : vector<16x1xf32>
    %463 = vector.broadcast %455 : vector<16x1xf32> to vector<16x32xf32>
    %464 = arith.subf %449, %463 : vector<16x32xf32>
    %cst_153 = arith.constant 9.99999974E-6 : f32
    %465 = vector.broadcast %cst_153 : f32 to vector<16x1xf32>
    %466 = arith.addf %462, %465 : vector<16x1xf32>
    %467 = math.rsqrt %466 : vector<16x1xf32>
    %468 = vector.broadcast %467 : vector<16x1xf32> to vector<16x32xf32>
    %469 = arith.mulf %464, %468 : vector<16x32xf32>
    %470 = vector.broadcast %450 : vector<1x32xf32> to vector<16x32xf32>
    %471 = arith.mulf %469, %470 : vector<16x32xf32>
    %472 = vector.broadcast %451 : vector<1x32xf32> to vector<16x32xf32>
    %473 = arith.addf %471, %472 : vector<16x32xf32>
    %c1_154 = arith.constant 1 : index
    %c0_155 = arith.constant 0 : index
    %c0_156 = arith.constant 0 : index
    %474 = vector.load %arg6[%c1_154, %c0_155, %c0_156] : memref<2x32x128xf32, #tpu.memory_space<vmem>>, vector<1x32x128xf32>
    %475 = vector.shape_cast %474 : vector<1x32x128xf32> to vector<32x128xf32>
    %cst_157 = arith.constant dense<0.000000e+00> : vector<16x128xf32>
    %476 = tpu.matmul %473, %475, %cst_157 {dimension_numbers = #tpu.dot_dimension_numbers<[1], [0], [0], [1], [0, 0, 1, 1], [], []>} : vector<16x32xf32>, vector<32x128xf32>, vector<16x128xf32> -> vector<16x128xf32>
    %c1_158 = arith.constant 1 : index
    %c0_159 = arith.constant 0 : index
    %477 = vector.load %arg3[%c1_158, %c0_159] : memref<2x128xf32, #tpu.memory_space<vmem>>, vector<1x128xf32>
    %478 = vector.broadcast %477 : vector<1x128xf32> to vector<16x128xf32>
    %479 = arith.addf %476, %478 : vector<16x128xf32>
    %cst_160 = arith.constant 5.000000e-01 : f32
    %480 = vector.broadcast %cst_160 : f32 to vector<16x128xf32>
    %481 = arith.mulf %480, %479 : vector<16x128xf32>
    %cst_161 = arith.constant 4.471500e-02 : f32
    %482 = vector.broadcast %cst_161 : f32 to vector<16x128xf32>
    %483 = arith.mulf %482, %479 : vector<16x128xf32>
    %484 = arith.mulf %483, %479 : vector<16x128xf32>
    %485 = arith.mulf %484, %479 : vector<16x128xf32>
    %486 = arith.addf %479, %485 : vector<16x128xf32>
    %cst_162 = arith.constant 0.797884583 : f32
    %487 = vector.broadcast %cst_162 : f32 to vector<16x128xf32>
    %488 = arith.mulf %487, %486 : vector<16x128xf32>
    %489 = math.tanh %488 : vector<16x128xf32>
    %cst_163 = arith.constant 1.000000e+00 : f32
    %490 = vector.broadcast %cst_163 : f32 to vector<16x128xf32>
    %491 = arith.addf %490, %489 : vector<16x128xf32>
    %492 = arith.mulf %481, %491 : vector<16x128xf32>
    %c1_164 = arith.constant 1 : index
    %c0_165 = arith.constant 0 : index
    %c0_166 = arith.constant 0 : index
    %493 = vector.load %arg7[%c1_164, %c0_165, %c0_166] : memref<2x128x32xf32, #tpu.memory_space<vmem>>, vector<1x128x32xf32>
    %494 = vector.shape_cast %493 : vector<1x128x32xf32> to vector<128x32xf32>
    %cst_167 = arith.constant dense<0.000000e+00> : vector<16x32xf32>
    %495 = tpu.matmul %492, %494, %cst_167 {dimension_numbers = #tpu.dot_dimension_numbers<[1], [0], [0], [1], [0, 0, 1, 1], [], []>} : vector<16x128xf32>, vector<128x32xf32>, vector<16x32xf32> -> vector<16x32xf32>
    %496 = arith.addf %449, %495 : vector<16x32xf32>
    %c17 = arith.constant 17 : index
    %c0_168 = arith.constant 0 : index
    %497 = vector.load %arg2[%c17, %c0_168] : memref<20x32xf32, #tpu.memory_space<vmem>>, vector<1x32xf32>
    %498 = vector.broadcast %497 : vector<1x32xf32> to vector<16x32xf32>
    %499 = arith.addf %496, %498 : vector<16x32xf32>
    %c18 = arith.constant 18 : index
    %c0_169 = arith.constant 0 : index
    %500 = vector.load %arg2[%c18, %c0_169] : memref<20x32xf32, #tpu.memory_space<vmem>>, vector<1x32xf32>
    %c19 = arith.constant 19 : index
    %c0_170 = arith.constant 0 : index
    %501 = vector.load %arg2[%c19, %c0_170] : memref<20x32xf32, #tpu.memory_space<vmem>>, vector<1x32xf32>
    %cst_171 = arith.constant dense<0.000000e+00> : vector<16xf32>
    %502 = vector.multi_reduction <add>, %499, %cst_171 [1] : vector<16x32xf32> to vector<16xf32>
    %503 = vector.shape_cast %502 : vector<16xf32> to vector<16x1xf32>
    %cst_172 = arith.constant 3.200000e+01 : f32
    %504 = vector.broadcast %cst_172 : f32 to vector<16x1xf32>
    %505 = arith.divf %503, %504 : vector<16x1xf32>
    %506 = vector.broadcast %505 : vector<16x1xf32> to vector<16x32xf32>
    %507 = arith.subf %499, %506 : vector<16x32xf32>
    %508 = arith.mulf %507, %507 : vector<16x32xf32>
    %cst_173 = arith.constant dense<0.000000e+00> : vector<16xf32>
    %509 = vector.multi_reduction <add>, %508, %cst_173 [1] : vector<16x32xf32> to vector<16xf32>
    %510 = vector.shape_cast %509 : vector<16xf32> to vector<16x1xf32>
    %cst_174 = arith.constant 3.200000e+01 : f32
    %511 = vector.broadcast %cst_174 : f32 to vector<16x1xf32>
    %512 = arith.divf %510, %511 : vector<16x1xf32>
    %513 = vector.broadcast %505 : vector<16x1xf32> to vector<16x32xf32>
    %514 = arith.subf %499, %513 : vector<16x32xf32>
    %cst_175 = arith.constant 9.99999974E-6 : f32
    %515 = vector.broadcast %cst_175 : f32 to vector<16x1xf32>
    %516 = arith.addf %512, %515 : vector<16x1xf32>
    %517 = math.rsqrt %516 : vector<16x1xf32>
    %518 = vector.broadcast %517 : vector<16x1xf32> to vector<16x32xf32>
    %519 = arith.mulf %514, %518 : vector<16x32xf32>
    %520 = vector.broadcast %500 : vector<1x32xf32> to vector<16x32xf32>
    %521 = arith.mulf %519, %520 : vector<16x32xf32>
    %522 = vector.broadcast %501 : vector<1x32xf32> to vector<16x32xf32>
    %523 = arith.addf %521, %522 : vector<16x32xf32>
    %c0_176 = arith.constant 0 : index
    %c0_177 = arith.constant 0 : index
    %524 = vector.load %arg8[%c0_176, %c0_177] : memref<32x128xf32, #tpu.memory_space<vmem>>, vector<32x128xf32>
    %cst_178 = arith.constant dense<0.000000e+00> : vector<16x128xf32>
    %525 = tpu.matmul %523, %524, %cst_178 {dimension_numbers = #tpu.dot_dimension_numbers<[1], [0], [0], [1], [0, 0, 1, 1], [], []>} : vector<16x32xf32>, vector<32x128xf32>, vector<16x128xf32> -> vector<16x128xf32>
    %c0_179 = arith.constant 0 : index
    %c0_180 = arith.constant 0 : index
    %526 = vector.load %arg9[%c0_179, %c0_180] : memref<16x128xf32, #tpu.memory_space<vmem>>, vector<16x128xf32>
    tpu.vector_store %arg9[%c0_179, %c0_180], %525 {strides = array<i32>} : memref<16x128xf32, #tpu.memory_space<vmem>>, vector<16x128xf32>,
    return
  }
}

</mosaic_0001>

<llo_original>
// kernel: text_decoder_forward.1
$region0: #{text_decoder_forward.1}
  #allocation0 [shape = 'u32[]', space=smem, size = 0x4, offset = 0x4, fixed_abs, tag = 'smem constant byte address 0x4 - core index']
  #allocation1 [shape = 'u32[144,128]{1,0:T(1,128)}', space=vmem, size = 0x12000, scoped, tag = 'internal scratch']
  %s0 = inlined_call_operand.vmem [shape: f32[16,32], index: 0, kind: input, shape index: {}]
  %s1 = inlined_call_operand.vmem [shape: f32[2,8], index: 1, kind: input, shape index: {}]
  %s2 = inlined_call_operand.vmem [shape: f32[20,32], index: 2, kind: input, shape index: {}]
  %s3 = inlined_call_operand.vmem [shape: f32[2,128], index: 3, kind: input, shape index: {}]
  %s4 = inlined_call_operand.vmem [shape: f32[2,32,96], index: 4, kind: input, shape index: {}]
  %s5 = inlined_call_operand.vmem [shape: f32[2,32,32], index: 5, kind: input, shape index: {}]
  %s6 = inlined_call_operand.vmem [shape: f32[2,32,128], index: 6, kind: input, shape index: {}]
  %s7 = inlined_call_operand.vmem [shape: f32[2,128,32], index: 7, kind: input, shape index: {}]
  %s8 = inlined_call_operand.vmem [shape: f32[32,128], index: 8, kind: input, shape index: {}]
  %s9 = inlined_call_operand.vmem [shape: f32[16,128], index: 9, kind: output, shape index: {}]
  %s10 = sld [smem:[#allocation0]]
  $region46: #{text_decoder_forward.1} parent=0
    _
  %s12 = ssub.s32 1, %s10
  %s13 = scalar_select 0, %s12, %s10
  // Predicated region
  $region2: #{text_decoder_forward.1} parent=0 // pred_check
    _
  $region3: #{text_decoder_forward.1} parent=0 // pred_check_branch
    %15 = sbr.rel (0) target = $region5
  $region4: #{text_decoder_forward.1} parent=0 // pred_region
    _
  $region5: #{text_decoder_forward.1} parent=0 // pred_fallthru
    _
  // Predicated region
  $region6: #{text_decoder_forward.1} parent=0 // pred_check
    _
  $region7: #{text_decoder_forward.1} parent=0 // pred_check_branch
    %17 = sbr.rel (0) target = $region9
  $region8: #{text_decoder_forward.1} parent=0 // pred_region
    _
  $region9: #{text_decoder_forward.1} parent=0 // pred_fallthru
    _
  // Predicated region
  $region10: #{text_decoder_forward.1} parent=0 // pred_check
    _
  $region11: #{text_decoder_forward.1} parent=0 // pred_check_branch
    %19 = sbr.rel (0) target = $region13
  $region12: #{text_decoder_forward.1} parent=0 // pred_region
    _
  $region13: #{text_decoder_forward.1} parent=0 // pred_fallthru
    _
  // Predicated region
  $region14: #{text_decoder_forward.1} parent=0 // pred_check
    _
  $region15: #{text_decoder_forward.1} parent=0 // pred_check_branch
    %21 = sbr.rel (0) target = $region17
  $region16: #{text_decoder_forward.1} parent=0 // pred_region
    _
  $region17: #{text_decoder_forward.1} parent=0 // pred_fallthru
    _
  // Predicated region
  $region18: #{text_decoder_forward.1} parent=0 // pred_check
    _
  $region19: #{text_decoder_forward.1} parent=0 // pred_check_branch
    %23 = sbr.rel (0) target = $region21
  $region20: #{text_decoder_forward.1} parent=0 // pred_region
    _
  $region21: #{text_decoder_forward.1} parent=0 // pred_fallthru
    _
  // Predicated region
  $region22: #{text_decoder_forward.1} parent=0 // pred_check
    _
  $region23: #{text_decoder_forward.1} parent=0 // pred_check_branch
    %25 = sbr.rel (0) target = $region25
  $region24: #{text_decoder_forward.1} parent=0 // pred_region
    _
  $region25: #{text_decoder_forward.1} parent=0 // pred_fallthru
    _
  // Predicated region
  $region26: #{text_decoder_forward.1} parent=0 // pred_check
    _
  $region27: #{text_decoder_forward.1} parent=0 // pred_check_branch
    %27 = sbr.rel (0) target = $region29
  $region28: #{text_decoder_forward.1} parent=0 // pred_region
    _
  $region29: #{text_decoder_forward.1} parent=0 // pred_fallthru
    _
  // Predicated region
  $region30: #{text_decoder_forward.1} parent=0 // pred_check
    _
  $region31: #{text_decoder_forward.1} parent=0 // pred_check_branch
    %29 = sbr.rel (0) target = $region33
  $region32: #{text_decoder_forward.1} parent=0 // pred_region
    _
  $region33: #{text_decoder_forward.1} parent=0 // pred_fallthru
    _
  // Predicated region
  $region34: #{text_decoder_forward.1} parent=0 // pred_check
    _
  $region35: #{text_decoder_forward.1} parent=0 // pred_check_branch
    %31 = sbr.rel (0) target = $region37
  $region36: #{text_decoder_forward.1} parent=0 // pred_region
    _
  $region37: #{text_decoder_forward.1} parent=0 // pred_fallthru
    _
  %v32 = vld [vmem:[%s0] sm:$0xff]
  %v33 = vld [vmem:[%s0 + $0x8] sm:$0xff]
  %v34 = vlaneseq
  %v35 = vshrl.u32 %v34, 7
  %v36 = vlaneseq
  %v37 = vand.u32 %v36, 127
  %vm38 = vcmp.le.s32.totalorder %v37, %v35
  %v39 = vld [vmem:[%s1] sm:$0x1]
  %vm40 = vcmp.gt.f32.partialorder %v39, 0.5
  %v41 = vsel %vm40, 1, 0
  %v42 = vlaneseq
  %v43 = vshrl.u32 %v42, 7
  %v44 = vsub.s32 0, %v43
  %v45 = vrot.slane %v41, %v44
  %vm46 = vcmp.eq.s32.totalorder %v45, 1
  %vm47 = vmand %vm38, %vm46
  %v48 = vld [vmem:[%s1 + $0x1] sm:$0x1]
  %vm49 = vcmp.gt.f32.partialorder %v48, 0.5
  %v50 = vsel %vm49, 1, 0
  %v51 = vlaneseq
  %v52 = vshrl.u32 %v51, 7
  %v53 = vsub.s32 0, %v52
  %v54 = vrot.slane %v50, %v53
  %vm55 = vcmp.eq.s32.totalorder %v54, 1
  %vm56 = vmand %vm38, %vm55
  %v57 = vld [vmem:[%s2] sm:$0x1]
  %v58 = vld [vmem:[%s2 + $0x1] sm:$0x1]
  %vm59 = vcmask 261120
  %v60 = vsel %vm59, %v32, 0.0
  %61 = vadd.xlane.f32.xlu0 %v60
  %v62 = vpop.xlane.xlu0 %61
  %v63 = vsel %vm59, %v33, 0.0
  %64 = vadd.xlane.f32.xlu0 %v63
  %v65 = vpop.xlane.xlu0 %64
  %v66 = vrcp.pop 32.0
  %v67 = vmul.f32 %v62, %v66
  %v68 = vmul.f32 %v65, %v66
  %v69 = vsub.f32 %v32, %v67
  %v70 = vsub.f32 %v33, %v68
  %v71 = vmul.f32 %v69, %v69
  %v72 = vmul.f32 %v70, %v70
  %v73 = vsel %vm59, %v71, 0.0
  %74 = vadd.xlane.f32.xlu0 %v73
  %v75 = vpop.xlane.xlu0 %74
  %v76 = vsel %vm59, %v72, 0.0
  %77 = vadd.xlane.f32.xlu0 %v76
  %v78 = vpop.xlane.xlu0 %77
  %v79 = vmul.f32 %v75, %v66
  %v80 = vmul.f32 %v78, %v66
  %v81 = vadd.f32 %v79, 1e-05
  %v82 = vadd.f32 %v80, 1e-05
  %v83 = vrsqrt.pop %v81
  %v84 = vrsqrt.pop %v82
  %v85 = vmul.f32 %v69, %v83
  %v86 = vmul.f32 %v70, %v84
  %v87 = vlaneseq
  %v88 = vshrl.u32 %v87, 7
  %v89 = vsub.s32 0, %v88
  %v90 = vrot.slane %v57, %v89
  %v91 = vmul.f32 %v85, %v90
  %v92 = vmul.f32 %v86, %v90
  %v93 = vlaneseq
  %v94 = vshrl.u32 %v93, 7
  %v95 = vsub.s32 0, %v94
  %v96 = vrot.slane %v58, %v95
  %v97 = vadd.f32 %v91, %v96
  %v98 = vadd.f32 %v92, %v96
  %v99 = vld [vmem:[%s4] sm:$0xff]
  %v100 = vld [vmem:[%s4 + $0x8] sm:$0xff]
  %v101 = vld [vmem:[%s4 + $0x10] sm:$0xff]
  %v102 = vld [vmem:[%s4 + $0x18] sm:$0xff]
  %v104 = vsel %vm59, %v97, 0
  %v107 = vsel %vm59, %v98, 0
  %109 = vmatprep.subr.mxu0 0.0
  %110 = vmatpush1.msra.mxu0 0.0
  %111 = vmatprep.subr.mxu0 0.0
  %112 = vmatpush1.msra.mxu0 0.0
  %113 = vmatprep.subr.mxu0 0.0
  %114 = vmatpush1.msra.mxu0 0.0
  %115 = vmatprep.subr.mxu0 0.0
  %116 = vmatpush1.msra.mxu0 0.0
  %117 = vmatprep.subr.mxu0 0.0
  %118 = vmatpush1.msra.mxu0 0.0
  %119 = vmatprep.subr.mxu0 0.0
  %120 = vmatpush1.msra.mxu0 0.0
  %121 = vmatprep.subr.mxu0 0.0
  %122 = vmatpush1.msra.mxu0 0.0
  %123 = vmatprep.subr.mxu0 0.0
  %124 = vmatpush1.msra.mxu0 0.0
  %125 = vmatprep.subr.mxu0 0.0
  %126 = vmatpush1.msra.mxu0 0.0
  %127 = vmatprep.subr.mxu0 0.0
  %128 = vmatpush1.msra.mxu0 0.0
  %129 = vmatprep.subr.mxu0 0.0
  %130 = vmatpush1.msra.mxu0 0.0
  %131 = vmatprep.subr.mxu0 0.0
  %132 = vmatpush1.msra.mxu0 0.0
  %133 = vmatprep.subr.mxu0 0.0
  %134 = vmatpush1.msra.mxu0 %v102
  %135 = vmatprep.subr.mxu0 0.0
  %136 = vmatpush1.msra.mxu0 %v101
  %137 = vmatprep.subr.mxu0 0.0
  %138 = vmatpush1.msra.mxu0 %v100
  %139 = vmatprep.subr.mxu0 0.0
  %140 = vmatpush1.msra.mxu0 %v99
  %141 = vmatprep.subr.mxu0 0.0
  %142 = vmatpush2.msra.mxu0 0.0
  %143 = vmatprep.subr.mxu0 0.0
  %144 = vmatpush2.msra.mxu0 0.0
  %145 = vmatprep.subr.mxu0 0.0
  %146 = vmatpush2.msra.mxu0 0.0
  %147 = vmatprep.subr.mxu0 0.0
  %148 = vmatpush2.msra.mxu0 0.0
  %149 = vmatprep.subr.mxu0 0.0
  %150 = vmatpush2.msra.mxu0 0.0
  %151 = vmatprep.subr.mxu0 0.0
  %152 = vmatpush2.msra.mxu0 0.0
  %153 = vmatprep.subr.mxu0 0.0
  %154 = vmatpush2.msra.mxu0 0.0
  %155 = vmatprep.subr.mxu0 0.0
  %156 = vmatpush2.msra.mxu0 0.0
  %157 = vmatprep.subr.mxu0 0.0
  %158 = vmatpush2.msra.mxu0 0.0
  %159 = vmatprep.subr.mxu0 0.0
  %160 = vmatpush2.msra.mxu0 0.0
  %161 = vmatprep.subr.mxu0 0.0
  %162 = vmatpush2.msra.mxu0 0.0
  %163 = vmatprep.subr.mxu0 0.0
  %164 = vmatpush2.msra.mxu0 0.0
  %165 = vmatprep.subr.mxu0 0.0
  %166 = vmatpush2.msra.mxu0 0.0
  %167 = vmatprep.subr.mxu0 0.0
  %168 = vmatpush2.msra.mxu0 0.0
  %169 = vmatprep.subr.mxu0 0.0
  %170 = vmatpush2.msra.mxu0 0.0
  %171 = vmatprep.subr.mxu0 0.0
  %172 = vmatpush2.msra.mxu0 0.0
  %173 = vmatprep.mubr.f32.mxu0 0.0
  %174 = vmatmul.mubr.f32.gmra.mxu0 %v104
  %v175 = vpop.f32.mrf.mxu0
  %v176 = vadd.f32 0.0, %v175
  %v177 = vpop.f32.mrf.mxu0
  %178 = vmatprep.mubr.f32.mxu0 0.0
  %179 = vmatmul.mubr.f32.gmra.mxu0 %v107
  %v180 = vpop.f32.mrf.mxu0
  %v181 = vadd.f32 0.0, %v180
  %v182 = vpop.f32.mrf.mxu0
  %183 = vdwg.mxu0
  %v184 = vld [vmem:[%s2 + $0x4] sm:$0x1]
  %v185 = vlaneseq
  %v186 = vshrl.u32 %v185, 7
  %v187 = vsub.s32 0, %v186
  %v188 = vrot.slane %v184, %v187
  %v189 = vadd.f32 %v176, %v188
  %v190 = vadd.f32 %v181, %v188
  %v191 = vld [vmem:[%s2 + $0x5] sm:$0x1]
  %v192 = vlaneseq
  %v193 = vshrl.u32 %v192, 7
  %v194 = vsub.s32 0, %v193
  %v195 = vrot.slane %v191, %v194
  %197 = vrot.lane.b32.xlu0 %v195, 32
  %v198 = vpop.permute.xlu0 %197
  %v200 = vadd.f32 %v176, %v198
  %v201 = vadd.f32 %v181, %v198
  %v202 = vld [vmem:[%s2 + $0x6] sm:$0x1]
  %v203 = vlaneseq
  %v204 = vshrl.u32 %v203, 7
  %v205 = vsub.s32 0, %v204
  %v206 = vrot.slane %v202, %v205
  %208 = vrot.lane.b32.xlu0 %v206, 64
  %v209 = vpop.permute.xlu0 %208
  %v211 = vadd.f32 %v176, %v209
  %v212 = vadd.f32 %v181, %v209
  %214 = vrot.lane.b32.xlu0 %v200, 96
  %v215 = vpop.permute.xlu0 %214
  %vm216 = vcmask 64512
  %v218 = vsel %vm216, %v189, 0
  %v220 = vsel %vm216, %v215, 0
  %222 = vmatprep.subr.mxu0 0.0
  %223 = vmatpush1.xpose.msra.mxu0 0.0
  %224 = vmatprep.subr.mxu0 0.0
  %225 = vmatpush1.xpose.msra.mxu0 0.0
  %226 = vmatprep.subr.mxu0 0.0
  %227 = vmatpush1.xpose.msra.mxu0 0.0
  %228 = vmatprep.subr.mxu0 0.0
  %229 = vmatpush1.xpose.msra.mxu0 0.0
  %230 = vmatprep.subr.mxu0 0.0
  %231 = vmatpush1.xpose.msra.mxu0 0.0
  %232 = vmatprep.subr.mxu0 0.0
  %233 = vmatpush1.xpose.msra.mxu0 0.0
  %234 = vmatprep.subr.mxu0 0.0
  %235 = vmatpush1.xpose.msra.mxu0 0.0
  %236 = vmatprep.subr.mxu0 0.0
  %237 = vmatpush1.xpose.msra.mxu0 0.0
  %238 = vmatprep.subr.mxu0 0.0
  %239 = vmatpush1.xpose.msra.mxu0 0.0
  %240 = vmatprep.subr.mxu0 0.0
  %241 = vmatpush1.xpose.msra.mxu0 0.0
  %242 = vmatprep.subr.mxu0 0.0
  %243 = vmatpush1.xpose.msra.mxu0 0.0
  %244 = vmatprep.subr.mxu0 0.0
  %245 = vmatpush1.xpose.msra.mxu0 0.0
  %246 = vmatprep.subr.mxu0 0.0
  %247 = vmatpush1.xpose.msra.mxu0 0.0
  %248 = vmatprep.subr.mxu0 0.0
  %249 = vmatpush1.xpose.msra.mxu0 0.0
  %250 = vmatprep.subr.mxu0 0.0
  %251 = vmatpush1.xpose.msra.mxu0 0.0
  %252 = vmatprep.subr.mxu0 0.0
  %253 = vmatpush1.xpose.msra.mxu0 %v220
  %254 = vmatprep.subr.mxu0 0.0
  %255 = vmatpush2.xpose.msra.mxu0 0.0
  %256 = vmatprep.subr.mxu0 0.0
  %257 = vmatpush2.xpose.msra.mxu0 0.0
  %258 = vmatprep.subr.mxu0 0.0
  %259 = vmatpush2.xpose.msra.mxu0 0.0
  %260 = vmatprep.subr.mxu0 0.0
  %261 = vmatpush2.xpose.msra.mxu0 0.0
  %262 = vmatprep.subr.mxu0 0.0
  %263 = vmatpush2.xpose.msra.mxu0 0.0
  %264 = vmatprep.subr.mxu0 0.0
  %265 = vmatpush2.xpose.msra.mxu0 0.0
  %266 = vmatprep.subr.mxu0 0.0
  %267 = vmatpush2.xpose.msra.mxu0 0.0
  %268 = vmatprep.subr.mxu0 0.0
  %269 = vmatpush2.xpose.msra.mxu0 0.0
  %270 = vmatprep.subr.mxu0 0.0
  %271 = vmatpush2.xpose.msra.mxu0 0.0
  %272 = vmatprep.subr.mxu0 0.0
  %273 = vmatpush2.xpose.msra.mxu0 0.0
  %274 = vmatprep.subr.mxu0 0.0
  %275 = vmatpush2.xpose.msra.mxu0 0.0
  %276 = vmatprep.subr.mxu0 0.0
  %277 = vmatpush2.xpose.msra.mxu0 0.0
  %278 = vmatprep.subr.mxu0 0.0
  %279 = vmatpush2.xpose.msra.mxu0 0.0
  %280 = vmatprep.subr.mxu0 0.0
  %281 = vmatpush2.xpose.msra.mxu0 0.0
  %282 = vmatprep.subr.mxu0 0.0
  %283 = vmatpush2.xpose.msra.mxu0 0.0
  %284 = vmatprep.subr.mxu0 0.0
  %285 = vmatpush2.xpose.msra.mxu0 0.0
  %286 = vmatprep.mubr.f32.mxu0 0.0
  %287 = vmatmul.mubr.f32.gmra.mxu0 %v218
  %v288 = vpop.f32.mrf.mxu0
  %v289 = vadd.f32 0.0, %v288
  %v290 = vpop.f32.mrf.mxu0
  %291 = vdwg.mxu0
  %v292 = vsel %vm47, %v289, -1e+09
  %v293 = vsel %vm216, %v292, -inf
  %294 = vmax.xlane.f32.xlu0 %v293
  %v295 = vpop.xlane.xlu0 %294
  %v296 = vsub.f32 %v292, %v295
  %v297 = vmul.f32 %v296, 1.442695
  %v298 = vpow.pop %v297
  %v299 = vsel %vm216, %v298, 0.0
  %300 = vadd.xlane.f32.xlu0 %v299
  %v301 = vpop.xlane.xlu0 %300
  %303 = vrot.lane.b32.xlu0 %v211, 64
  %v304 = vpop.permute.xlu0 %303
  %v307 = vsel %vm216, %v298, 0
  %309 = vmatprep.subr.mxu0 0.0
  %310 = vmatpush1.msra.mxu0 0.0
  %311 = vmatprep.subr.mxu0 0.0
  %312 = vmatpush1.msra.mxu0 0.0
  %313 = vmatprep.subr.mxu0 0.0
  %314 = vmatpush1.msra.mxu0 0.0
  %315 = vmatprep.subr.mxu0 0.0
  %316 = vmatpush1.msra.mxu0 0.0
  %317 = vmatprep.subr.mxu0 0.0
  %318 = vmatpush1.msra.mxu0 0.0
  %319 = vmatprep.subr.mxu0 0.0
  %320 = vmatpush1.msra.mxu0 0.0
  %321 = vmatprep.subr.mxu0 0.0
  %322 = vmatpush1.msra.mxu0 0.0
  %323 = vmatprep.subr.mxu0 0.0
  %324 = vmatpush1.msra.mxu0 0.0
  %325 = vmatprep.subr.mxu0 0.0
  %326 = vmatpush1.msra.mxu0 0.0
  %327 = vmatprep.subr.mxu0 0.0
  %328 = vmatpush1.msra.mxu0 0.0
  %329 = vmatprep.subr.mxu0 0.0
  %330 = vmatpush1.msra.mxu0 0.0
  %331 = vmatprep.subr.mxu0 0.0
  %332 = vmatpush1.msra.mxu0 0.0
  %333 = vmatprep.subr.mxu0 0.0
  %334 = vmatpush1.msra.mxu0 0.0
  %335 = vmatprep.subr.mxu0 0.0
  %336 = vmatpush1.msra.mxu0 0.0
  %337 = vmatprep.subr.mxu0 0.0
  %338 = vmatpush1.msra.mxu0 0.0
  %339 = vmatprep.subr.mxu0 0.0
  %340 = vmatpush1.msra.mxu0 %v304
  %341 = vmatprep.subr.mxu0 0.0
  %342 = vmatpush2.msra.mxu0 0.0
  %343 = vmatprep.subr.mxu0 0.0
  %344 = vmatpush2.msra.mxu0 0.0
  %345 = vmatprep.subr.mxu0 0.0
  %346 = vmatpush2.msra.mxu0 0.0
  %347 = vmatprep.subr.mxu0 0.0
  %348 = vmatpush2.msra.mxu0 0.0
  %349 = vmatprep.subr.mxu0 0.0
  %350 = vmatpush2.msra.mxu0 0.0
  %351 = vmatprep.subr.mxu0 0.0
  %352 = vmatpush2.msra.mxu0 0.0
  %353 = vmatprep.subr.mxu0 0.0
  %354 = vmatpush2.msra.mxu0 0.0
  %355 = vmatprep.subr.mxu0 0.0
  %356 = vmatpush2.msra.mxu0 0.0
  %357 = vmatprep.subr.mxu0 0.0
  %358 = vmatpush2.msra.mxu0 0.0
  %359 = vmatprep.subr.mxu0 0.0
  %360 = vmatpush2.msra.mxu0 0.0
  %361 = vmatprep.subr.mxu0 0.0
  %362 = vmatpush2.msra.mxu0 0.0
  %363 = vmatprep.subr.mxu0 0.0
  %364 = vmatpush2.msra.mxu0 0.0
  %365 = vmatprep.subr.mxu0 0.0
  %366 = vmatpush2.msra.mxu0 0.0
  %367 = vmatprep.subr.mxu0 0.0
  %368 = vmatpush2.msra.mxu0 0.0
  %369 = vmatprep.subr.mxu0 0.0
  %370 = vmatpush2.msra.mxu0 0.0
  %371 = vmatprep.subr.mxu0 0.0
  %372 = vmatpush2.msra.mxu0 0.0
  %373 = vmatprep.mubr.f32.mxu0 0.0
  %374 = vmatmul.mubr.f32.gmra.mxu0 %v307
  %v375 = vpop.f32.mrf.mxu0
  %v376 = vadd.f32 0.0, %v375
  %v377 = vpop.f32.mrf.mxu0
  %378 = vdwg.mxu0
  %v379 = vrcp.pop %v301
  %v380 = vmul.f32 %v376, %v379
  %381 = vrot.lane.b32.xlu0 %v189, 120
  %v382 = vpop.permute.xlu0 %381
  %383 = vrot.lane.b32.xlu0 %v200, 88
  %v384 = vpop.permute.xlu0 %383
  %v385 = vsel %vm216, %v382, 0
  %v387 = vsel %vm216, %v384, 0
  %389 = vmatprep.subr.mxu0 0.0
  %390 = vmatpush1.xpose.msra.mxu0 0.0
  %391 = vmatprep.subr.mxu0 0.0
  %392 = vmatpush1.xpose.msra.mxu0 0.0
  %393 = vmatprep.subr.mxu0 0.0
  %394 = vmatpush1.xpose.msra.mxu0 0.0
  %395 = vmatprep.subr.mxu0 0.0
  %396 = vmatpush1.xpose.msra.mxu0 0.0
  %397 = vmatprep.subr.mxu0 0.0
  %398 = vmatpush1.xpose.msra.mxu0 0.0
  %399 = vmatprep.subr.mxu0 0.0
  %400 = vmatpush1.xpose.msra.mxu0 0.0
  %401 = vmatprep.subr.mxu0 0.0
  %402 = vmatpush1.xpose.msra.mxu0 0.0
  %403 = vmatprep.subr.mxu0 0.0
  %404 = vmatpush1.xpose.msra.mxu0 0.0
  %405 = vmatprep.subr.mxu0 0.0
  %406 = vmatpush1.xpose.msra.mxu0 0.0
  %407 = vmatprep.subr.mxu0 0.0
  %408 = vmatpush1.xpose.msra.mxu0 0.0
  %409 = vmatprep.subr.mxu0 0.0
  %410 = vmatpush1.xpose.msra.mxu0 0.0
  %411 = vmatprep.subr.mxu0 0.0
  %412 = vmatpush1.xpose.msra.mxu0 0.0
  %413 = vmatprep.subr.mxu0 0.0
  %414 = vmatpush1.xpose.msra.mxu0 0.0
  %415 = vmatprep.subr.mxu0 0.0
  %416 = vmatpush1.xpose.msra.mxu0 0.0
  %417 = vmatprep.subr.mxu0 0.0
  %418 = vmatpush1.xpose.msra.mxu0 0.0
  %419 = vmatprep.subr.mxu0 0.0
  %420 = vmatpush1.xpose.msra.mxu0 %v387
  %421 = vmatprep.subr.mxu0 0.0
  %422 = vmatpush2.xpose.msra.mxu0 0.0
  %423 = vmatprep.subr.mxu0 0.0
  %424 = vmatpush2.xpose.msra.mxu0 0.0
  %425 = vmatprep.subr.mxu0 0.0
  %426 = vmatpush2.xpose.msra.mxu0 0.0
  %427 = vmatprep.subr.mxu0 0.0
  %428 = vmatpush2.xpose.msra.mxu0 0.0
  %429 = vmatprep.subr.mxu0 0.0
  %430 = vmatpush2.xpose.msra.mxu0 0.0
  %431 = vmatprep.subr.mxu0 0.0
  %432 = vmatpush2.xpose.msra.mxu0 0.0
  %433 = vmatprep.subr.mxu0 0.0
  %434 = vmatpush2.xpose.msra.mxu0 0.0
  %435 = vmatprep.subr.mxu0 0.0
  %436 = vmatpush2.xpose.msra.mxu0 0.0
  %437 = vmatprep.subr.mxu0 0.0
  %438 = vmatpush2.xpose.msra.mxu0 0.0
  %439 = vmatprep.subr.mxu0 0.0
  %440 = vmatpush2.xpose.msra.mxu0 0.0
  %441 = vmatprep.subr.mxu0 0.0
  %442 = vmatpush2.xpose.msra.mxu0 0.0
  %443 = vmatprep.subr.mxu0 0.0
  %444 = vmatpush2.xpose.msra.mxu0 0.0
  %445 = vmatprep.subr.mxu0 0.0
  %446 = vmatpush2.xpose.msra.mxu0 0.0
  %447 = vmatprep.subr.mxu0 0.0
  %448 = vmatpush2.xpose.msra.mxu0 0.0
  %449 = vmatprep.subr.mxu0 0.0
  %450 = vmatpush2.xpose.msra.mxu0 0.0
  %451 = vmatprep.subr.mxu0 0.0
  %452 = vmatpush2.xpose.msra.mxu0 0.0
  %453 = vmatprep.mubr.f32.mxu0 0.0
  %454 = vmatmul.mubr.f32.gmra.mxu0 %v385
  %v455 = vpop.f32.mrf.mxu0
  %v456 = vadd.f32 0.0, %v455
  %v457 = vpop.f32.mrf.mxu0
  %458 = vdwg.mxu0
  %v459 = vsel %vm47, %v456, -1e+09
  %v460 = vsel %vm216, %v459, -inf
  %461 = vmax.xlane.f32.xlu0 %v460
  %v462 = vpop.xlane.xlu0 %461
  %v463 = vsub.f32 %v459, %v462
  %v464 = vmul.f32 %v463, 1.442695
  %v465 = vpow.pop %v464
  %v466 = vsel %vm216, %v465, 0.0
  %467 = vadd.xlane.f32.xlu0 %v466
  %v468 = vpop.xlane.xlu0 %467
  %469 = vrot.lane.b32.xlu0 %v211, 56
  %v470 = vpop.permute.xlu0 %469
  %v473 = vsel %vm216, %v465, 0
  %475 = vmatprep.subr.mxu0 0.0
  %476 = vmatpush1.msra.mxu0 0.0
  %477 = vmatprep.subr.mxu0 0.0
  %478 = vmatpush1.msra.mxu0 0.0
  %479 = vmatprep.subr.mxu0 0.0
  %480 = vmatpush1.msra.mxu0 0.0
  %481 = vmatprep.subr.mxu0 0.0
  %482 = vmatpush1.msra.mxu0 0.0
  %483 = vmatprep.subr.mxu0 0.0
  %484 = vmatpush1.msra.mxu0 0.0
  %485 = vmatprep.subr.mxu0 0.0
  %486 = vmatpush1.msra.mxu0 0.0
  %487 = vmatprep.subr.mxu0 0.0
  %488 = vmatpush1.msra.mxu0 0.0
  %489 = vmatprep.subr.mxu0 0.0
  %490 = vmatpush1.msra.mxu0 0.0
  %491 = vmatprep.subr.mxu0 0.0
  %492 = vmatpush1.msra.mxu0 0.0
  %493 = vmatprep.subr.mxu0 0.0
  %494 = vmatpush1.msra.mxu0 0.0
  %495 = vmatprep.subr.mxu0 0.0
  %496 = vmatpush1.msra.mxu0 0.0
  %497 = vmatprep.subr.mxu0 0.0
  %498 = vmatpush1.msra.mxu0 0.0
  %499 = vmatprep.subr.mxu0 0.0
  %500 = vmatpush1.msra.mxu0 0.0
  %501 = vmatprep.subr.mxu0 0.0
  %502 = vmatpush1.msra.mxu0 0.0
  %503 = vmatprep.subr.mxu0 0.0
  %504 = vmatpush1.msra.mxu0 0.0
  %505 = vmatprep.subr.mxu0 0.0
  %506 = vmatpush1.msra.mxu0 %v470
  %507 = vmatprep.subr.mxu0 0.0
  %508 = vmatpush2.msra.mxu0 0.0
  %509 = vmatprep.subr.mxu0 0.0
  %510 = vmatpush2.msra.mxu0 0.0
  %511 = vmatprep.subr.mxu0 0.0
  %512 = vmatpush2.msra.mxu0 0.0
  %513 = vmatprep.subr.mxu0 0.0
  %514 = vmatpush2.msra.mxu0 0.0
  %515 = vmatprep.subr.mxu0 0.0
  %516 = vmatpush2.msra.mxu0 0.0
  %517 = vmatprep.subr.mxu0 0.0
  %518 = vmatpush2.msra.mxu0 0.0
  %519 = vmatprep.subr.mxu0 0.0
  %520 = vmatpush2.msra.mxu0 0.0
  %521 = vmatprep.subr.mxu0 0.0
  %522 = vmatpush2.msra.mxu0 0.0
  %523 = vmatprep.subr.mxu0 0.0
  %524 = vmatpush2.msra.mxu0 0.0
  %525 = vmatprep.subr.mxu0 0.0
  %526 = vmatpush2.msra.mxu0 0.0
  %527 = vmatprep.subr.mxu0 0.0
  %528 = vmatpush2.msra.mxu0 0.0
  %529 = vmatprep.subr.mxu0 0.0
  %530 = vmatpush2.msra.mxu0 0.0
  %531 = vmatprep.subr.mxu0 0.0
  %532 = vmatpush2.msra.mxu0 0.0
  %533 = vmatprep.subr.mxu0 0.0
  %534 = vmatpush2.msra.mxu0 0.0
  %535 = vmatprep.subr.mxu0 0.0
  %536 = vmatpush2.msra.mxu0 0.0
  %537 = vmatprep.subr.mxu0 0.0
  %538 = vmatpush2.msra.mxu0 0.0
  %539 = vmatprep.mubr.f32.mxu0 0.0
  %540 = vmatmul.mubr.f32.gmra.mxu0 %v473
  %v541 = vpop.f32.mrf.mxu0
  %v542 = vadd.f32 0.0, %v541
  %v543 = vpop.f32.mrf.mxu0
  %544 = vdwg.mxu0
  %v545 = vrcp.pop %v468
  %v546 = vmul.f32 %v542, %v545
  %547 = vrot.lane.b32.xlu0 %v189, 112
  %v548 = vpop.permute.xlu0 %547
  %549 = vrot.lane.b32.xlu0 %v200, 80
  %v550 = vpop.permute.xlu0 %549
  %v551 = vsel %vm216, %v548, 0
  %v553 = vsel %vm216, %v550, 0
  %555 = vmatprep.subr.mxu0 0.0
  %556 = vmatpush1.xpose.msra.mxu0 0.0
  %557 = vmatprep.subr.mxu0 0.0
  %558 = vmatpush1.xpose.msra.mxu0 0.0
  %559 = vmatprep.subr.mxu0 0.0
  %560 = vmatpush1.xpose.msra.mxu0 0.0
  %561 = vmatprep.subr.mxu0 0.0
  %562 = vmatpush1.xpose.msra.mxu0 0.0
  %563 = vmatprep.subr.mxu0 0.0
  %564 = vmatpush1.xpose.msra.mxu0 0.0
  %565 = vmatprep.subr.mxu0 0.0
  %566 = vmatpush1.xpose.msra.mxu0 0.0
  %567 = vmatprep.subr.mxu0 0.0
  %568 = vmatpush1.xpose.msra.mxu0 0.0
  %569 = vmatprep.subr.mxu0 0.0
  %570 = vmatpush1.xpose.msra.mxu0 0.0
  %571 = vmatprep.subr.mxu0 0.0
  %572 = vmatpush1.xpose.msra.mxu0 0.0
  %573 = vmatprep.subr.mxu0 0.0
  %574 = vmatpush1.xpose.msra.mxu0 0.0
  %575 = vmatprep.subr.mxu0 0.0
  %576 = vmatpush1.xpose.msra.mxu0 0.0
  %577 = vmatprep.subr.mxu0 0.0
  %578 = vmatpush1.xpose.msra.mxu0 0.0
  %579 = vmatprep.subr.mxu0 0.0
  %580 = vmatpush1.xpose.msra.mxu0 0.0
  %581 = vmatprep.subr.mxu0 0.0
  %582 = vmatpush1.xpose.msra.mxu0 0.0
  %583 = vmatprep.subr.mxu0 0.0
  %584 = vmatpush1.xpose.msra.mxu0 0.0
  %585 = vmatprep.subr.mxu0 0.0
  %586 = vmatpush1.xpose.msra.mxu0 %v553
  %587 = vmatprep.subr.mxu0 0.0
  %588 = vmatpush2.xpose.msra.mxu0 0.0
  %589 = vmatprep.subr.mxu0 0.0
  %590 = vmatpush2.xpose.msra.mxu0 0.0
  %591 = vmatprep.subr.mxu0 0.0
  %592 = vmatpush2.xpose.msra.mxu0 0.0
  %593 = vmatprep.subr.mxu0 0.0
  %594 = vmatpush2.xpose.msra.mxu0 0.0
  %595 = vmatprep.subr.mxu0 0.0
  %596 = vmatpush2.xpose.msra.mxu0 0.0
  %597 = vmatprep.subr.mxu0 0.0
  %598 = vmatpush2.xpose.msra.mxu0 0.0
  %599 = vmatprep.subr.mxu0 0.0
  %600 = vmatpush2.xpose.msra.mxu0 0.0
  %601 = vmatprep.subr.mxu0 0.0
  %602 = vmatpush2.xpose.msra.mxu0 0.0
  %603 = vmatprep.subr.mxu0 0.0
  %604 = vmatpush2.xpose.msra.mxu0 0.0
  %605 = vmatprep.subr.mxu0 0.0
  %606 = vmatpush2.xpose.msra.mxu0 0.0
  %607 = vmatprep.subr.mxu0 0.0
  %608 = vmatpush2.xpose.msra.mxu0 0.0
  %609 = vmatprep.subr.mxu0 0.0
  %610 = vmatpush2.xpose.msra.mxu0 0.0
  %611 = vmatprep.subr.mxu0 0.0
  %612 = vmatpush2.xpose.msra.mxu0 0.0
  %613 = vmatprep.subr.mxu0 0.0
  %614 = vmatpush2.xpose.msra.mxu0 0.0
  %615 = vmatprep.subr.mxu0 0.0
  %616 = vmatpush2.xpose.msra.mxu0 0.0
  %617 = vmatprep.subr.mxu0 0.0
  %618 = vmatpush2.xpose.msra.mxu0 0.0
  %619 = vmatprep.mubr.f32.mxu0 0.0
  %620 = vmatmul.mubr.f32.gmra.mxu0 %v551
  %v621 = vpop.f32.mrf.mxu0
  %v622 = vadd.f32 0.0, %v621
  %v623 = vpop.f32.mrf.mxu0
  %624 = vdwg.mxu0
  %v625 = vsel %vm47, %v622, -1e+09
  %v626 = vsel %vm216, %v625, -inf
  %627 = vmax.xlane.f32.xlu0 %v626
  %v628 = vpop.xlane.xlu0 %627
  %v629 = vsub.f32 %v625, %v628
  %v630 = vmul.f32 %v629, 1.442695
  %v631 = vpow.pop %v630
  %v632 = vsel %vm216, %v631, 0.0
  %633 = vadd.xlane.f32.xlu0 %v632
  %v634 = vpop.xlane.xlu0 %633
  %635 = vrot.lane.b32.xlu0 %v211, 48
  %v636 = vpop.permute.xlu0 %635
  %v639 = vsel %vm216, %v631, 0
  %641 = vmatprep.subr.mxu0 0.0
  %642 = vmatpush1.msra.mxu0 0.0
  %643 = vmatprep.subr.mxu0 0.0
  %644 = vmatpush1.msra.mxu0 0.0
  %645 = vmatprep.subr.mxu0 0.0
  %646 = vmatpush1.msra.mxu0 0.0
  %647 = vmatprep.subr.mxu0 0.0
  %648 = vmatpush1.msra.mxu0 0.0
  %649 = vmatprep.subr.mxu0 0.0
  %650 = vmatpush1.msra.mxu0 0.0
  %651 = vmatprep.subr.mxu0 0.0
  %652 = vmatpush1.msra.mxu0 0.0
  %653 = vmatprep.subr.mxu0 0.0
  %654 = vmatpush1.msra.mxu0 0.0
  %655 = vmatprep.subr.mxu0 0.0
  %656 = vmatpush1.msra.mxu0 0.0
  %657 = vmatprep.subr.mxu0 0.0
  %658 = vmatpush1.msra.mxu0 0.0
  %659 = vmatprep.subr.mxu0 0.0
  %660 = vmatpush1.msra.mxu0 0.0
  %661 = vmatprep.subr.mxu0 0.0
  %662 = vmatpush1.msra.mxu0 0.0
  %663 = vmatprep.subr.mxu0 0.0
  %664 = vmatpush1.msra.mxu0 0.0
  %665 = vmatprep.subr.mxu0 0.0
  %666 = vmatpush1.msra.mxu0 0.0
  %667 = vmatprep.subr.mxu0 0.0
  %668 = vmatpush1.msra.mxu0 0.0
  %669 = vmatprep.subr.mxu0 0.0
  %670 = vmatpush1.msra.mxu0 0.0
  %671 = vmatprep.subr.mxu0 0.0
  %672 = vmatpush1.msra.mxu0 %v636
  %673 = vmatprep.subr.mxu0 0.0
  %674 = vmatpush2.msra.mxu0 0.0
  %675 = vmatprep.subr.mxu0 0.0
  %676 = vmatpush2.msra.mxu0 0.0
  %677 = vmatprep.subr.mxu0 0.0
  %678 = vmatpush2.msra.mxu0 0.0
  %679 = vmatprep.subr.mxu0 0.0
  %680 = vmatpush2.msra.mxu0 0.0
  %681 = vmatprep.subr.mxu0 0.0
  %682 = vmatpush2.msra.mxu0 0.0
  %683 = vmatprep.subr.mxu0 0.0
  %684 = vmatpush2.msra.mxu0 0.0
  %685 = vmatprep.subr.mxu0 0.0
  %686 = vmatpush2.msra.mxu0 0.0
  %687 = vmatprep.subr.mxu0 0.0
  %688 = vmatpush2.msra.mxu0 0.0
  %689 = vmatprep.subr.mxu0 0.0
  %690 = vmatpush2.msra.mxu0 0.0
  %691 = vmatprep.subr.mxu0 0.0
  %692 = vmatpush2.msra.mxu0 0.0
  %693 = vmatprep.subr.mxu0 0.0
  %694 = vmatpush2.msra.mxu0 0.0
  %695 = vmatprep.subr.mxu0 0.0
  %696 = vmatpush2.msra.mxu0 0.0
  %697 = vmatprep.subr.mxu0 0.0
  %698 = vmatpush2.msra.mxu0 0.0
  %699 = vmatprep.subr.mxu0 0.0
  %700 = vmatpush2.msra.mxu0 0.0
  %701 = vmatprep.subr.mxu0 0.0
  %702 = vmatpush2.msra.mxu0 0.0
  %703 = vmatprep.subr.mxu0 0.0
  %704 = vmatpush2.msra.mxu0 0.0
  %705 = vmatprep.mubr.f32.mxu0 0.0
  %706 = vmatmul.mubr.f32.gmra.mxu0 %v639
  %v707 = vpop.f32.mrf.mxu0
  %v708 = vadd.f32 0.0, %v707
  %v709 = vpop.f32.mrf.mxu0
  %710 = vdwg.mxu0
  %v711 = vrcp.pop %v634
  %v712 = vmul.f32 %v708, %v711
  %713 = vrot.lane.b32.xlu0 %v189, 104
  %v714 = vpop.permute.xlu0 %713
  %715 = vrot.lane.b32.xlu0 %v200, 72
  %v716 = vpop.permute.xlu0 %715
  %v717 = vsel %vm216, %v714, 0
  %v719 = vsel %vm216, %v716, 0
  %721 = vmatprep.subr.mxu0 0.0
  %722 = vmatpush1.xpose.msra.mxu0 0.0
  %723 = vmatprep.subr.mxu0 0.0
  %724 = vmatpush1.xpose.msra.mxu0 0.0
  %725 = vmatprep.subr.mxu0 0.0
  %726 = vmatpush1.xpose.msra.mxu0 0.0
  %727 = vmatprep.subr.mxu0 0.0
  %728 = vmatpush1.xpose.msra.mxu0 0.0
  %729 = vmatprep.subr.mxu0 0.0
  %730 = vmatpush1.xpose.msra.mxu0 0.0
  %731 = vmatprep.subr.mxu0 0.0
  %732 = vmatpush1.xpose.msra.mxu0 0.0
  %733 = vmatprep.subr.mxu0 0.0
  %734 = vmatpush1.xpose.msra.mxu0 0.0
  %735 = vmatprep.subr.mxu0 0.0
  %736 = vmatpush1.xpose.msra.mxu0 0.0
  %737 = vmatprep.subr.mxu0 0.0
  %738 = vmatpush1.xpose.msra.mxu0 0.0
  %739 = vmatprep.subr.mxu0 0.0
  %740 = vmatpush1.xpose.msra.mxu0 0.0
  %741 = vmatprep.subr.mxu0 0.0
  %742 = vmatpush1.xpose.msra.mxu0 0.0
  %743 = vmatprep.subr.mxu0 0.0
  %744 = vmatpush1.xpose.msra.mxu0 0.0
  %745 = vmatprep.subr.mxu0 0.0
  %746 = vmatpush1.xpose.msra.mxu0 0.0
  %747 = vmatprep.subr.mxu0 0.0
  %748 = vmatpush1.xpose.msra.mxu0 0.0
  %749 = vmatprep.subr.mxu0 0.0
  %750 = vmatpush1.xpose.msra.mxu0 0.0
  %751 = vmatprep.subr.mxu0 0.0
  %752 = vmatpush1.xpose.msra.mxu0 %v719
  %753 = vmatprep.subr.mxu0 0.0
  %754 = vmatpush2.xpose.msra.mxu0 0.0
  %755 = vmatprep.subr.mxu0 0.0
  %756 = vmatpush2.xpose.msra.mxu0 0.0
  %757 = vmatprep.subr.mxu0 0.0
  %758 = vmatpush2.xpose.msra.mxu0 0.0
  %759 = vmatprep.subr.mxu0 0.0
  %760 = vmatpush2.xpose.msra.mxu0 0.0
  %761 = vmatprep.subr.mxu0 0.0
  %762 = vmatpush2.xpose.msra.mxu0 0.0
  %763 = vmatprep.subr.mxu0 0.0
  %764 = vmatpush2.xpose.msra.mxu0 0.0
  %765 = vmatprep.subr.mxu0 0.0
  %766 = vmatpush2.xpose.msra.mxu0 0.0
  %767 = vmatprep.subr.mxu0 0.0
  %768 = vmatpush2.xpose.msra.mxu0 0.0
  %769 = vmatprep.subr.mxu0 0.0
  %770 = vmatpush2.xpose.msra.mxu0 0.0
  %771 = vmatprep.subr.mxu0 0.0
  %772 = vmatpush2.xpose.msra.mxu0 0.0
  %773 = vmatprep.subr.mxu0 0.0
  %774 = vmatpush2.xpose.msra.mxu0 0.0
  %775 = vmatprep.subr.mxu0 0.0
  %776 = vmatpush2.xpose.msra.mxu0 0.0
  %777 = vmatprep.subr.mxu0 0.0
  %778 = vmatpush2.xpose.msra.mxu0 0.0
  %779 = vmatprep.subr.mxu0 0.0
  %780 = vmatpush2.xpose.msra.mxu0 0.0
  %781 = vmatprep.subr.mxu0 0.0
  %782 = vmatpush2.xpose.msra.mxu0 0.0
  %783 = vmatprep.subr.mxu0 0.0
  %784 = vmatpush2.xpose.msra.mxu0 0.0
  %785 = vmatprep.mubr.f32.mxu0 0.0
  %786 = vmatmul.mubr.f32.gmra.mxu0 %v717
  %v787 = vpop.f32.mrf.mxu0
  %v788 = vadd.f32 0.0, %v787
  %v789 = vpop.f32.mrf.mxu0
  %790 = vdwg.mxu0
  %v791 = vsel %vm47, %v788, -1e+09
  %v792 = vsel %vm216, %v791, -inf
  %793 = vmax.xlane.f32.xlu0 %v792
  %v794 = vpop.xlane.xlu0 %793
  %v795 = vsub.f32 %v791, %v794
  %v796 = vmul.f32 %v795, 1.442695
  %v797 = vpow.pop %v796
  %v798 = vsel %vm216, %v797, 0.0
  %799 = vadd.xlane.f32.xlu0 %v798
  %v800 = vpop.xlane.xlu0 %799
  %801 = vrot.lane.b32.xlu0 %v211, 40
  %v802 = vpop.permute.xlu0 %801
  %v805 = vsel %vm216, %v797, 0
  %807 = vmatprep.subr.mxu0 0.0
  %808 = vmatpush1.msra.mxu0 0.0
  %809 = vmatprep.subr.mxu0 0.0
  %810 = vmatpush1.msra.mxu0 0.0
  %811 = vmatprep.subr.mxu0 0.0
  %812 = vmatpush1.msra.mxu0 0.0
  %813 = vmatprep.subr.mxu0 0.0
  %814 = vmatpush1.msra.mxu0 0.0
  %815 = vmatprep.subr.mxu0 0.0
  %816 = vmatpush1.msra.mxu0 0.0
  %817 = vmatprep.subr.mxu0 0.0
  %818 = vmatpush1.msra.mxu0 0.0
  %819 = vmatprep.subr.mxu0 0.0
  %820 = vmatpush1.msra.mxu0 0.0
  %821 = vmatprep.subr.mxu0 0.0
  %822 = vmatpush1.msra.mxu0 0.0
  %823 = vmatprep.subr.mxu0 0.0
  %824 = vmatpush1.msra.mxu0 0.0
  %825 = vmatprep.subr.mxu0 0.0
  %826 = vmatpush1.msra.mxu0 0.0
  %827 = vmatprep.subr.mxu0 0.0
  %828 = vmatpush1.msra.mxu0 0.0
  %829 = vmatprep.subr.mxu0 0.0
  %830 = vmatpush1.msra.mxu0 0.0
  %831 = vmatprep.subr.mxu0 0.0
  %832 = vmatpush1.msra.mxu0 0.0
  %833 = vmatprep.subr.mxu0 0.0
  %834 = vmatpush1.msra.mxu0 0.0
  %835 = vmatprep.subr.mxu0 0.0
  %836 = vmatpush1.msra.mxu0 0.0
  %837 = vmatprep.subr.mxu0 0.0
  %838 = vmatpush1.msra.mxu0 %v802
  %839 = vmatprep.subr.mxu0 0.0
  %840 = vmatpush2.msra.mxu0 0.0
  %841 = vmatprep.subr.mxu0 0.0
  %842 = vmatpush2.msra.mxu0 0.0
  %843 = vmatprep.subr.mxu0 0.0
  %844 = vmatpush2.msra.mxu0 0.0
  %845 = vmatprep.subr.mxu0 0.0
  %846 = vmatpush2.msra.mxu0 0.0
  %847 = vmatprep.subr.mxu0 0.0
  %848 = vmatpush2.msra.mxu0 0.0
  %849 = vmatprep.subr.mxu0 0.0
  %850 = vmatpush2.msra.mxu0 0.0
  %851 = vmatprep.subr.mxu0 0.0
  %852 = vmatpush2.msra.mxu0 0.0
  %853 = vmatprep.subr.mxu0 0.0
  %854 = vmatpush2.msra.mxu0 0.0
  %855 = vmatprep.subr.mxu0 0.0
  %856 = vmatpush2.msra.mxu0 0.0
  %857 = vmatprep.subr.mxu0 0.0
  %858 = vmatpush2.msra.mxu0 0.0
  %859 = vmatprep.subr.mxu0 0.0
  %860 = vmatpush2.msra.mxu0 0.0
  %861 = vmatprep.subr.mxu0 0.0
  %862 = vmatpush2.msra.mxu0 0.0
  %863 = vmatprep.subr.mxu0 0.0
  %864 = vmatpush2.msra.mxu0 0.0
  %865 = vmatprep.subr.mxu0 0.0
  %866 = vmatpush2.msra.mxu0 0.0
  %867 = vmatprep.subr.mxu0 0.0
  %868 = vmatpush2.msra.mxu0 0.0
  %869 = vmatprep.subr.mxu0 0.0
  %870 = vmatpush2.msra.mxu0 0.0
  %871 = vmatprep.mubr.f32.mxu0 0.0
  %872 = vmatmul.mubr.f32.gmra.mxu0 %v805
  %v873 = vpop.f32.mrf.mxu0
  %v874 = vadd.f32 0.0, %v873
  %v875 = vpop.f32.mrf.mxu0
  %876 = vdwg.mxu0
  %v877 = vrcp.pop %v800
  %v878 = vmul.f32 %v874, %v877
  %880 = vrot.lane.b32.xlu0 %v546, 8
  %v881 = vpop.permute.xlu0 %880
  %884 = vrot.lane.b32.xlu0 %v712, 16
  %v885 = vpop.permute.xlu0 %884
  %888 = vrot.lane.b32.xlu0 %v878, 24
  %v889 = vpop.permute.xlu0 %888
  %v891 = vsel %vm216, %v380, %v881
  %vm892 = vcmask 130048
  %v893 = vsel %vm892, %v891, %v885
  %vm894 = vcmask 195584
  %v895 = vsel %vm894, %v893, %v889
  %897 = vrot.lane.b32.xlu0 %v201, 96
  %v898 = vpop.permute.xlu0 %897
  %v900 = vsel %vm216, %v190, 0
  %v902 = vsel %vm216, %v898, 0
  %904 = vmatprep.subr.mxu0 0.0
  %905 = vmatpush1.xpose.msra.mxu0 0.0
  %906 = vmatprep.subr.mxu0 0.0
  %907 = vmatpush1.xpose.msra.mxu0 0.0
  %908 = vmatprep.subr.mxu0 0.0
  %909 = vmatpush1.xpose.msra.mxu0 0.0
  %910 = vmatprep.subr.mxu0 0.0
  %911 = vmatpush1.xpose.msra.mxu0 0.0
  %912 = vmatprep.subr.mxu0 0.0
  %913 = vmatpush1.xpose.msra.mxu0 0.0
  %914 = vmatprep.subr.mxu0 0.0
  %915 = vmatpush1.xpose.msra.mxu0 0.0
  %916 = vmatprep.subr.mxu0 0.0
  %917 = vmatpush1.xpose.msra.mxu0 0.0
  %918 = vmatprep.subr.mxu0 0.0
  %919 = vmatpush1.xpose.msra.mxu0 0.0
  %920 = vmatprep.subr.mxu0 0.0
  %921 = vmatpush1.xpose.msra.mxu0 0.0
  %922 = vmatprep.subr.mxu0 0.0
  %923 = vmatpush1.xpose.msra.mxu0 0.0
  %924 = vmatprep.subr.mxu0 0.0
  %925 = vmatpush1.xpose.msra.mxu0 0.0
  %926 = vmatprep.subr.mxu0 0.0
  %927 = vmatpush1.xpose.msra.mxu0 0.0
  %928 = vmatprep.subr.mxu0 0.0
  %929 = vmatpush1.xpose.msra.mxu0 0.0
  %930 = vmatprep.subr.mxu0 0.0
  %931 = vmatpush1.xpose.msra.mxu0 0.0
  %932 = vmatprep.subr.mxu0 0.0
  %933 = vmatpush1.xpose.msra.mxu0 0.0
  %934 = vmatprep.subr.mxu0 0.0
  %935 = vmatpush1.xpose.msra.mxu0 %v902
  %936 = vmatprep.subr.mxu0 0.0
  %937 = vmatpush2.xpose.msra.mxu0 0.0
  %938 = vmatprep.subr.mxu0 0.0
  %939 = vmatpush2.xpose.msra.mxu0 0.0
  %940 = vmatprep.subr.mxu0 0.0
  %941 = vmatpush2.xpose.msra.mxu0 0.0
  %942 = vmatprep.subr.mxu0 0.0
  %943 = vmatpush2.xpose.msra.mxu0 0.0
  %944 = vmatprep.subr.mxu0 0.0
  %945 = vmatpush2.xpose.msra.mxu0 0.0
  %946 = vmatprep.subr.mxu0 0.0
  %947 = vmatpush2.xpose.msra.mxu0 0.0
  %948 = vmatprep.subr.mxu0 0.0
  %949 = vmatpush2.xpose.msra.mxu0 0.0
  %950 = vmatprep.subr.mxu0 0.0
  %951 = vmatpush2.xpose.msra.mxu0 0.0
  %952 = vmatprep.subr.mxu0 0.0
  %953 = vmatpush2.xpose.msra.mxu0 0.0
  %954 = vmatprep.subr.mxu0 0.0
  %955 = vmatpush2.xpose.msra.mxu0 0.0
  %956 = vmatprep.subr.mxu0 0.0
  %957 = vmatpush2.xpose.msra.mxu0 0.0
  %958 = vmatprep.subr.mxu0 0.0
  %959 = vmatpush2.xpose.msra.mxu0 0.0
  %960 = vmatprep.subr.mxu0 0.0
  %961 = vmatpush2.xpose.msra.mxu0 0.0
  %962 = vmatprep.subr.mxu0 0.0
  %963 = vmatpush2.xpose.msra.mxu0 0.0
  %964 = vmatprep.subr.mxu0 0.0
  %965 = vmatpush2.xpose.msra.mxu0 0.0
  %966 = vmatprep.subr.mxu0 0.0
  %967 = vmatpush2.xpose.msra.mxu0 0.0
  %968 = vmatprep.mubr.f32.mxu0 0.0
  %969 = vmatmul.mubr.f32.gmra.mxu0 %v900
  %v970 = vpop.f32.mrf.mxu0
  %v971 = vadd.f32 0.0, %v970
  %v972 = vpop.f32.mrf.mxu0
  %973 = vdwg.mxu0
  %v974 = vsel %vm56, %v971, -1e+09
  %v975 = vsel %vm216, %v974, -inf
  %976 = vmax.xlane.f32.xlu0 %v975
  %v977 = vpop.xlane.xlu0 %976
  %v978 = vsub.f32 %v974, %v977
  %v979 = vmul.f32 %v978, 1.442695
  %v980 = vpow.pop %v979
  %v981 = vsel %vm216, %v980, 0.0
  %982 = vadd.xlane.f32.xlu0 %v981
  %v983 = vpop.xlane.xlu0 %982
  %985 = vrot.lane.b32.xlu0 %v212, 64
  %v986 = vpop.permute.xlu0 %985
  %v989 = vsel %vm216, %v980, 0
  %991 = vmatprep.subr.mxu0 0.0
  %992 = vmatpush1.msra.mxu0 0.0
  %993 = vmatprep.subr.mxu0 0.0
  %994 = vmatpush1.msra.mxu0 0.0
  %995 = vmatprep.subr.mxu0 0.0
  %996 = vmatpush1.msra.mxu0 0.0
  %997 = vmatprep.subr.mxu0 0.0
  %998 = vmatpush1.msra.mxu0 0.0
  %999 = vmatprep.subr.mxu0 0.0
  %1000 = vmatpush1.msra.mxu0 0.0
  %1001 = vmatprep.subr.mxu0 0.0
  %1002 = vmatpush1.msra.mxu0 0.0
  %1003 = vmatprep.subr.mxu0 0.0
  %1004 = vmatpush1.msra.mxu0 0.0
  %1005 = vmatprep.subr.mxu0 0.0
  %1006 = vmatpush1.msra.mxu0 0.0
  %1007 = vmatprep.subr.mxu0 0.0
  %1008 = vmatpush1.msra.mxu0 0.0
  %1009 = vmatprep.subr.mxu0 0.0
  %1010 = vmatpush1.msra.mxu0 0.0
  %1011 = vmatprep.subr.mxu0 0.0
  %1012 = vmatpush1.msra.mxu0 0.0
  %1013 = vmatprep.subr.mxu0 0.0
  %1014 = vmatpush1.msra.mxu0 0.0
  %1015 = vmatprep.subr.mxu0 0.0
  %1016 = vmatpush1.msra.mxu0 0.0
  %1017 = vmatprep.subr.mxu0 0.0
  %1018 = vmatpush1.msra.mxu0 0.0
  %1019 = vmatprep.subr.mxu0 0.0
  %1020 = vmatpush1.msra.mxu0 0.0
  %1021 = vmatprep.subr.mxu0 0.0
  %1022 = vmatpush1.msra.mxu0 %v986
  %1023 = vmatprep.subr.mxu0 0.0
  %1024 = vmatpush2.msra.mxu0 0.0
  %1025 = vmatprep.subr.mxu0 0.0
  %1026 = vmatpush2.msra.mxu0 0.0
  %1027 = vmatprep.subr.mxu0 0.0
  %1028 = vmatpush2.msra.mxu0 0.0
  %1029 = vmatprep.subr.mxu0 0.0
  %1030 = vmatpush2.msra.mxu0 0.0
  %1031 = vmatprep.subr.mxu0 0.0
  %1032 = vmatpush2.msra.mxu0 0.0
  %1033 = vmatprep.subr.mxu0 0.0
  %1034 = vmatpush2.msra.mxu0 0.0
  %1035 = vmatprep.subr.mxu0 0.0
  %1036 = vmatpush2.msra.mxu0 0.0
  %1037 = vmatprep.subr.mxu0 0.0
  %1038 = vmatpush2.msra.mxu0 0.0
  %1039 = vmatprep.subr.mxu0 0.0
  %1040 = vmatpush2.msra.mxu0 0.0
  %1041 = vmatprep.subr.mxu0 0.0
  %1042 = vmatpush2.msra.mxu0 0.0
  %1043 = vmatprep.subr.mxu0 0.0
  %1044 = vmatpush2.msra.mxu0 0.0
  %1045 = vmatprep.subr.mxu0 0.0
  %1046 = vmatpush2.msra.mxu0 0.0
  %1047 = vmatprep.subr.mxu0 0.0
  %1048 = vmatpush2.msra.mxu0 0.0
  %1049 = vmatprep.subr.mxu0 0.0
  %1050 = vmatpush2.msra.mxu0 0.0
  %1051 = vmatprep.subr.mxu0 0.0
  %1052 = vmatpush2.msra.mxu0 0.0
  %1053 = vmatprep.subr.mxu0 0.0
  %1054 = vmatpush2.msra.mxu0 0.0
  %1055 = vmatprep.mubr.f32.mxu0 0.0
  %1056 = vmatmul.mubr.f32.gmra.mxu0 %v989
  %v1057 = vpop.f32.mrf.mxu0
  %v1058 = vadd.f32 0.0, %v1057
  %v1059 = vpop.f32.mrf.mxu0
  %1060 = vdwg.mxu0
  %v1061 = vrcp.pop %v983
  %v1062 = vmul.f32 %v1058, %v1061
  %1063 = vrot.lane.b32.xlu0 %v190, 120
  %v1064 = vpop.permute.xlu0 %1063
  %1065 = vrot.lane.b32.xlu0 %v201, 88
  %v1066 = vpop.permute.xlu0 %1065
  %v1067 = vsel %vm216, %v1064, 0
  %v1069 = vsel %vm216, %v1066, 0
  %1071 = vmatprep.subr.mxu0 0.0
  %1072 = vmatpush1.xpose.msra.mxu0 0.0
  %1073 = vmatprep.subr.mxu0 0.0
  %1074 = vmatpush1.xpose.msra.mxu0 0.0
  %1075 = vmatprep.subr.mxu0 0.0
  %1076 = vmatpush1.xpose.msra.mxu0 0.0
  %1077 = vmatprep.subr.mxu0 0.0
  %1078 = vmatpush1.xpose.msra.mxu0 0.0
  %1079 = vmatprep.subr.mxu0 0.0
  %1080 = vmatpush1.xpose.msra.mxu0 0.0
  %1081 = vmatprep.subr.mxu0 0.0
  %1082 = vmatpush1.xpose.msra.mxu0 0.0
  %1083 = vmatprep.subr.mxu0 0.0
  %1084 = vmatpush1.xpose.msra.mxu0 0.0
  %1085 = vmatprep.subr.mxu0 0.0
  %1086 = vmatpush1.xpose.msra.mxu0 0.0
  %1087 = vmatprep.subr.mxu0 0.0
  %1088 = vmatpush1.xpose.msra.mxu0 0.0
  %1089 = vmatprep.subr.mxu0 0.0
  %1090 = vmatpush1.xpose.msra.mxu0 0.0
  %1091 = vmatprep.subr.mxu0 0.0
  %1092 = vmatpush1.xpose.msra.mxu0 0.0
  %1093 = vmatprep.subr.mxu0 0.0
  %1094 = vmatpush1.xpose.msra.mxu0 0.0
  %1095 = vmatprep.subr.mxu0 0.0
  %1096 = vmatpush1.xpose.msra.mxu0 0.0
  %1097 = vmatprep.subr.mxu0 0.0
  %1098 = vmatpush1.xpose.msra.mxu0 0.0
  %1099 = vmatprep.subr.mxu0 0.0
  %1100 = vmatpush1.xpose.msra.mxu0 0.0
  %1101 = vmatprep.subr.mxu0 0.0
  %1102 = vmatpush1.xpose.msra.mxu0 %v1069
  %1103 = vmatprep.subr.mxu0 0.0
  %1104 = vmatpush2.xpose.msra.mxu0 0.0
  %1105 = vmatprep.subr.mxu0 0.0
  %1106 = vmatpush2.xpose.msra.mxu0 0.0
  %1107 = vmatprep.subr.mxu0 0.0
  %1108 = vmatpush2.xpose.msra.mxu0 0.0
  %1109 = vmatprep.subr.mxu0 0.0
  %1110 = vmatpush2.xpose.msra.mxu0 0.0
  %1111 = vmatprep.subr.mxu0 0.0
  %1112 = vmatpush2.xpose.msra.mxu0 0.0
  %1113 = vmatprep.subr.mxu0 0.0
  %1114 = vmatpush2.xpose.msra.mxu0 0.0
  %1115 = vmatprep.subr.mxu0 0.0
  %1116 = vmatpush2.xpose.msra.mxu0 0.0
  %1117 = vmatprep.subr.mxu0 0.0
  %1118 = vmatpush2.xpose.msra.mxu0 0.0
  %1119 = vmatprep.subr.mxu0 0.0
  %1120 = vmatpush2.xpose.msra.mxu0 0.0
  %1121 = vmatprep.subr.mxu0 0.0
  %1122 = vmatpush2.xpose.msra.mxu0 0.0
  %1123 = vmatprep.subr.mxu0 0.0
  %1124 = vmatpush2.xpose.msra.mxu0 0.0
  %1125 = vmatprep.subr.mxu0 0.0
  %1126 = vmatpush2.xpose.msra.mxu0 0.0
  %1127 = vmatprep.subr.mxu0 0.0
  %1128 = vmatpush2.xpose.msra.mxu0 0.0
  %1129 = vmatprep.subr.mxu0 0.0
  %1130 = vmatpush2.xpose.msra.mxu0 0.0
  %1131 = vmatprep.subr.mxu0 0.0
  %1132 = vmatpush2.xpose.msra.mxu0 0.0
  %1133 = vmatprep.subr.mxu0 0.0
  %1134 = vmatpush2.xpose.msra.mxu0 0.0
  %1135 = vmatprep.mubr.f32.mxu0 0.0
  %1136 = vmatmul.mubr.f32.gmra.mxu0 %v1067
  %v1137 = vpop.f32.mrf.mxu0
  %v1138 = vadd.f32 0.0, %v1137
  %v1139 = vpop.f32.mrf.mxu0
  %1140 = vdwg.mxu0
  %v1141 = vsel %vm56, %v1138, -1e+09
  %v1142 = vsel %vm216, %v1141, -inf
  %1143 = vmax.xlane.f32.xlu0 %v1142
  %v1144 = vpop.xlane.xlu0 %1143
  %v1145 = vsub.f32 %v1141, %v1144
  %v1146 = vmul.f32 %v1145, 1.442695
  %v1147 = vpow.pop %v1146
  %v1148 = vsel %vm216, %v1147, 0.0
  %1149 = vadd.xlane.f32.xlu0 %v1148
  %v1150 = vpop.xlane.xlu0 %1149
  %1151 = vrot.lane.b32.xlu0 %v212, 56
  %v1152 = vpop.permute.xlu0 %1151
  %v1155 = vsel %vm216, %v1147, 0
  %1157 = vmatprep.subr.mxu0 0.0
  %1158 = vmatpush1.msra.mxu0 0.0
  %1159 = vmatprep.subr.mxu0 0.0
  %1160 = vmatpush1.msra.mxu0 0.0
  %1161 = vmatprep.subr.mxu0 0.0
  %1162 = vmatpush1.msra.mxu0 0.0
  %1163 = vmatprep.subr.mxu0 0.0
  %1164 = vmatpush1.msra.mxu0 0.0
  %1165 = vmatprep.subr.mxu0 0.0
  %1166 = vmatpush1.msra.mxu0 0.0
  %1167 = vmatprep.subr.mxu0 0.0
  %1168 = vmatpush1.msra.mxu0 0.0
  %1169 = vmatprep.subr.mxu0 0.0
  %1170 = vmatpush1.msra.mxu0 0.0
  %1171 = vmatprep.subr.mxu0 0.0
  %1172 = vmatpush1.msra.mxu0 0.0
  %1173 = vmatprep.subr.mxu0 0.0
  %1174 = vmatpush1.msra.mxu0 0.0
  %1175 = vmatprep.subr.mxu0 0.0
  %1176 = vmatpush1.msra.mxu0 0.0
  %1177 = vmatprep.subr.mxu0 0.0
  %1178 = vmatpush1.msra.mxu0 0.0
  %1179 = vmatprep.subr.mxu0 0.0
  %1180 = vmatpush1.msra.mxu0 0.0
  %1181 = vmatprep.subr.mxu0 0.0
  %1182 = vmatpush1.msra.mxu0 0.0
  %1183 = vmatprep.subr.mxu0 0.0
  %1184 = vmatpush1.msra.mxu0 0.0
  %1185 = vmatprep.subr.mxu0 0.0
  %1186 = vmatpush1.msra.mxu0 0.0
  %1187 = vmatprep.subr.mxu0 0.0
  %1188 = vmatpush1.msra.mxu0 %v1152
  %1189 = vmatprep.subr.mxu0 0.0
  %1190 = vmatpush2.msra.mxu0 0.0
  %1191 = vmatprep.subr.mxu0 0.0
  %1192 = vmatpush2.msra.mxu0 0.0
  %1193 = vmatprep.subr.mxu0 0.0
  %1194 = vmatpush2.msra.mxu0 0.0
  %1195 = vmatprep.subr.mxu0 0.0
  %1196 = vmatpush2.msra.mxu0 0.0
  %1197 = vmatprep.subr.mxu0 0.0
  %1198 = vmatpush2.msra.mxu0 0.0
  %1199 = vmatprep.subr.mxu0 0.0
  %1200 = vmatpush2.msra.mxu0 0.0
  %1201 = vmatprep.subr.mxu0 0.0
  %1202 = vmatpush2.msra.mxu0 0.0
  %1203 = vmatprep.subr.mxu0 0.0
  %1204 = vmatpush2.msra.mxu0 0.0
  %1205 = vmatprep.subr.mxu0 0.0
  %1206 = vmatpush2.msra.mxu0 0.0
  %1207 = vmatprep.subr.mxu0 0.0
  %1208 = vmatpush2.msra.mxu0 0.0
  %1209 = vmatprep.subr.mxu0 0.0
  %1210 = vmatpush2.msra.mxu0 0.0
  %1211 = vmatprep.subr.mxu0 0.0
  %1212 = vmatpush2.msra.mxu0 0.0
  %1213 = vmatprep.subr.mxu0 0.0
  %1214 = vmatpush2.msra.mxu0 0.0
  %1215 = vmatprep.subr.mxu0 0.0
  %1216 = vmatpush2.msra.mxu0 0.0
  %1217 = vmatprep.subr.mxu0 0.0
  %1218 = vmatpush2.msra.mxu0 0.0
  %1219 = vmatprep.subr.mxu0 0.0
  %1220 = vmatpush2.msra.mxu0 0.0
  %1221 = vmatprep.mubr.f32.mxu0 0.0
  %1222 = vmatmul.mubr.f32.gmra.mxu0 %v1155
  %v1223 = vpop.f32.mrf.mxu0
  %v1224 = vadd.f32 0.0, %v1223
  %v1225 = vpop.f32.mrf.mxu0
  %1226 = vdwg.mxu0
  %v1227 = vrcp.pop %v1150
  %v1228 = vmul.f32 %v1224, %v1227
  %1229 = vrot.lane.b32.xlu0 %v190, 112
  %v1230 = vpop.permute.xlu0 %1229
  %1231 = vrot.lane.b32.xlu0 %v201, 80
  %v1232 = vpop.permute.xlu0 %1231
  %v1233 = vsel %vm216, %v1230, 0
  %v1235 = vsel %vm216, %v1232, 0
  %1237 = vmatprep.subr.mxu0 0.0
  %1238 = vmatpush1.xpose.msra.mxu0 0.0
  %1239 = vmatprep.subr.mxu0 0.0
  %1240 = vmatpush1.xpose.msra.mxu0 0.0
  %1241 = vmatprep.subr.mxu0 0.0
  %1242 = vmatpush1.xpose.msra.mxu0 0.0
  %1243 = vmatprep.subr.mxu0 0.0
  %1244 = vmatpush1.xpose.msra.mxu0 0.0
  %1245 = vmatprep.subr.mxu0 0.0
  %1246 = vmatpush1.xpose.msra.mxu0 0.0
  %1247 = vmatprep.subr.mxu0 0.0
  %1248 = vmatpush1.xpose.msra.mxu0 0.0
  %1249 = vmatprep.subr.mxu0 0.0
  %1250 = vmatpush1.xpose.msra.mxu0 0.0
  %1251 = vmatprep.subr.mxu0 0.0
  %1252 = vmatpush1.xpose.msra.mxu0 0.0
  %1253 = vmatprep.subr.mxu0 0.0
  %1254 = vmatpush1.xpose.msra.mxu0 0.0
  %1255 = vmatprep.subr.mxu0 0.0
  %1256 = vmatpush1.xpose.msra.mxu0 0.0
  %1257 = vmatprep.subr.mxu0 0.0
  %1258 = vmatpush1.xpose.msra.mxu0 0.0
  %1259 = vmatprep.subr.mxu0 0.0
  %1260 = vmatpush1.xpose.msra.mxu0 0.0
  %1261 = vmatprep.subr.mxu0 0.0
  %1262 = vmatpush1.xpose.msra.mxu0 0.0
  %1263 = vmatprep.subr.mxu0 0.0
  %1264 = vmatpush1.xpose.msra.mxu0 0.0
  %1265 = vmatprep.subr.mxu0 0.0
  %1266 = vmatpush1.xpose.msra.mxu0 0.0
  %1267 = vmatprep.subr.mxu0 0.0
  %1268 = vmatpush1.xpose.msra.mxu0 %v1235
  %1269 = vmatprep.subr.mxu0 0.0
  %1270 = vmatpush2.xpose.msra.mxu0 0.0
  %1271 = vmatprep.subr.mxu0 0.0
  %1272 = vmatpush2.xpose.msra.mxu0 0.0
  %1273 = vmatprep.subr.mxu0 0.0
  %1274 = vmatpush2.xpose.msra.mxu0 0.0
  %1275 = vmatprep.subr.mxu0 0.0
  %1276 = vmatpush2.xpose.msra.mxu0 0.0
  %1277 = vmatprep.subr.mxu0 0.0
  %1278 = vmatpush2.xpose.msra.mxu0 0.0
  %1279 = vmatprep.subr.mxu0 0.0
  %1280 = vmatpush2.xpose.msra.mxu0 0.0
  %1281 = vmatprep.subr.mxu0 0.0
  %1282 = vmatpush2.xpose.msra.mxu0 0.0
  %1283 = vmatprep.subr.mxu0 0.0
  %1284 = vmatpush2.xpose.msra.mxu0 0.0
  %1285 = vmatprep.subr.mxu0 0.0
  %1286 = vmatpush2.xpose.msra.mxu0 0.0
  %1287 = vmatprep.subr.mxu0 0.0
  %1288 = vmatpush2.xpose.msra.mxu0 0.0
  %1289 = vmatprep.subr.mxu0 0.0
  %1290 = vmatpush2.xpose.msra.mxu0 0.0
  %1291 = vmatprep.subr.mxu0 0.0
  %1292 = vmatpush2.xpose.msra.mxu0 0.0
  %1293 = vmatprep.subr.mxu0 0.0
  %1294 = vmatpush2.xpose.msra.mxu0 0.0
  %1295 = vmatprep.subr.mxu0 0.0
  %1296 = vmatpush2.xpose.msra.mxu0 0.0
  %1297 = vmatprep.subr.mxu0 0.0
  %1298 = vmatpush2.xpose.msra.mxu0 0.0
  %1299 = vmatprep.subr.mxu0 0.0
  %1300 = vmatpush2.xpose.msra.mxu0 0.0
  %1301 = vmatprep.mubr.f32.mxu0 0.0
  %1302 = vmatmul.mubr.f32.gmra.mxu0 %v1233
  %v1303 = vpop.f32.mrf.mxu0
  %v1304 = vadd.f32 0.0, %v1303
  %v1305 = vpop.f32.mrf.mxu0
  %1306 = vdwg.mxu0
  %v1307 = vsel %vm56, %v1304, -1e+09
  %v1308 = vsel %vm216, %v1307, -inf
  %1309 = vmax.xlane.f32.xlu0 %v1308
  %v1310 = vpop.xlane.xlu0 %1309
  %v1311 = vsub.f32 %v1307, %v1310
  %v1312 = vmul.f32 %v1311, 1.442695
  %v1313 = vpow.pop %v1312
  %v1314 = vsel %vm216, %v1313, 0.0
  %1315 = vadd.xlane.f32.xlu0 %v1314
  %v1316 = vpop.xlane.xlu0 %1315
  %1317 = vrot.lane.b32.xlu0 %v212, 48
  %v1318 = vpop.permute.xlu0 %1317
  %v1321 = vsel %vm216, %v1313, 0
  %1323 = vmatprep.subr.mxu0 0.0
  %1324 = vmatpush1.msra.mxu0 0.0
  %1325 = vmatprep.subr.mxu0 0.0
  %1326 = vmatpush1.msra.mxu0 0.0
  %1327 = vmatprep.subr.mxu0 0.0
  %1328 = vmatpush1.msra.mxu0 0.0
  %1329 = vmatprep.subr.mxu0 0.0
  %1330 = vmatpush1.msra.mxu0 0.0
  %1331 = vmatprep.subr.mxu0 0.0
  %1332 = vmatpush1.msra.mxu0 0.0
  %1333 = vmatprep.subr.mxu0 0.0
  %1334 = vmatpush1.msra.mxu0 0.0
  %1335 = vmatprep.subr.mxu0 0.0
  %1336 = vmatpush1.msra.mxu0 0.0
  %1337 = vmatprep.subr.mxu0 0.0
  %1338 = vmatpush1.msra.mxu0 0.0
  %1339 = vmatprep.subr.mxu0 0.0
  %1340 = vmatpush1.msra.mxu0 0.0
  %1341 = vmatprep.subr.mxu0 0.0
  %1342 = vmatpush1.msra.mxu0 0.0
  %1343 = vmatprep.subr.mxu0 0.0
  %1344 = vmatpush1.msra.mxu0 0.0
  %1345 = vmatprep.subr.mxu0 0.0
  %1346 = vmatpush1.msra.mxu0 0.0
  %1347 = vmatprep.subr.mxu0 0.0
  %1348 = vmatpush1.msra.mxu0 0.0
  %1349 = vmatprep.subr.mxu0 0.0
  %1350 = vmatpush1.msra.mxu0 0.0
  %1351 = vmatprep.subr.mxu0 0.0
  %1352 = vmatpush1.msra.mxu0 0.0
  %1353 = vmatprep.subr.mxu0 0.0
  %1354 = vmatpush1.msra.mxu0 %v1318
  %1355 = vmatprep.subr.mxu0 0.0
  %1356 = vmatpush2.msra.mxu0 0.0
  %1357 = vmatprep.subr.mxu0 0.0
  %1358 = vmatpush2.msra.mxu0 0.0
  %1359 = vmatprep.subr.mxu0 0.0
  %1360 = vmatpush2.msra.mxu0 0.0
  %1361 = vmatprep.subr.mxu0 0.0
  %1362 = vmatpush2.msra.mxu0 0.0
  %1363 = vmatprep.subr.mxu0 0.0
  %1364 = vmatpush2.msra.mxu0 0.0
  %1365 = vmatprep.subr.mxu0 0.0
  %1366 = vmatpush2.msra.mxu0 0.0
  %1367 = vmatprep.subr.mxu0 0.0
  %1368 = vmatpush2.msra.mxu0 0.0
  %1369 = vmatprep.subr.mxu0 0.0
  %1370 = vmatpush2.msra.mxu0 0.0
  %1371 = vmatprep.subr.mxu0 0.0
  %1372 = vmatpush2.msra.mxu0 0.0
  %1373 = vmatprep.subr.mxu0 0.0
  %1374 = vmatpush2.msra.mxu0 0.0
  %1375 = vmatprep.subr.mxu0 0.0
  %1376 = vmatpush2.msra.mxu0 0.0
  %1377 = vmatprep.subr.mxu0 0.0
  %1378 = vmatpush2.msra.mxu0 0.0
  %1379 = vmatprep.subr.mxu0 0.0
  %1380 = vmatpush2.msra.mxu0 0.0
  %1381 = vmatprep.subr.mxu0 0.0
  %1382 = vmatpush2.msra.mxu0 0.0
  %1383 = vmatprep.subr.mxu0 0.0
  %1384 = vmatpush2.msra.mxu0 0.0
  %1385 = vmatprep.subr.mxu0 0.0
  %1386 = vmatpush2.msra.mxu0 0.0
  %1387 = vmatprep.mubr.f32.mxu0 0.0
  %1388 = vmatmul.mubr.f32.gmra.mxu0 %v1321
  %v1389 = vpop.f32.mrf.mxu0
  %v1390 = vadd.f32 0.0, %v1389
  %v1391 = vpop.f32.mrf.mxu0
  %1392 = vdwg.mxu0
  %v1393 = vrcp.pop %v1316
  %v1394 = vmul.f32 %v1390, %v1393
  %1395 = vrot.lane.b32.xlu0 %v190, 104
  %v1396 = vpop.permute.xlu0 %1395
  %1397 = vrot.lane.b32.xlu0 %v201, 72
  %v1398 = vpop.permute.xlu0 %1397
  %v1399 = vsel %vm216, %v1396, 0
  %v1401 = vsel %vm216, %v1398, 0
  %1403 = vmatprep.subr.mxu0 0.0
  %1404 = vmatpush1.xpose.msra.mxu0 0.0
  %1405 = vmatprep.subr.mxu0 0.0
  %1406 = vmatpush1.xpose.msra.mxu0 0.0
  %1407 = vmatprep.subr.mxu0 0.0
  %1408 = vmatpush1.xpose.msra.mxu0 0.0
  %1409 = vmatprep.subr.mxu0 0.0
  %1410 = vmatpush1.xpose.msra.mxu0 0.0
  %1411 = vmatprep.subr.mxu0 0.0
  %1412 = vmatpush1.xpose.msra.mxu0 0.0
  %1413 = vmatprep.subr.mxu0 0.0
  %1414 = vmatpush1.xpose.msra.mxu0 0.0
  %1415 = vmatprep.subr.mxu0 0.0
  %1416 = vmatpush1.xpose.msra.mxu0 0.0
  %1417 = vmatprep.subr.mxu0 0.0
  %1418 = vmatpush1.xpose.msra.mxu0 0.0
  %1419 = vmatprep.subr.mxu0 0.0
  %1420 = vmatpush1.xpose.msra.mxu0 0.0
  %1421 = vmatprep.subr.mxu0 0.0
  %1422 = vmatpush1.xpose.msra.mxu0 0.0
  %1423 = vmatprep.subr.mxu0 0.0
  %1424 = vmatpush1.xpose.msra.mxu0 0.0
  %1425 = vmatprep.subr.mxu0 0.0
  %1426 = vmatpush1.xpose.msra.mxu0 0.0
  %1427 = vmatprep.subr.mxu0 0.0
  %1428 = vmatpush1.xpose.msra.mxu0 0.0
  %1429 = vmatprep.subr.mxu0 0.0
  %1430 = vmatpush1.xpose.msra.mxu0 0.0
  %1431 = vmatprep.subr.mxu0 0.0
  %1432 = vmatpush1.xpose.msra.mxu0 0.0
  %1433 = vmatprep.subr.mxu0 0.0
  %1434 = vmatpush1.xpose.msra.mxu0 %v1401
  %1435 = vmatprep.subr.mxu0 0.0
  %1436 = vmatpush2.xpose.msra.mxu0 0.0
  %1437 = vmatprep.subr.mxu0 0.0
  %1438 = vmatpush2.xpose.msra.mxu0 0.0
  %1439 = vmatprep.subr.mxu0 0.0
  %1440 = vmatpush2.xpose.msra.mxu0 0.0
  %1441 = vmatprep.subr.mxu0 0.0
  %1442 = vmatpush2.xpose.msra.mxu0 0.0
  %1443 = vmatprep.subr.mxu0 0.0
  %1444 = vmatpush2.xpose.msra.mxu0 0.0
  %1445 = vmatprep.subr.mxu0 0.0
  %1446 = vmatpush2.xpose.msra.mxu0 0.0
  %1447 = vmatprep.subr.mxu0 0.0
  %1448 = vmatpush2.xpose.msra.mxu0 0.0
  %1449 = vmatprep.subr.mxu0 0.0
  %1450 = vmatpush2.xpose.msra.mxu0 0.0
  %1451 = vmatprep.subr.mxu0 0.0
  %1452 = vmatpush2.xpose.msra.mxu0 0.0
  %1453 = vmatprep.subr.mxu0 0.0
  %1454 = vmatpush2.xpose.msra.mxu0 0.0
  %1455 = vmatprep.subr.mxu0 0.0
  %1456 = vmatpush2.xpose.msra.mxu0 0.0
  %1457 = vmatprep.subr.mxu0 0.0
  %1458 = vmatpush2.xpose.msra.mxu0 0.0
  %1459 = vmatprep.subr.mxu0 0.0
  %1460 = vmatpush2.xpose.msra.mxu0 0.0
  %1461 = vmatprep.subr.mxu0 0.0
  %1462 = vmatpush2.xpose.msra.mxu0 0.0
  %1463 = vmatprep.subr.mxu0 0.0
  %1464 = vmatpush2.xpose.msra.mxu0 0.0
  %1465 = vmatprep.subr.mxu0 0.0
  %1466 = vmatpush2.xpose.msra.mxu0 0.0
  %1467 = vmatprep.mubr.f32.mxu0 0.0
  %1468 = vmatmul.mubr.f32.gmra.mxu0 %v1399
  %v1469 = vpop.f32.mrf.mxu0
  %v1470 = vadd.f32 0.0, %v1469
  %v1471 = vpop.f32.mrf.mxu0
  %1472 = vdwg.mxu0
  %v1473 = vsel %vm56, %v1470, -1e+09
  %v1474 = vsel %vm216, %v1473, -inf
  %1475 = vmax.xlane.f32.xlu0 %v1474
  %v1476 = vpop.xlane.xlu0 %1475
  %v1477 = vsub.f32 %v1473, %v1476
  %v1478 = vmul.f32 %v1477, 1.442695
  %v1479 = vpow.pop %v1478
  %v1480 = vsel %vm216, %v1479, 0.0
  %1481 = vadd.xlane.f32.xlu0 %v1480
  %v1482 = vpop.xlane.xlu0 %1481
  %1483 = vrot.lane.b32.xlu0 %v212, 40
  %v1484 = vpop.permute.xlu0 %1483
  %v1487 = vsel %vm216, %v1479, 0
  %1489 = vmatprep.subr.mxu0 0.0
  %1490 = vmatpush1.msra.mxu0 0.0
  %1491 = vmatprep.subr.mxu0 0.0
  %1492 = vmatpush1.msra.mxu0 0.0
  %1493 = vmatprep.subr.mxu0 0.0
  %1494 = vmatpush1.msra.mxu0 0.0
  %1495 = vmatprep.subr.mxu0 0.0
  %1496 = vmatpush1.msra.mxu0 0.0
  %1497 = vmatprep.subr.mxu0 0.0
  %1498 = vmatpush1.msra.mxu0 0.0
  %1499 = vmatprep.subr.mxu0 0.0
  %1500 = vmatpush1.msra.mxu0 0.0
  %1501 = vmatprep.subr.mxu0 0.0
  %1502 = vmatpush1.msra.mxu0 0.0
  %1503 = vmatprep.subr.mxu0 0.0
  %1504 = vmatpush1.msra.mxu0 0.0
  %1505 = vmatprep.subr.mxu0 0.0
  %1506 = vmatpush1.msra.mxu0 0.0
  %1507 = vmatprep.subr.mxu0 0.0
  %1508 = vmatpush1.msra.mxu0 0.0
  %1509 = vmatprep.subr.mxu0 0.0
  %1510 = vmatpush1.msra.mxu0 0.0
  %1511 = vmatprep.subr.mxu0 0.0
  %1512 = vmatpush1.msra.mxu0 0.0
  %1513 = vmatprep.subr.mxu0 0.0
  %1514 = vmatpush1.msra.mxu0 0.0
  %1515 = vmatprep.subr.mxu0 0.0
  %1516 = vmatpush1.msra.mxu0 0.0
  %1517 = vmatprep.subr.mxu0 0.0
  %1518 = vmatpush1.msra.mxu0 0.0
  %1519 = vmatprep.subr.mxu0 0.0
  %1520 = vmatpush1.msra.mxu0 %v1484
  %1521 = vmatprep.subr.mxu0 0.0
  %1522 = vmatpush2.msra.mxu0 0.0
  %1523 = vmatprep.subr.mxu0 0.0
  %1524 = vmatpush2.msra.mxu0 0.0
  %1525 = vmatprep.subr.mxu0 0.0
  %1526 = vmatpush2.msra.mxu0 0.0
  %1527 = vmatprep.subr.mxu0 0.0
  %1528 = vmatpush2.msra.mxu0 0.0
  %1529 = vmatprep.subr.mxu0 0.0
  %1530 = vmatpush2.msra.mxu0 0.0
  %1531 = vmatprep.subr.mxu0 0.0
  %1532 = vmatpush2.msra.mxu0 0.0
  %1533 = vmatprep.subr.mxu0 0.0
  %1534 = vmatpush2.msra.mxu0 0.0
  %1535 = vmatprep.subr.mxu0 0.0
  %1536 = vmatpush2.msra.mxu0 0.0
  %1537 = vmatprep.subr.mxu0 0.0
  %1538 = vmatpush2.msra.mxu0 0.0
  %1539 = vmatprep.subr.mxu0 0.0
  %1540 = vmatpush2.msra.mxu0 0.0
  %1541 = vmatprep.subr.mxu0 0.0
  %1542 = vmatpush2.msra.mxu0 0.0
  %1543 = vmatprep.subr.mxu0 0.0
  %1544 = vmatpush2.msra.mxu0 0.0
  %1545 = vmatprep.subr.mxu0 0.0
  %1546 = vmatpush2.msra.mxu0 0.0
  %1547 = vmatprep.subr.mxu0 0.0
  %1548 = vmatpush2.msra.mxu0 0.0
  %1549 = vmatprep.subr.mxu0 0.0
  %1550 = vmatpush2.msra.mxu0 0.0
  %1551 = vmatprep.subr.mxu0 0.0
  %1552 = vmatpush2.msra.mxu0 0.0
  %1553 = vmatprep.mubr.f32.mxu0 0.0
  %1554 = vmatmul.mubr.f32.gmra.mxu0 %v1487
  %v1555 = vpop.f32.mrf.mxu0
  %v1556 = vadd.f32 0.0, %v1555
  %v1557 = vpop.f32.mrf.mxu0
  %1558 = vdwg.mxu0
  %v1559 = vrcp.pop %v1482
  %v1560 = vmul.f32 %v1556, %v1559
  %1562 = vrot.lane.b32.xlu0 %v1228, 8
  %v1563 = vpop.permute.xlu0 %1562
  %1566 = vrot.lane.b32.xlu0 %v1394, 16
  %v1567 = vpop.permute.xlu0 %1566
  %1570 = vrot.lane.b32.xlu0 %v1560, 24
  %v1571 = vpop.permute.xlu0 %1570
  %v1573 = vsel %vm216, %v1062, %v1563
  %v1574 = vsel %vm892, %v1573, %v1567
  %v1575 = vsel %vm894, %v1574, %v1571
  %v1576 = vld [vmem:[%s5] sm:$0xff]
  %v1577 = vld [vmem:[%s5 + $0x8] sm:$0xff]
  %v1578 = vld [vmem:[%s5 + $0x10] sm:$0xff]
  %v1579 = vld [vmem:[%s5 + $0x18] sm:$0xff]
  %v1581 = vsel %vm59, %v895, 0
  %v1584 = vsel %vm59, %v1575, 0
  %1586 = vmatprep.subr.mxu0 0.0
  %1587 = vmatpush1.msra.mxu0 0.0
  %1588 = vmatprep.subr.mxu0 0.0
  %1589 = vmatpush1.msra.mxu0 0.0
  %1590 = vmatprep.subr.mxu0 0.0
  %1591 = vmatpush1.msra.mxu0 0.0
  %1592 = vmatprep.subr.mxu0 0.0
  %1593 = vmatpush1.msra.mxu0 0.0
  %1594 = vmatprep.subr.mxu0 0.0
  %1595 = vmatpush1.msra.mxu0 0.0
  %1596 = vmatprep.subr.mxu0 0.0
  %1597 = vmatpush1.msra.mxu0 0.0
  %1598 = vmatprep.subr.mxu0 0.0
  %1599 = vmatpush1.msra.mxu0 0.0
  %1600 = vmatprep.subr.mxu0 0.0
  %1601 = vmatpush1.msra.mxu0 0.0
  %1602 = vmatprep.subr.mxu0 0.0
  %1603 = vmatpush1.msra.mxu0 0.0
  %1604 = vmatprep.subr.mxu0 0.0
  %1605 = vmatpush1.msra.mxu0 0.0
  %1606 = vmatprep.subr.mxu0 0.0
  %1607 = vmatpush1.msra.mxu0 0.0
  %1608 = vmatprep.subr.mxu0 0.0
  %1609 = vmatpush1.msra.mxu0 0.0
  %1610 = vmatprep.subr.mxu0 0.0
  %1611 = vmatpush1.msra.mxu0 %v1579
  %1612 = vmatprep.subr.mxu0 0.0
  %1613 = vmatpush1.msra.mxu0 %v1578
  %1614 = vmatprep.subr.mxu0 0.0
  %1615 = vmatpush1.msra.mxu0 %v1577
  %1616 = vmatprep.subr.mxu0 0.0
  %1617 = vmatpush1.msra.mxu0 %v1576
  %1618 = vmatprep.subr.mxu0 0.0
  %1619 = vmatpush2.msra.mxu0 0.0
  %1620 = vmatprep.subr.mxu0 0.0
  %1621 = vmatpush2.msra.mxu0 0.0
  %1622 = vmatprep.subr.mxu0 0.0
  %1623 = vmatpush2.msra.mxu0 0.0
  %1624 = vmatprep.subr.mxu0 0.0
  %1625 = vmatpush2.msra.mxu0 0.0
  %1626 = vmatprep.subr.mxu0 0.0
  %1627 = vmatpush2.msra.mxu0 0.0
  %1628 = vmatprep.subr.mxu0 0.0
  %1629 = vmatpush2.msra.mxu0 0.0
  %1630 = vmatprep.subr.mxu0 0.0
  %1631 = vmatpush2.msra.mxu0 0.0
  %1632 = vmatprep.subr.mxu0 0.0
  %1633 = vmatpush2.msra.mxu0 0.0
  %1634 = vmatprep.subr.mxu0 0.0
  %1635 = vmatpush2.msra.mxu0 0.0
  %1636 = vmatprep.subr.mxu0 0.0
  %1637 = vmatpush2.msra.mxu0 0.0
  %1638 = vmatprep.subr.mxu0 0.0
  %1639 = vmatpush2.msra.mxu0 0.0
  %1640 = vmatprep.subr.mxu0 0.0
  %1641 = vmatpush2.msra.mxu0 0.0
  %1642 = vmatprep.subr.mxu0 0.0
  %1643 = vmatpush2.msra.mxu0 0.0
  %1644 = vmatprep.subr.mxu0 0.0
  %1645 = vmatpush2.msra.mxu0 0.0
  %1646 = vmatprep.subr.mxu0 0.0
  %1647 = vmatpush2.msra.mxu0 0.0
  %1648 = vmatprep.subr.mxu0 0.0
  %1649 = vmatpush2.msra.mxu0 0.0
  %1650 = vmatprep.mubr.f32.mxu0 0.0
  %1651 = vmatmul.mubr.f32.gmra.mxu0 %v1581
  %v1652 = vpop.f32.mrf.mxu0
  %v1653 = vadd.f32 0.0, %v1652
  %v1654 = vpop.f32.mrf.mxu0
  %1655 = vmatprep.mubr.f32.mxu0 0.0
  %1656 = vmatmul.mubr.f32.gmra.mxu0 %v1584
  %v1657 = vpop.f32.mrf.mxu0
  %v1658 = vadd.f32 0.0, %v1657
  %v1659 = vpop.f32.mrf.mxu0
  %1660 = vdwg.mxu0
  %v1661 = vadd.f32 %v32, %v1653
  %v1662 = vadd.f32 %v33, %v1658
  %v1663 = vld [vmem:[%s2 + $0x7] sm:$0x1]
  %v1664 = vlaneseq
  %v1665 = vshrl.u32 %v1664, 7
  %v1666 = vsub.s32 0, %v1665
  %v1667 = vrot.slane %v1663, %v1666
  %v1668 = vadd.f32 %v1661, %v1667
  %v1669 = vadd.f32 %v1662, %v1667
  %v1670 = vld [vmem:[%s2 + $0x2] sm:$0x1]
  %v1671 = vld [vmem:[%s2 + $0x3] sm:$0x1]
  %v1672 = vsel %vm59, %v1668, 0.0
  %1673 = vadd.xlane.f32.xlu0 %v1672
  %v1674 = vpop.xlane.xlu0 %1673
  %v1675 = vsel %vm59, %v1669, 0.0
  %1676 = vadd.xlane.f32.xlu0 %v1675
  %v1677 = vpop.xlane.xlu0 %1676
  %v1678 = vmul.f32 %v1674, %v66
  %v1679 = vmul.f32 %v1677, %v66
  %v1680 = vsub.f32 %v1668, %v1678
  %v1681 = vsub.f32 %v1669, %v1679
  %v1682 = vmul.f32 %v1680, %v1680
  %v1683 = vmul.f32 %v1681, %v1681
  %v1684 = vsel %vm59, %v1682, 0.0
  %1685 = vadd.xlane.f32.xlu0 %v1684
  %v1686 = vpop.xlane.xlu0 %1685
  %v1687 = vsel %vm59, %v1683, 0.0
  %1688 = vadd.xlane.f32.xlu0 %v1687
  %v1689 = vpop.xlane.xlu0 %1688
  %v1690 = vmul.f32 %v1686, %v66
  %v1691 = vmul.f32 %v1689, %v66
  %v1692 = vadd.f32 %v1690, 1e-05
  %v1693 = vadd.f32 %v1691, 1e-05
  %v1694 = vrsqrt.pop %v1692
  %v1695 = vrsqrt.pop %v1693
  %v1696 = vmul.f32 %v1680, %v1694
  %v1697 = vmul.f32 %v1681, %v1695
  %v1698 = vlaneseq
  %v1699 = vshrl.u32 %v1698, 7
  %v1700 = vsub.s32 0, %v1699
  %v1701 = vrot.slane %v1670, %v1700
  %v1702 = vmul.f32 %v1696, %v1701
  %v1703 = vmul.f32 %v1697, %v1701
  %v1704 = vlaneseq
  %v1705 = vshrl.u32 %v1704, 7
  %v1706 = vsub.s32 0, %v1705
  %v1707 = vrot.slane %v1671, %v1706
  %v1708 = vadd.f32 %v1702, %v1707
  %v1709 = vadd.f32 %v1703, %v1707
  %v1710 = vld [vmem:[%s6] sm:$0xff]
  %v1711 = vld [vmem:[%s6 + $0x8] sm:$0xff]
  %v1712 = vld [vmem:[%s6 + $0x10] sm:$0xff]
  %v1713 = vld [vmem:[%s6 + $0x18] sm:$0xff]
  %v1714 = vld [vmem:[%s3] sm:$0x1]
  %v1715 = vlaneseq
  %v1716 = vshrl.u32 %v1715, 7
  %v1717 = vsub.s32 0, %v1716
  %v1718 = vrot.slane %v1714, %v1717
  %v1720 = vsel %vm59, %v1708, 0
  %v1723 = vsel %vm59, %v1709, 0
  %1725 = vmatprep.subr.mxu0 0.0
  %1726 = vmatpush1.msra.mxu0 0.0
  %1727 = vmatprep.subr.mxu0 0.0
  %1728 = vmatpush1.msra.mxu0 0.0
  %1729 = vmatprep.subr.mxu0 0.0
  %1730 = vmatpush1.msra.mxu0 0.0
  %1731 = vmatprep.subr.mxu0 0.0
  %1732 = vmatpush1.msra.mxu0 0.0
  %1733 = vmatprep.subr.mxu0 0.0
  %1734 = vmatpush1.msra.mxu0 0.0
  %1735 = vmatprep.subr.mxu0 0.0
  %1736 = vmatpush1.msra.mxu0 0.0
  %1737 = vmatprep.subr.mxu0 0.0
  %1738 = vmatpush1.msra.mxu0 0.0
  %1739 = vmatprep.subr.mxu0 0.0
  %1740 = vmatpush1.msra.mxu0 0.0
  %1741 = vmatprep.subr.mxu0 0.0
  %1742 = vmatpush1.msra.mxu0 0.0
  %1743 = vmatprep.subr.mxu0 0.0
  %1744 = vmatpush1.msra.mxu0 0.0
  %1745 = vmatprep.subr.mxu0 0.0
  %1746 = vmatpush1.msra.mxu0 0.0
  %1747 = vmatprep.subr.mxu0 0.0
  %1748 = vmatpush1.msra.mxu0 0.0
  %1749 = vmatprep.subr.mxu0 0.0
  %1750 = vmatpush1.msra.mxu0 %v1713
  %1751 = vmatprep.subr.mxu0 0.0
  %1752 = vmatpush1.msra.mxu0 %v1712
  %1753 = vmatprep.subr.mxu0 0.0
  %1754 = vmatpush1.msra.mxu0 %v1711
  %1755 = vmatprep.subr.mxu0 0.0
  %1756 = vmatpush1.msra.mxu0 %v1710
  %1757 = vmatprep.subr.mxu0 0.0
  %1758 = vmatpush2.msra.mxu0 0.0
  %1759 = vmatprep.subr.mxu0 0.0
  %1760 = vmatpush2.msra.mxu0 0.0
  %1761 = vmatprep.subr.mxu0 0.0
  %1762 = vmatpush2.msra.mxu0 0.0
  %1763 = vmatprep.subr.mxu0 0.0
  %1764 = vmatpush2.msra.mxu0 0.0
  %1765 = vmatprep.subr.mxu0 0.0
  %1766 = vmatpush2.msra.mxu0 0.0
  %1767 = vmatprep.subr.mxu0 0.0
  %1768 = vmatpush2.msra.mxu0 0.0
  %1769 = vmatprep.subr.mxu0 0.0
  %1770 = vmatpush2.msra.mxu0 0.0
  %1771 = vmatprep.subr.mxu0 0.0
  %1772 = vmatpush2.msra.mxu0 0.0
  %1773 = vmatprep.subr.mxu0 0.0
  %1774 = vmatpush2.msra.mxu0 0.0
  %1775 = vmatprep.subr.mxu0 0.0
  %1776 = vmatpush2.msra.mxu0 0.0
  %1777 = vmatprep.subr.mxu0 0.0
  %1778 = vmatpush2.msra.mxu0 0.0
  %1779 = vmatprep.subr.mxu0 0.0
  %1780 = vmatpush2.msra.mxu0 0.0
  %1781 = vmatprep.subr.mxu0 0.0
  %1782 = vmatpush2.msra.mxu0 0.0
  %1783 = vmatprep.subr.mxu0 0.0
  %1784 = vmatpush2.msra.mxu0 0.0
  %1785 = vmatprep.subr.mxu0 0.0
  %1786 = vmatpush2.msra.mxu0 0.0
  %1787 = vmatprep.subr.mxu0 0.0
  %1788 = vmatpush2.msra.mxu0 0.0
  %1789 = vmatprep.mubr.f32.mxu0 0.0
  %1790 = vmatmul.mubr.f32.gmra.mxu0 %v1720
  %v1791 = vpop.f32.mrf.mxu0
  %v1792 = vadd.f32 %v1718, %v1791
  %v1793 = vpop.f32.mrf.mxu0
  %1794 = vmatprep.mubr.f32.mxu0 0.0
  %1795 = vmatmul.mubr.f32.gmra.mxu0 %v1723
  %v1796 = vpop.f32.mrf.mxu0
  %v1797 = vadd.f32 %v1718, %v1796
  %v1798 = vpop.f32.mrf.mxu0
  %1799 = vdwg.mxu0
  %v1800 = vmul.f32 %v1792, 0.5
  %v1801 = vmul.f32 %v1797, 0.5
  %v1802 = vmul.f32 %v1792, 0.044715
  %v1803 = vmul.f32 %v1797, 0.044715
  %v1804 = vmul.f32 %v1802, %v1792
  %v1805 = vmul.f32 %v1803, %v1797
  %v1806 = vmul.f32 %v1804, %v1792
  %v1807 = vmul.f32 %v1805, %v1797
  %v1808 = vadd.f32 %v1792, %v1806
  %v1809 = vadd.f32 %v1797, %v1807
  %v1810 = vmul.f32 %v1808, 0.7978846
  %v1811 = vmul.f32 %v1809, 0.7978846
  %v1812 = vtanh.pop %v1810
  %v1813 = vtanh.pop %v1811
  %v1814 = vadd.f32 %v1812, 1.0
  %v1815 = vadd.f32 %v1813, 1.0
  %v1816 = vmul.f32 %v1800, %v1814
  %v1817 = vmul.f32 %v1801, %v1815
  %v1818 = vld [vmem:[%s7] sm:$0xff]
  %v1819 = vld [vmem:[%s7 + $0x8] sm:$0xff]
  %v1820 = vld [vmem:[%s7 + $0x10] sm:$0xff]
  %v1821 = vld [vmem:[%s7 + $0x18] sm:$0xff]
  %v1822 = vld [vmem:[%s7 + $0x20] sm:$0xff]
  %v1823 = vld [vmem:[%s7 + $0x28] sm:$0xff]
  %v1824 = vld [vmem:[%s7 + $0x30] sm:$0xff]
  %v1825 = vld [vmem:[%s7 + $0x38] sm:$0xff]
  %v1826 = vld [vmem:[%s7 + $0x40] sm:$0xff]
  %v1827 = vld [vmem:[%s7 + $0x48] sm:$0xff]
  %v1828 = vld [vmem:[%s7 + $0x50] sm:$0xff]
  %v1829 = vld [vmem:[%s7 + $0x58] sm:$0xff]
  %v1830 = vld [vmem:[%s7 + $0x60] sm:$0xff]
  %v1831 = vld [vmem:[%s7 + $0x68] sm:$0xff]
  %v1832 = vld [vmem:[%s7 + $0x70] sm:$0xff]
  %v1833 = vld [vmem:[%s7 + $0x78] sm:$0xff]
  %1834 = vmatprep.subr.mxu0 0.0
  %1835 = vmatpush1.msra.mxu0 %v1833
  %1836 = vmatprep.subr.mxu0 0.0
  %1837 = vmatpush1.msra.mxu0 %v1832
  %1838 = vmatprep.subr.mxu0 0.0
  %1839 = vmatpush1.msra.mxu0 %v1831
  %1840 = vmatprep.subr.mxu0 0.0
  %1841 = vmatpush1.msra.mxu0 %v1830
  %1842 = vmatprep.subr.mxu0 0.0
  %1843 = vmatpush1.msra.mxu0 %v1829
  %1844 = vmatprep.subr.mxu0 0.0
  %1845 = vmatpush1.msra.mxu0 %v1828
  %1846 = vmatprep.subr.mxu0 0.0
  %1847 = vmatpush1.msra.mxu0 %v1827
  %1848 = vmatprep.subr.mxu0 0.0
  %1849 = vmatpush1.msra.mxu0 %v1826
  %1850 = vmatprep.subr.mxu0 0.0
  %1851 = vmatpush1.msra.mxu0 %v1825
  %1852 = vmatprep.subr.mxu0 0.0
  %1853 = vmatpush1.msra.mxu0 %v1824
  %1854 = vmatprep.subr.mxu0 0.0
  %1855 = vmatpush1.msra.mxu0 %v1823
  %1856 = vmatprep.subr.mxu0 0.0
  %1857 = vmatpush1.msra.mxu0 %v1822
  %1858 = vmatprep.subr.mxu0 0.0
  %1859 = vmatpush1.msra.mxu0 %v1821
  %1860 = vmatprep.subr.mxu0 0.0
  %1861 = vmatpush1.msra.mxu0 %v1820
  %1862 = vmatprep.subr.mxu0 0.0
  %1863 = vmatpush1.msra.mxu0 %v1819
  %1864 = vmatprep.subr.mxu0 0.0
  %1865 = vmatpush1.msra.mxu0 %v1818
  %1866 = vmatprep.subr.mxu0 0.0
  %1867 = vmatpush2.msra.mxu0 0.0
  %1868 = vmatprep.subr.mxu0 0.0
  %1869 = vmatpush2.msra.mxu0 0.0
  %1870 = vmatprep.subr.mxu0 0.0
  %1871 = vmatpush2.msra.mxu0 0.0
  %1872 = vmatprep.subr.mxu0 0.0
  %1873 = vmatpush2.msra.mxu0 0.0
  %1874 = vmatprep.subr.mxu0 0.0
  %1875 = vmatpush2.msra.mxu0 0.0
  %1876 = vmatprep.subr.mxu0 0.0
  %1877 = vmatpush2.msra.mxu0 0.0
  %1878 = vmatprep.subr.mxu0 0.0
  %1879 = vmatpush2.msra.mxu0 0.0
  %1880 = vmatprep.subr.mxu0 0.0
  %1881 = vmatpush2.msra.mxu0 0.0
  %1882 = vmatprep.subr.mxu0 0.0
  %1883 = vmatpush2.msra.mxu0 0.0
  %1884 = vmatprep.subr.mxu0 0.0
  %1885 = vmatpush2.msra.mxu0 0.0
  %1886 = vmatprep.subr.mxu0 0.0
  %1887 = vmatpush2.msra.mxu0 0.0
  %1888 = vmatprep.subr.mxu0 0.0
  %1889 = vmatpush2.msra.mxu0 0.0
  %1890 = vmatprep.subr.mxu0 0.0
  %1891 = vmatpush2.msra.mxu0 0.0
  %1892 = vmatprep.subr.mxu0 0.0
  %1893 = vmatpush2.msra.mxu0 0.0
  %1894 = vmatprep.subr.mxu0 0.0
  %1895 = vmatpush2.msra.mxu0 0.0
  %1896 = vmatprep.subr.mxu0 0.0
  %1897 = vmatpush2.msra.mxu0 0.0
  %1898 = vmatprep.mubr.f32.mxu0 0.0
  %1899 = vmatmul.mubr.f32.gmra.mxu0 %v1816
  %v1900 = vpop.f32.mrf.mxu0
  %v1901 = vadd.f32 0.0, %v1900
  %v1902 = vpop.f32.mrf.mxu0
  %1903 = vmatprep.mubr.f32.mxu0 0.0
  %1904 = vmatmul.mubr.f32.gmra.mxu0 %v1817
  %v1905 = vpop.f32.mrf.mxu0
  %v1906 = vadd.f32 0.0, %v1905
  %v1907 = vpop.f32.mrf.mxu0
  %1908 = vdwg.mxu0
  %v1909 = vadd.f32 %v1668, %v1901
  %v1910 = vadd.f32 %v1669, %v1906
  %v1911 = vld [vmem:[%s2 + $0x8] sm:$0x1]
  %v1912 = vlaneseq
  %v1913 = vshrl.u32 %v1912, 7
  %v1914 = vsub.s32 0, %v1913
  %v1915 = vrot.slane %v1911, %v1914
  %v1916 = vadd.f32 %v1909, %v1915
  %v1917 = vadd.f32 %v1910, %v1915
  %v1918 = vld [vmem:[%s2 + $0x9] sm:$0x1]
  %v1919 = vld [vmem:[%s2 + $0xa] sm:$0x1]
  %v1920 = vsel %vm59, %v1916, 0.0
  %1921 = vadd.xlane.f32.xlu0 %v1920
  %v1922 = vpop.xlane.xlu0 %1921
  %v1923 = vsel %vm59, %v1917, 0.0
  %1924 = vadd.xlane.f32.xlu0 %v1923
  %v1925 = vpop.xlane.xlu0 %1924
  %v1926 = vmul.f32 %v1922, %v66
  %v1927 = vmul.f32 %v1925, %v66
  %v1928 = vsub.f32 %v1916, %v1926
  %v1929 = vsub.f32 %v1917, %v1927
  %v1930 = vmul.f32 %v1928, %v1928
  %v1931 = vmul.f32 %v1929, %v1929
  %v1932 = vsel %vm59, %v1930, 0.0
  %1933 = vadd.xlane.f32.xlu0 %v1932
  %v1934 = vpop.xlane.xlu0 %1933
  %v1935 = vsel %vm59, %v1931, 0.0
  %1936 = vadd.xlane.f32.xlu0 %v1935
  %v1937 = vpop.xlane.xlu0 %1936
  %v1938 = vmul.f32 %v1934, %v66
  %v1939 = vmul.f32 %v1937, %v66
  %v1940 = vadd.f32 %v1938, 1e-05
  %v1941 = vadd.f32 %v1939, 1e-05
  %v1942 = vrsqrt.pop %v1940
  %v1943 = vrsqrt.pop %v1941
  %v1944 = vmul.f32 %v1928, %v1942
  %v1945 = vmul.f32 %v1929, %v1943
  %v1946 = vlaneseq
  %v1947 = vshrl.u32 %v1946, 7
  %v1948 = vsub.s32 0, %v1947
  %v1949 = vrot.slane %v1918, %v1948
  %v1950 = vmul.f32 %v1944, %v1949
  %v1951 = vmul.f32 %v1945, %v1949
  %v1952 = vlaneseq
  %v1953 = vshrl.u32 %v1952, 7
  %v1954 = vsub.s32 0, %v1953
  %v1955 = vrot.slane %v1919, %v1954
  %v1956 = vadd.f32 %v1950, %v1955
  %v1957 = vadd.f32 %v1951, %v1955
  %s1958 = scalar_lea.vmem %s4, 32
  %v1959 = vld [vmem:[%s1958] sm:$0xff]
  %v1960 = vld [vmem:[%s1958 + $0x8] sm:$0xff]
  %v1961 = vld [vmem:[%s1958 + $0x10] sm:$0xff]
  %v1962 = vld [vmem:[%s1958 + $0x18] sm:$0xff]
  %v1964 = vsel %vm59, %v1956, 0
  %v1967 = vsel %vm59, %v1957, 0
  %1969 = vmatprep.subr.mxu0 0.0
  %1970 = vmatpush1.msra.mxu0 0.0
  %1971 = vmatprep.subr.mxu0 0.0
  %1972 = vmatpush1.msra.mxu0 0.0
  %1973 = vmatprep.subr.mxu0 0.0
  %1974 = vmatpush1.msra.mxu0 0.0
  %1975 = vmatprep.subr.mxu0 0.0
  %1976 = vmatpush1.msra.mxu0 0.0
  %1977 = vmatprep.subr.mxu0 0.0
  %1978 = vmatpush1.msra.mxu0 0.0
  %1979 = vmatprep.subr.mxu0 0.0
  %1980 = vmatpush1.msra.mxu0 0.0
  %1981 = vmatprep.subr.mxu0 0.0
  %1982 = vmatpush1.msra.mxu0 0.0
  %1983 = vmatprep.subr.mxu0 0.0
  %1984 = vmatpush1.msra.mxu0 0.0
  %1985 = vmatprep.subr.mxu0 0.0
  %1986 = vmatpush1.msra.mxu0 0.0
  %1987 = vmatprep.subr.mxu0 0.0
  %1988 = vmatpush1.msra.mxu0 0.0
  %1989 = vmatprep.subr.mxu0 0.0
  %1990 = vmatpush1.msra.mxu0 0.0
  %1991 = vmatprep.subr.mxu0 0.0
  %1992 = vmatpush1.msra.mxu0 0.0
  %1993 = vmatprep.subr.mxu0 0.0
  %1994 = vmatpush1.msra.mxu0 %v1962
  %1995 = vmatprep.subr.mxu0 0.0
  %1996 = vmatpush1.msra.mxu0 %v1961
  %1997 = vmatprep.subr.mxu0 0.0
  %1998 = vmatpush1.msra.mxu0 %v1960
  %1999 = vmatprep.subr.mxu0 0.0
  %2000 = vmatpush1.msra.mxu0 %v1959
  %2001 = vmatprep.subr.mxu0 0.0
  %2002 = vmatpush2.msra.mxu0 0.0
  %2003 = vmatprep.subr.mxu0 0.0
  %2004 = vmatpush2.msra.mxu0 0.0
  %2005 = vmatprep.subr.mxu0 0.0
  %2006 = vmatpush2.msra.mxu0 0.0
  %2007 = vmatprep.subr.mxu0 0.0
  %2008 = vmatpush2.msra.mxu0 0.0
  %2009 = vmatprep.subr.mxu0 0.0
  %2010 = vmatpush2.msra.mxu0 0.0
  %2011 = vmatprep.subr.mxu0 0.0
  %2012 = vmatpush2.msra.mxu0 0.0
  %2013 = vmatprep.subr.mxu0 0.0
  %2014 = vmatpush2.msra.mxu0 0.0
  %2015 = vmatprep.subr.mxu0 0.0
  %2016 = vmatpush2.msra.mxu0 0.0
  %2017 = vmatprep.subr.mxu0 0.0
  %2018 = vmatpush2.msra.mxu0 0.0
  %2019 = vmatprep.subr.mxu0 0.0
  %2020 = vmatpush2.msra.mxu0 0.0
  %2021 = vmatprep.subr.mxu0 0.0
  %2022 = vmatpush2.msra.mxu0 0.0
  %2023 = vmatprep.subr.mxu0 0.0
  %2024 = vmatpush2.msra.mxu0 0.0
  %2025 = vmatprep.subr.mxu0 0.0
  %2026 = vmatpush2.msra.mxu0 0.0
  %2027 = vmatprep.subr.mxu0 0.0
  %2028 = vmatpush2.msra.mxu0 0.0
  %2029 = vmatprep.subr.mxu0 0.0
  %2030 = vmatpush2.msra.mxu0 0.0
  %2031 = vmatprep.subr.mxu0 0.0
  %2032 = vmatpush2.msra.mxu0 0.0
  %2033 = vmatprep.mubr.f32.mxu0 0.0
  %2034 = vmatmul.mubr.f32.gmra.mxu0 %v1964
  %v2035 = vpop.f32.mrf.mxu0
  %v2036 = vadd.f32 0.0, %v2035
  %v2037 = vpop.f32.mrf.mxu0
  %2038 = vmatprep.mubr.f32.mxu0 0.0
  %2039 = vmatmul.mubr.f32.gmra.mxu0 %v1967
  %v2040 = vpop.f32.mrf.mxu0
  %v2041 = vadd.f32 0.0, %v2040
  %v2042 = vpop.f32.mrf.mxu0
  %2043 = vdwg.mxu0
  %v2044 = vld [vmem:[%s2 + $0xd] sm:$0x1]
  %v2045 = vlaneseq
  %v2046 = vshrl.u32 %v2045, 7
  %v2047 = vsub.s32 0, %v2046
  %v2048 = vrot.slane %v2044, %v2047
  %v2049 = vadd.f32 %v2036, %v2048
  %v2050 = vadd.f32 %v2041, %v2048
  %v2051 = vld [vmem:[%s2 + $0xe] sm:$0x1]
  %v2052 = vlaneseq
  %v2053 = vshrl.u32 %v2052, 7
  %v2054 = vsub.s32 0, %v2053
  %v2055 = vrot.slane %v2051, %v2054
  %2057 = vrot.lane.b32.xlu0 %v2055, 32
  %v2058 = vpop.permute.xlu0 %2057
  %v2060 = vadd.f32 %v2036, %v2058
  %v2061 = vadd.f32 %v2041, %v2058
  %v2062 = vld [vmem:[%s2 + $0xf] sm:$0x1]
  %v2063 = vlaneseq
  %v2064 = vshrl.u32 %v2063, 7
  %v2065 = vsub.s32 0, %v2064
  %v2066 = vrot.slane %v2062, %v2065
  %2068 = vrot.lane.b32.xlu0 %v2066, 64
  %v2069 = vpop.permute.xlu0 %2068
  %v2071 = vadd.f32 %v2036, %v2069
  %v2072 = vadd.f32 %v2041, %v2069
  %2074 = vrot.lane.b32.xlu0 %v2060, 96
  %v2075 = vpop.permute.xlu0 %2074
  %v2077 = vsel %vm216, %v2049, 0
  %v2079 = vsel %vm216, %v2075, 0
  %2081 = vmatprep.subr.mxu0 0.0
  %2082 = vmatpush1.xpose.msra.mxu0 0.0
  %2083 = vmatprep.subr.mxu0 0.0
  %2084 = vmatpush1.xpose.msra.mxu0 0.0
  %2085 = vmatprep.subr.mxu0 0.0
  %2086 = vmatpush1.xpose.msra.mxu0 0.0
  %2087 = vmatprep.subr.mxu0 0.0
  %2088 = vmatpush1.xpose.msra.mxu0 0.0
  %2089 = vmatprep.subr.mxu0 0.0
  %2090 = vmatpush1.xpose.msra.mxu0 0.0
  %2091 = vmatprep.subr.mxu0 0.0
  %2092 = vmatpush1.xpose.msra.mxu0 0.0
  %2093 = vmatprep.subr.mxu0 0.0
  %2094 = vmatpush1.xpose.msra.mxu0 0.0
  %2095 = vmatprep.subr.mxu0 0.0
  %2096 = vmatpush1.xpose.msra.mxu0 0.0
  %2097 = vmatprep.subr.mxu0 0.0
  %2098 = vmatpush1.xpose.msra.mxu0 0.0
  %2099 = vmatprep.subr.mxu0 0.0
  %2100 = vmatpush1.xpose.msra.mxu0 0.0
  %2101 = vmatprep.subr.mxu0 0.0
  %2102 = vmatpush1.xpose.msra.mxu0 0.0
  %2103 = vmatprep.subr.mxu0 0.0
  %2104 = vmatpush1.xpose.msra.mxu0 0.0
  %2105 = vmatprep.subr.mxu0 0.0
  %2106 = vmatpush1.xpose.msra.mxu0 0.0
  %2107 = vmatprep.subr.mxu0 0.0
  %2108 = vmatpush1.xpose.msra.mxu0 0.0
  %2109 = vmatprep.subr.mxu0 0.0
  %2110 = vmatpush1.xpose.msra.mxu0 0.0
  %2111 = vmatprep.subr.mxu0 0.0
  %2112 = vmatpush1.xpose.msra.mxu0 %v2079
  %2113 = vmatprep.subr.mxu0 0.0
  %2114 = vmatpush2.xpose.msra.mxu0 0.0
  %2115 = vmatprep.subr.mxu0 0.0
  %2116 = vmatpush2.xpose.msra.mxu0 0.0
  %2117 = vmatprep.subr.mxu0 0.0
  %2118 = vmatpush2.xpose.msra.mxu0 0.0
  %2119 = vmatprep.subr.mxu0 0.0
  %2120 = vmatpush2.xpose.msra.mxu0 0.0
  %2121 = vmatprep.subr.mxu0 0.0
  %2122 = vmatpush2.xpose.msra.mxu0 0.0
  %2123 = vmatprep.subr.mxu0 0.0
  %2124 = vmatpush2.xpose.msra.mxu0 0.0
  %2125 = vmatprep.subr.mxu0 0.0
  %2126 = vmatpush2.xpose.msra.mxu0 0.0
  %2127 = vmatprep.subr.mxu0 0.0
  %2128 = vmatpush2.xpose.msra.mxu0 0.0
  %2129 = vmatprep.subr.mxu0 0.0
  %2130 = vmatpush2.xpose.msra.mxu0 0.0
  %2131 = vmatprep.subr.mxu0 0.0
  %2132 = vmatpush2.xpose.msra.mxu0 0.0
  %2133 = vmatprep.subr.mxu0 0.0
  %2134 = vmatpush2.xpose.msra.mxu0 0.0
  %2135 = vmatprep.subr.mxu0 0.0
  %2136 = vmatpush2.xpose.msra.mxu0 0.0
  %2137 = vmatprep.subr.mxu0 0.0
  %2138 = vmatpush2.xpose.msra.mxu0 0.0
  %2139 = vmatprep.subr.mxu0 0.0
  %2140 = vmatpush2.xpose.msra.mxu0 0.0
  %2141 = vmatprep.subr.mxu0 0.0
  %2142 = vmatpush2.xpose.msra.mxu0 0.0
  %2143 = vmatprep.subr.mxu0 0.0
  %2144 = vmatpush2.xpose.msra.mxu0 0.0
  %2145 = vmatprep.mubr.f32.mxu0 0.0
  %2146 = vmatmul.mubr.f32.gmra.mxu0 %v2077
  %v2147 = vpop.f32.mrf.mxu0
  %v2148 = vadd.f32 0.0, %v2147
  %v2149 = vpop.f32.mrf.mxu0
  %2150 = vdwg.mxu0
  %v2151 = vsel %vm47, %v2148, -1e+09
  %v2152 = vsel %vm216, %v2151, -inf
  %2153 = vmax.xlane.f32.xlu0 %v2152
  %v2154 = vpop.xlane.xlu0 %2153
  %v2155 = vsub.f32 %v2151, %v2154
  %v2156 = vmul.f32 %v2155, 1.442695
  %v2157 = vpow.pop %v2156
  %v2158 = vsel %vm216, %v2157, 0.0
  %2159 = vadd.xlane.f32.xlu0 %v2158
  %v2160 = vpop.xlane.xlu0 %2159
  %2162 = vrot.lane.b32.xlu0 %v2071, 64
  %v2163 = vpop.permute.xlu0 %2162
  %v2166 = vsel %vm216, %v2157, 0
  %2168 = vmatprep.subr.mxu0 0.0
  %2169 = vmatpush1.msra.mxu0 0.0
  %2170 = vmatprep.subr.mxu0 0.0
  %2171 = vmatpush1.msra.mxu0 0.0
  %2172 = vmatprep.subr.mxu0 0.0
  %2173 = vmatpush1.msra.mxu0 0.0
  %2174 = vmatprep.subr.mxu0 0.0
  %2175 = vmatpush1.msra.mxu0 0.0
  %2176 = vmatprep.subr.mxu0 0.0
  %2177 = vmatpush1.msra.mxu0 0.0
  %2178 = vmatprep.subr.mxu0 0.0
  %2179 = vmatpush1.msra.mxu0 0.0
  %2180 = vmatprep.subr.mxu0 0.0
  %2181 = vmatpush1.msra.mxu0 0.0
  %2182 = vmatprep.subr.mxu0 0.0
  %2183 = vmatpush1.msra.mxu0 0.0
  %2184 = vmatprep.subr.mxu0 0.0
  %2185 = vmatpush1.msra.mxu0 0.0
  %2186 = vmatprep.subr.mxu0 0.0
  %2187 = vmatpush1.msra.mxu0 0.0
  %2188 = vmatprep.subr.mxu0 0.0
  %2189 = vmatpush1.msra.mxu0 0.0
  %2190 = vmatprep.subr.mxu0 0.0
  %2191 = vmatpush1.msra.mxu0 0.0
  %2192 = vmatprep.subr.mxu0 0.0
  %2193 = vmatpush1.msra.mxu0 0.0
  %2194 = vmatprep.subr.mxu0 0.0
  %2195 = vmatpush1.msra.mxu0 0.0
  %2196 = vmatprep.subr.mxu0 0.0
  %2197 = vmatpush1.msra.mxu0 0.0
  %2198 = vmatprep.subr.mxu0 0.0
  %2199 = vmatpush1.msra.mxu0 %v2163
  %2200 = vmatprep.subr.mxu0 0.0
  %2201 = vmatpush2.msra.mxu0 0.0
  %2202 = vmatprep.subr.mxu0 0.0
  %2203 = vmatpush2.msra.mxu0 0.0
  %2204 = vmatprep.subr.mxu0 0.0
  %2205 = vmatpush2.msra.mxu0 0.0
  %2206 = vmatprep.subr.mxu0 0.0
  %2207 = vmatpush2.msra.mxu0 0.0
  %2208 = vmatprep.subr.mxu0 0.0
  %2209 = vmatpush2.msra.mxu0 0.0
  %2210 = vmatprep.subr.mxu0 0.0
  %2211 = vmatpush2.msra.mxu0 0.0
  %2212 = vmatprep.subr.mxu0 0.0
  %2213 = vmatpush2.msra.mxu0 0.0
  %2214 = vmatprep.subr.mxu0 0.0
  %2215 = vmatpush2.msra.mxu0 0.0
  %2216 = vmatprep.subr.mxu0 0.0
  %2217 = vmatpush2.msra.mxu0 0.0
  %2218 = vmatprep.subr.mxu0 0.0
  %2219 = vmatpush2.msra.mxu0 0.0
  %2220 = vmatprep.subr.mxu0 0.0
  %2221 = vmatpush2.msra.mxu0 0.0
  %2222 = vmatprep.subr.mxu0 0.0
  %2223 = vmatpush2.msra.mxu0 0.0
  %2224 = vmatprep.subr.mxu0 0.0
  %2225 = vmatpush2.msra.mxu0 0.0
  %2226 = vmatprep.subr.mxu0 0.0
  %2227 = vmatpush2.msra.mxu0 0.0
  %2228 = vmatprep.subr.mxu0 0.0
  %2229 = vmatpush2.msra.mxu0 0.0
  %2230 = vmatprep.subr.mxu0 0.0
  %2231 = vmatpush2.msra.mxu0 0.0
  %2232 = vmatprep.mubr.f32.mxu0 0.0
  %2233 = vmatmul.mubr.f32.gmra.mxu0 %v2166
  %v2234 = vpop.f32.mrf.mxu0
  %v2235 = vadd.f32 0.0, %v2234
  %v2236 = vpop.f32.mrf.mxu0
  %2237 = vdwg.mxu0
  %v2238 = vrcp.pop %v2160
  %v2239 = vmul.f32 %v2235, %v2238
  %2240 = vrot.lane.b32.xlu0 %v2049, 120
  %v2241 = vpop.permute.xlu0 %2240
  %2242 = vrot.lane.b32.xlu0 %v2060, 88
  %v2243 = vpop.permute.xlu0 %2242
  %v2244 = vsel %vm216, %v2241, 0
  %v2246 = vsel %vm216, %v2243, 0
  %2248 = vmatprep.subr.mxu0 0.0
  %2249 = vmatpush1.xpose.msra.mxu0 0.0
  %2250 = vmatprep.subr.mxu0 0.0
  %2251 = vmatpush1.xpose.msra.mxu0 0.0
  %2252 = vmatprep.subr.mxu0 0.0
  %2253 = vmatpush1.xpose.msra.mxu0 0.0
  %2254 = vmatprep.subr.mxu0 0.0
  %2255 = vmatpush1.xpose.msra.mxu0 0.0
  %2256 = vmatprep.subr.mxu0 0.0
  %2257 = vmatpush1.xpose.msra.mxu0 0.0
  %2258 = vmatprep.subr.mxu0 0.0
  %2259 = vmatpush1.xpose.msra.mxu0 0.0
  %2260 = vmatprep.subr.mxu0 0.0
  %2261 = vmatpush1.xpose.msra.mxu0 0.0
  %2262 = vmatprep.subr.mxu0 0.0
  %2263 = vmatpush1.xpose.msra.mxu0 0.0
  %2264 = vmatprep.subr.mxu0 0.0
  %2265 = vmatpush1.xpose.msra.mxu0 0.0
  %2266 = vmatprep.subr.mxu0 0.0
  %2267 = vmatpush1.xpose.msra.mxu0 0.0
  %2268 = vmatprep.subr.mxu0 0.0
  %2269 = vmatpush1.xpose.msra.mxu0 0.0
  %2270 = vmatprep.subr.mxu0 0.0
  %2271 = vmatpush1.xpose.msra.mxu0 0.0
  %2272 = vmatprep.subr.mxu0 0.0
  %2273 = vmatpush1.xpose.msra.mxu0 0.0
  %2274 = vmatprep.subr.mxu0 0.0
  %2275 = vmatpush1.xpose.msra.mxu0 0.0
  %2276 = vmatprep.subr.mxu0 0.0
  %2277 = vmatpush1.xpose.msra.mxu0 0.0
  %2278 = vmatprep.subr.mxu0 0.0
  %2279 = vmatpush1.xpose.msra.mxu0 %v2246
  %2280 = vmatprep.subr.mxu0 0.0
  %2281 = vmatpush2.xpose.msra.mxu0 0.0
  %2282 = vmatprep.subr.mxu0 0.0
  %2283 = vmatpush2.xpose.msra.mxu0 0.0
  %2284 = vmatprep.subr.mxu0 0.0
  %2285 = vmatpush2.xpose.msra.mxu0 0.0
  %2286 = vmatprep.subr.mxu0 0.0
  %2287 = vmatpush2.xpose.msra.mxu0 0.0
  %2288 = vmatprep.subr.mxu0 0.0
  %2289 = vmatpush2.xpose.msra.mxu0 0.0
  %2290 = vmatprep.subr.mxu0 0.0
  %2291 = vmatpush2.xpose.msra.mxu0 0.0
  %2292 = vmatprep.subr.mxu0 0.0
  %2293 = vmatpush2.xpose.msra.mxu0 0.0
  %2294 = vmatprep.subr.mxu0 0.0
  %2295 = vmatpush2.xpose.msra.mxu0 0.0
  %2296 = vmatprep.subr.mxu0 0.0
  %2297 = vmatpush2.xpose.msra.mxu0 0.0
  %2298 = vmatprep.subr.mxu0 0.0
  %2299 = vmatpush2.xpose.msra.mxu0 0.0
  %2300 = vmatprep.subr.mxu0 0.0
  %2301 = vmatpush2.xpose.msra.mxu0 0.0
  %2302 = vmatprep.subr.mxu0 0.0
  %2303 = vmatpush2.xpose.msra.mxu0 0.0
  %2304 = vmatprep.subr.mxu0 0.0
  %2305 = vmatpush2.xpose.msra.mxu0 0.0
  %2306 = vmatprep.subr.mxu0 0.0
  %2307 = vmatpush2.xpose.msra.mxu0 0.0
  %2308 = vmatprep.subr.mxu0 0.0
  %2309 = vmatpush2.xpose.msra.mxu0 0.0
  %2310 = vmatprep.subr.mxu0 0.0
  %2311 = vmatpush2.xpose.msra.mxu0 0.0
  %2312 = vmatprep.mubr.f32.mxu0 0.0
  %2313 = vmatmul.mubr.f32.gmra.mxu0 %v2244
  %v2314 = vpop.f32.mrf.mxu0
  %v2315 = vadd.f32 0.0, %v2314
  %v2316 = vpop.f32.mrf.mxu0
  %2317 = vdwg.mxu0
  %v2318 = vsel %vm47, %v2315, -1e+09
  %v2319 = vsel %vm216, %v2318, -inf
  %2320 = vmax.xlane.f32.xlu0 %v2319
  %v2321 = vpop.xlane.xlu0 %2320
  %v2322 = vsub.f32 %v2318, %v2321
  %v2323 = vmul.f32 %v2322, 1.442695
  %v2324 = vpow.pop %v2323
  %v2325 = vsel %vm216, %v2324, 0.0
  %2326 = vadd.xlane.f32.xlu0 %v2325
  %v2327 = vpop.xlane.xlu0 %2326
  %2328 = vrot.lane.b32.xlu0 %v2071, 56
  %v2329 = vpop.permute.xlu0 %2328
  %v2332 = vsel %vm216, %v2324, 0
  %2334 = vmatprep.subr.mxu0 0.0
  %2335 = vmatpush1.msra.mxu0 0.0
  %2336 = vmatprep.subr.mxu0 0.0
  %2337 = vmatpush1.msra.mxu0 0.0
  %2338 = vmatprep.subr.mxu0 0.0
  %2339 = vmatpush1.msra.mxu0 0.0
  %2340 = vmatprep.subr.mxu0 0.0
  %2341 = vmatpush1.msra.mxu0 0.0
  %2342 = vmatprep.subr.mxu0 0.0
  %2343 = vmatpush1.msra.mxu0 0.0
  %2344 = vmatprep.subr.mxu0 0.0
  %2345 = vmatpush1.msra.mxu0 0.0
  %2346 = vmatprep.subr.mxu0 0.0
  %2347 = vmatpush1.msra.mxu0 0.0
  %2348 = vmatprep.subr.mxu0 0.0
  %2349 = vmatpush1.msra.mxu0 0.0
  %2350 = vmatprep.subr.mxu0 0.0
  %2351 = vmatpush1.msra.mxu0 0.0
  %2352 = vmatprep.subr.mxu0 0.0
  %2353 = vmatpush1.msra.mxu0 0.0
  %2354 = vmatprep.subr.mxu0 0.0
  %2355 = vmatpush1.msra.mxu0 0.0
  %2356 = vmatprep.subr.mxu0 0.0
  %2357 = vmatpush1.msra.mxu0 0.0
  %2358 = vmatprep.subr.mxu0 0.0
  %2359 = vmatpush1.msra.mxu0 0.0
  %2360 = vmatprep.subr.mxu0 0.0
  %2361 = vmatpush1.msra.mxu0 0.0
  %2362 = vmatprep.subr.mxu0 0.0
  %2363 = vmatpush1.msra.mxu0 0.0
  %2364 = vmatprep.subr.mxu0 0.0
  %2365 = vmatpush1.msra.mxu0 %v2329
  %2366 = vmatprep.subr.mxu0 0.0
  %2367 = vmatpush2.msra.mxu0 0.0
  %2368 = vmatprep.subr.mxu0 0.0
  %2369 = vmatpush2.msra.mxu0 0.0
  %2370 = vmatprep.subr.mxu0 0.0
  %2371 = vmatpush2.msra.mxu0 0.0
  %2372 = vmatprep.subr.mxu0 0.0
  %2373 = vmatpush2.msra.mxu0 0.0
  %2374 = vmatprep.subr.mxu0 0.0
  %2375 = vmatpush2.msra.mxu0 0.0
  %2376 = vmatprep.subr.mxu0 0.0
  %2377 = vmatpush2.msra.mxu0 0.0
  %2378 = vmatprep.subr.mxu0 0.0
  %2379 = vmatpush2.msra.mxu0 0.0
  %2380 = vmatprep.subr.mxu0 0.0
  %2381 = vmatpush2.msra.mxu0 0.0
  %2382 = vmatprep.subr.mxu0 0.0
  %2383 = vmatpush2.msra.mxu0 0.0
  %2384 = vmatprep.subr.mxu0 0.0
  %2385 = vmatpush2.msra.mxu0 0.0
  %2386 = vmatprep.subr.mxu0 0.0
  %2387 = vmatpush2.msra.mxu0 0.0
  %2388 = vmatprep.subr.mxu0 0.0
  %2389 = vmatpush2.msra.mxu0 0.0
  %2390 = vmatprep.subr.mxu0 0.0
  %2391 = vmatpush2.msra.mxu0 0.0
  %2392 = vmatprep.subr.mxu0 0.0
  %2393 = vmatpush2.msra.mxu0 0.0
  %2394 = vmatprep.subr.mxu0 0.0
  %2395 = vmatpush2.msra.mxu0 0.0
  %2396 = vmatprep.subr.mxu0 0.0
  %2397 = vmatpush2.msra.mxu0 0.0
  %2398 = vmatprep.mubr.f32.mxu0 0.0
  %2399 = vmatmul.mubr.f32.gmra.mxu0 %v2332
  %v2400 = vpop.f32.mrf.mxu0
  %v2401 = vadd.f32 0.0, %v2400
  %v2402 = vpop.f32.mrf.mxu0
  %2403 = vdwg.mxu0
  %v2404 = vrcp.pop %v2327
  %v2405 = vmul.f32 %v2401, %v2404
  %2406 = vrot.lane.b32.xlu0 %v2049, 112
  %v2407 = vpop.permute.xlu0 %2406
  %2408 = vrot.lane.b32.xlu0 %v2060, 80
  %v2409 = vpop.permute.xlu0 %2408
  %v2410 = vsel %vm216, %v2407, 0
  %v2412 = vsel %vm216, %v2409, 0
  %2414 = vmatprep.subr.mxu0 0.0
  %2415 = vmatpush1.xpose.msra.mxu0 0.0
  %2416 = vmatprep.subr.mxu0 0.0
  %2417 = vmatpush1.xpose.msra.mxu0 0.0
  %2418 = vmatprep.subr.mxu0 0.0
  %2419 = vmatpush1.xpose.msra.mxu0 0.0
  %2420 = vmatprep.subr.mxu0 0.0
  %2421 = vmatpush1.xpose.msra.mxu0 0.0
  %2422 = vmatprep.subr.mxu0 0.0
  %2423 = vmatpush1.xpose.msra.mxu0 0.0
  %2424 = vmatprep.subr.mxu0 0.0
  %2425 = vmatpush1.xpose.msra.mxu0 0.0
  %2426 = vmatprep.subr.mxu0 0.0
  %2427 = vmatpush1.xpose.msra.mxu0 0.0
  %2428 = vmatprep.subr.mxu0 0.0
  %2429 = vmatpush1.xpose.msra.mxu0 0.0
  %2430 = vmatprep.subr.mxu0 0.0
  %2431 = vmatpush1.xpose.msra.mxu0 0.0
  %2432 = vmatprep.subr.mxu0 0.0
  %2433 = vmatpush1.xpose.msra.mxu0 0.0
  %2434 = vmatprep.subr.mxu0 0.0
  %2435 = vmatpush1.xpose.msra.mxu0 0.0
  %2436 = vmatprep.subr.mxu0 0.0
  %2437 = vmatpush1.xpose.msra.mxu0 0.0
  %2438 = vmatprep.subr.mxu0 0.0
  %2439 = vmatpush1.xpose.msra.mxu0 0.0
  %2440 = vmatprep.subr.mxu0 0.0
  %2441 = vmatpush1.xpose.msra.mxu0 0.0
  %2442 = vmatprep.subr.mxu0 0.0
  %2443 = vmatpush1.xpose.msra.mxu0 0.0
  %2444 = vmatprep.subr.mxu0 0.0
  %2445 = vmatpush1.xpose.msra.mxu0 %v2412
  %2446 = vmatprep.subr.mxu0 0.0
  %2447 = vmatpush2.xpose.msra.mxu0 0.0
  %2448 = vmatprep.subr.mxu0 0.0
  %2449 = vmatpush2.xpose.msra.mxu0 0.0
  %2450 = vmatprep.subr.mxu0 0.0
  %2451 = vmatpush2.xpose.msra.mxu0 0.0
  %2452 = vmatprep.subr.mxu0 0.0
  %2453 = vmatpush2.xpose.msra.mxu0 0.0
  %2454 = vmatprep.subr.mxu0 0.0
  %2455 = vmatpush2.xpose.msra.mxu0 0.0
  %2456 = vmatprep.subr.mxu0 0.0
  %2457 = vmatpush2.xpose.msra.mxu0 0.0
  %2458 = vmatprep.subr.mxu0 0.0
  %2459 = vmatpush2.xpose.msra.mxu0 0.0
  %2460 = vmatprep.subr.mxu0 0.0
  %2461 = vmatpush2.xpose.msra.mxu0 0.0
  %2462 = vmatprep.subr.mxu0 0.0
  %2463 = vmatpush2.xpose.msra.mxu0 0.0
  %2464 = vmatprep.subr.mxu0 0.0
  %2465 = vmatpush2.xpose.msra.mxu0 0.0
  %2466 = vmatprep.subr.mxu0 0.0
  %2467 = vmatpush2.xpose.msra.mxu0 0.0
  %2468 = vmatprep.subr.mxu0 0.0
  %2469 = vmatpush2.xpose.msra.mxu0 0.0
  %2470 = vmatprep.subr.mxu0 0.0
  %2471 = vmatpush2.xpose.msra.mxu0 0.0
  %2472 = vmatprep.subr.mxu0 0.0
  %2473 = vmatpush2.xpose.msra.mxu0 0.0
  %2474 = vmatprep.subr.mxu0 0.0
  %2475 = vmatpush2.xpose.msra.mxu0 0.0
  %2476 = vmatprep.subr.mxu0 0.0
  %2477 = vmatpush2.xpose.msra.mxu0 0.0
  %2478 = vmatprep.mubr.f32.mxu0 0.0
  %2479 = vmatmul.mubr.f32.gmra.mxu0 %v2410
  %v2480 = vpop.f32.mrf.mxu0
  %v2481 = vadd.f32 0.0, %v2480
  %v2482 = vpop.f32.mrf.mxu0
  %2483 = vdwg.mxu0
  %v2484 = vsel %vm47, %v2481, -1e+09
  %v2485 = vsel %vm216, %v2484, -inf
  %2486 = vmax.xlane.f32.xlu0 %v2485
  %v2487 = vpop.xlane.xlu0 %2486
  %v2488 = vsub.f32 %v2484, %v2487
  %v2489 = vmul.f32 %v2488, 1.442695
  %v2490 = vpow.pop %v2489
  %v2491 = vsel %vm216, %v2490, 0.0
  %2492 = vadd.xlane.f32.xlu0 %v2491
  %v2493 = vpop.xlane.xlu0 %2492
  %2494 = vrot.lane.b32.xlu0 %v2071, 48
  %v2495 = vpop.permute.xlu0 %2494
  %v2498 = vsel %vm216, %v2490, 0
  %2500 = vmatprep.subr.mxu0 0.0
  %2501 = vmatpush1.msra.mxu0 0.0
  %2502 = vmatprep.subr.mxu0 0.0
  %2503 = vmatpush1.msra.mxu0 0.0
  %2504 = vmatprep.subr.mxu0 0.0
  %2505 = vmatpush1.msra.mxu0 0.0
  %2506 = vmatprep.subr.mxu0 0.0
  %2507 = vmatpush1.msra.mxu0 0.0
  %2508 = vmatprep.subr.mxu0 0.0
  %2509 = vmatpush1.msra.mxu0 0.0
  %2510 = vmatprep.subr.mxu0 0.0
  %2511 = vmatpush1.msra.mxu0 0.0
  %2512 = vmatprep.subr.mxu0 0.0
  %2513 = vmatpush1.msra.mxu0 0.0
  %2514 = vmatprep.subr.mxu0 0.0
  %2515 = vmatpush1.msra.mxu0 0.0
  %2516 = vmatprep.subr.mxu0 0.0
  %2517 = vmatpush1.msra.mxu0 0.0
  %2518 = vmatprep.subr.mxu0 0.0
  %2519 = vmatpush1.msra.mxu0 0.0
  %2520 = vmatprep.subr.mxu0 0.0
  %2521 = vmatpush1.msra.mxu0 0.0
  %2522 = vmatprep.subr.mxu0 0.0
  %2523 = vmatpush1.msra.mxu0 0.0
  %2524 = vmatprep.subr.mxu0 0.0
  %2525 = vmatpush1.msra.mxu0 0.0
  %2526 = vmatprep.subr.mxu0 0.0
  %2527 = vmatpush1.msra.mxu0 0.0
  %2528 = vmatprep.subr.mxu0 0.0
  %2529 = vmatpush1.msra.mxu0 0.0
  %2530 = vmatprep.subr.mxu0 0.0
  %2531 = vmatpush1.msra.mxu0 %v2495
  %2532 = vmatprep.subr.mxu0 0.0
  %2533 = vmatpush2.msra.mxu0 0.0
  %2534 = vmatprep.subr.mxu0 0.0
  %2535 = vmatpush2.msra.mxu0 0.0
  %2536 = vmatprep.subr.mxu0 0.0
  %2537 = vmatpush2.msra.mxu0 0.0
  %2538 = vmatprep.subr.mxu0 0.0
  %2539 = vmatpush2.msra.mxu0 0.0
  %2540 = vmatprep.subr.mxu0 0.0
  %2541 = vmatpush2.msra.mxu0 0.0
  %2542 = vmatprep.subr.mxu0 0.0
  %2543 = vmatpush2.msra.mxu0 0.0
  %2544 = vmatprep.subr.mxu0 0.0
  %2545 = vmatpush2.msra.mxu0 0.0
  %2546 = vmatprep.subr.mxu0 0.0
  %2547 = vmatpush2.msra.mxu0 0.0
  %2548 = vmatprep.subr.mxu0 0.0
  %2549 = vmatpush2.msra.mxu0 0.0
  %2550 = vmatprep.subr.mxu0 0.0
  %2551 = vmatpush2.msra.mxu0 0.0
  %2552 = vmatprep.subr.mxu0 0.0
  %2553 = vmatpush2.msra.mxu0 0.0
  %2554 = vmatprep.subr.mxu0 0.0
  %2555 = vmatpush2.msra.mxu0 0.0
  %2556 = vmatprep.subr.mxu0 0.0
  %2557 = vmatpush2.msra.mxu0 0.0
  %2558 = vmatprep.subr.mxu0 0.0
  %2559 = vmatpush2.msra.mxu0 0.0
  %2560 = vmatprep.subr.mxu0 0.0
  %2561 = vmatpush2.msra.mxu0 0.0
  %2562 = vmatprep.subr.mxu0 0.0
  %2563 = vmatpush2.msra.mxu0 0.0
  %2564 = vmatprep.mubr.f32.mxu0 0.0
  %2565 = vmatmul.mubr.f32.gmra.mxu0 %v2498
  %v2566 = vpop.f32.mrf.mxu0
  %v2567 = vadd.f32 0.0, %v2566
  %v2568 = vpop.f32.mrf.mxu0
  %2569 = vdwg.mxu0
  %v2570 = vrcp.pop %v2493
  %v2571 = vmul.f32 %v2567, %v2570
  %2572 = vrot.lane.b32.xlu0 %v2049, 104
  %v2573 = vpop.permute.xlu0 %2572
  %2574 = vrot.lane.b32.xlu0 %v2060, 72
  %v2575 = vpop.permute.xlu0 %2574
  %v2576 = vsel %vm216, %v2573, 0
  %v2578 = vsel %vm216, %v2575, 0
  %2580 = vmatprep.subr.mxu0 0.0
  %2581 = vmatpush1.xpose.msra.mxu0 0.0
  %2582 = vmatprep.subr.mxu0 0.0
  %2583 = vmatpush1.xpose.msra.mxu0 0.0
  %2584 = vmatprep.subr.mxu0 0.0
  %2585 = vmatpush1.xpose.msra.mxu0 0.0
  %2586 = vmatprep.subr.mxu0 0.0
  %2587 = vmatpush1.xpose.msra.mxu0 0.0
  %2588 = vmatprep.subr.mxu0 0.0
  %2589 = vmatpush1.xpose.msra.mxu0 0.0
  %2590 = vmatprep.subr.mxu0 0.0
  %2591 = vmatpush1.xpose.msra.mxu0 0.0
  %2592 = vmatprep.subr.mxu0 0.0
  %2593 = vmatpush1.xpose.msra.mxu0 0.0
  %2594 = vmatprep.subr.mxu0 0.0
  %2595 = vmatpush1.xpose.msra.mxu0 0.0
  %2596 = vmatprep.subr.mxu0 0.0
  %2597 = vmatpush1.xpose.msra.mxu0 0.0
  %2598 = vmatprep.subr.mxu0 0.0
  %2599 = vmatpush1.xpose.msra.mxu0 0.0
  %2600 = vmatprep.subr.mxu0 0.0
  %2601 = vmatpush1.xpose.msra.mxu0 0.0
  %2602 = vmatprep.subr.mxu0 0.0
  %2603 = vmatpush1.xpose.msra.mxu0 0.0
  %2604 = vmatprep.subr.mxu0 0.0
  %2605 = vmatpush1.xpose.msra.mxu0 0.0
  %2606 = vmatprep.subr.mxu0 0.0
  %2607 = vmatpush1.xpose.msra.mxu0 0.0
  %2608 = vmatprep.subr.mxu0 0.0
  %2609 = vmatpush1.xpose.msra.mxu0 0.0
  %2610 = vmatprep.subr.mxu0 0.0
  %2611 = vmatpush1.xpose.msra.mxu0 %v2578
  %2612 = vmatprep.subr.mxu0 0.0
  %2613 = vmatpush2.xpose.msra.mxu0 0.0
  %2614 = vmatprep.subr.mxu0 0.0
  %2615 = vmatpush2.xpose.msra.mxu0 0.0
  %2616 = vmatprep.subr.mxu0 0.0
  %2617 = vmatpush2.xpose.msra.mxu0 0.0
  %2618 = vmatprep.subr.mxu0 0.0
  %2619 = vmatpush2.xpose.msra.mxu0 0.0
  %2620 = vmatprep.subr.mxu0 0.0
  %2621 = vmatpush2.xpose.msra.mxu0 0.0
  %2622 = vmatprep.subr.mxu0 0.0
  %2623 = vmatpush2.xpose.msra.mxu0 0.0
  %2624 = vmatprep.subr.mxu0 0.0
  %2625 = vmatpush2.xpose.msra.mxu0 0.0
  %2626 = vmatprep.subr.mxu0 0.0
  %2627 = vmatpush2.xpose.msra.mxu0 0.0
  %2628 = vmatprep.subr.mxu0 0.0
  %2629 = vmatpush2.xpose.msra.mxu0 0.0
  %2630 = vmatprep.subr.mxu0 0.0
  %2631 = vmatpush2.xpose.msra.mxu0 0.0
  %2632 = vmatprep.subr.mxu0 0.0
  %2633 = vmatpush2.xpose.msra.mxu0 0.0
  %2634 = vmatprep.subr.mxu0 0.0
  %2635 = vmatpush2.xpose.msra.mxu0 0.0
  %2636 = vmatprep.subr.mxu0 0.0
  %2637 = vmatpush2.xpose.msra.mxu0 0.0
  %2638 = vmatprep.subr.mxu0 0.0
  %2639 = vmatpush2.xpose.msra.mxu0 0.0
  %2640 = vmatprep.subr.mxu0 0.0
  %2641 = vmatpush2.xpose.msra.mxu0 0.0
  %2642 = vmatprep.subr.mxu0 0.0
  %2643 = vmatpush2.xpose.msra.mxu0 0.0
  %2644 = vmatprep.mubr.f32.mxu0 0.0
  %2645 = vmatmul.mubr.f32.gmra.mxu0 %v2576
  %v2646 = vpop.f32.mrf.mxu0
  %v2647 = vadd.f32 0.0, %v2646
  %v2648 = vpop.f32.mrf.mxu0
  %2649 = vdwg.mxu0
  %v2650 = vsel %vm47, %v2647, -1e+09
  %v2651 = vsel %vm216, %v2650, -inf
  %2652 = vmax.xlane.f32.xlu0 %v2651
  %v2653 = vpop.xlane.xlu0 %2652
  %v2654 = vsub.f32 %v2650, %v2653
  %v2655 = vmul.f32 %v2654, 1.442695
  %v2656 = vpow.pop %v2655
  %v2657 = vsel %vm216, %v2656, 0.0
  %2658 = vadd.xlane.f32.xlu0 %v2657
  %v2659 = vpop.xlane.xlu0 %2658
  %2660 = vrot.lane.b32.xlu0 %v2071, 40
  %v2661 = vpop.permute.xlu0 %2660
  %v2664 = vsel %vm216, %v2656, 0
  %2666 = vmatprep.subr.mxu0 0.0
  %2667 = vmatpush1.msra.mxu0 0.0
  %2668 = vmatprep.subr.mxu0 0.0
  %2669 = vmatpush1.msra.mxu0 0.0
  %2670 = vmatprep.subr.mxu0 0.0
  %2671 = vmatpush1.msra.mxu0 0.0
  %2672 = vmatprep.subr.mxu0 0.0
  %2673 = vmatpush1.msra.mxu0 0.0
  %2674 = vmatprep.subr.mxu0 0.0
  %2675 = vmatpush1.msra.mxu0 0.0
  %2676 = vmatprep.subr.mxu0 0.0
  %2677 = vmatpush1.msra.mxu0 0.0
  %2678 = vmatprep.subr.mxu0 0.0
  %2679 = vmatpush1.msra.mxu0 0.0
  %2680 = vmatprep.subr.mxu0 0.0
  %2681 = vmatpush1.msra.mxu0 0.0
  %2682 = vmatprep.subr.mxu0 0.0
  %2683 = vmatpush1.msra.mxu0 0.0
  %2684 = vmatprep.subr.mxu0 0.0
  %2685 = vmatpush1.msra.mxu0 0.0
  %2686 = vmatprep.subr.mxu0 0.0
  %2687 = vmatpush1.msra.mxu0 0.0
  %2688 = vmatprep.subr.mxu0 0.0
  %2689 = vmatpush1.msra.mxu0 0.0
  %2690 = vmatprep.subr.mxu0 0.0
  %2691 = vmatpush1.msra.mxu0 0.0
  %2692 = vmatprep.subr.mxu0 0.0
  %2693 = vmatpush1.msra.mxu0 0.0
  %2694 = vmatprep.subr.mxu0 0.0
  %2695 = vmatpush1.msra.mxu0 0.0
  %2696 = vmatprep.subr.mxu0 0.0
  %2697 = vmatpush1.msra.mxu0 %v2661
  %2698 = vmatprep.subr.mxu0 0.0
  %2699 = vmatpush2.msra.mxu0 0.0
  %2700 = vmatprep.subr.mxu0 0.0
  %2701 = vmatpush2.msra.mxu0 0.0
  %2702 = vmatprep.subr.mxu0 0.0
  %2703 = vmatpush2.msra.mxu0 0.0
  %2704 = vmatprep.subr.mxu0 0.0
  %2705 = vmatpush2.msra.mxu0 0.0
  %2706 = vmatprep.subr.mxu0 0.0
  %2707 = vmatpush2.msra.mxu0 0.0
  %2708 = vmatprep.subr.mxu0 0.0
  %2709 = vmatpush2.msra.mxu0 0.0
  %2710 = vmatprep.subr.mxu0 0.0
  %2711 = vmatpush2.msra.mxu0 0.0
  %2712 = vmatprep.subr.mxu0 0.0
  %2713 = vmatpush2.msra.mxu0 0.0
  %2714 = vmatprep.subr.mxu0 0.0
  %2715 = vmatpush2.msra.mxu0 0.0
  %2716 = vmatprep.subr.mxu0 0.0
  %2717 = vmatpush2.msra.mxu0 0.0
  %2718 = vmatprep.subr.mxu0 0.0
  %2719 = vmatpush2.msra.mxu0 0.0
  %2720 = vmatprep.subr.mxu0 0.0
  %2721 = vmatpush2.msra.mxu0 0.0
  %2722 = vmatprep.subr.mxu0 0.0
  %2723 = vmatpush2.msra.mxu0 0.0
  %2724 = vmatprep.subr.mxu0 0.0
  %2725 = vmatpush2.msra.mxu0 0.0
  %2726 = vmatprep.subr.mxu0 0.0
  %2727 = vmatpush2.msra.mxu0 0.0
  %2728 = vmatprep.subr.mxu0 0.0
  %2729 = vmatpush2.msra.mxu0 0.0
  %2730 = vmatprep.mubr.f32.mxu0 0.0
  %2731 = vmatmul.mubr.f32.gmra.mxu0 %v2664
  %v2732 = vpop.f32.mrf.mxu0
  %v2733 = vadd.f32 0.0, %v2732
  %v2734 = vpop.f32.mrf.mxu0
  %2735 = vdwg.mxu0
  %v2736 = vrcp.pop %v2659
  %v2737 = vmul.f32 %v2733, %v2736
  %2739 = vrot.lane.b32.xlu0 %v2405, 8
  %v2740 = vpop.permute.xlu0 %2739
  %2743 = vrot.lane.b32.xlu0 %v2571, 16
  %v2744 = vpop.permute.xlu0 %2743
  %2747 = vrot.lane.b32.xlu0 %v2737, 24
  %v2748 = vpop.permute.xlu0 %2747
  %v2750 = vsel %vm216, %v2239, %v2740
  %v2751 = vsel %vm892, %v2750, %v2744
  %v2752 = vsel %vm894, %v2751, %v2748
  %2754 = vrot.lane.b32.xlu0 %v2061, 96
  %v2755 = vpop.permute.xlu0 %2754
  %v2757 = vsel %vm216, %v2050, 0
  %v2759 = vsel %vm216, %v2755, 0
  %2761 = vmatprep.subr.mxu0 0.0
  %2762 = vmatpush1.xpose.msra.mxu0 0.0
  %2763 = vmatprep.subr.mxu0 0.0
  %2764 = vmatpush1.xpose.msra.mxu0 0.0
  %2765 = vmatprep.subr.mxu0 0.0
  %2766 = vmatpush1.xpose.msra.mxu0 0.0
  %2767 = vmatprep.subr.mxu0 0.0
  %2768 = vmatpush1.xpose.msra.mxu0 0.0
  %2769 = vmatprep.subr.mxu0 0.0
  %2770 = vmatpush1.xpose.msra.mxu0 0.0
  %2771 = vmatprep.subr.mxu0 0.0
  %2772 = vmatpush1.xpose.msra.mxu0 0.0
  %2773 = vmatprep.subr.mxu0 0.0
  %2774 = vmatpush1.xpose.msra.mxu0 0.0
  %2775 = vmatprep.subr.mxu0 0.0
  %2776 = vmatpush1.xpose.msra.mxu0 0.0
  %2777 = vmatprep.subr.mxu0 0.0
  %2778 = vmatpush1.xpose.msra.mxu0 0.0
  %2779 = vmatprep.subr.mxu0 0.0
  %2780 = vmatpush1.xpose.msra.mxu0 0.0
  %2781 = vmatprep.subr.mxu0 0.0
  %2782 = vmatpush1.xpose.msra.mxu0 0.0
  %2783 = vmatprep.subr.mxu0 0.0
  %2784 = vmatpush1.xpose.msra.mxu0 0.0
  %2785 = vmatprep.subr.mxu0 0.0
  %2786 = vmatpush1.xpose.msra.mxu0 0.0
  %2787 = vmatprep.subr.mxu0 0.0
  %2788 = vmatpush1.xpose.msra.mxu0 0.0
  %2789 = vmatprep.subr.mxu0 0.0
  %2790 = vmatpush1.xpose.msra.mxu0 0.0
  %2791 = vmatprep.subr.mxu0 0.0
  %2792 = vmatpush1.xpose.msra.mxu0 %v2759
  %2793 = vmatprep.subr.mxu0 0.0
  %2794 = vmatpush2.xpose.msra.mxu0 0.0
  %2795 = vmatprep.subr.mxu0 0.0
  %2796 = vmatpush2.xpose.msra.mxu0 0.0
  %2797 = vmatprep.subr.mxu0 0.0
  %2798 = vmatpush2.xpose.msra.mxu0 0.0
  %2799 = vmatprep.subr.mxu0 0.0
  %2800 = vmatpush2.xpose.msra.mxu0 0.0
  %2801 = vmatprep.subr.mxu0 0.0
  %2802 = vmatpush2.xpose.msra.mxu0 0.0
  %2803 = vmatprep.subr.mxu0 0.0
  %2804 = vmatpush2.xpose.msra.mxu0 0.0
  %2805 = vmatprep.subr.mxu0 0.0
  %2806 = vmatpush2.xpose.msra.mxu0 0.0
  %2807 = vmatprep.subr.mxu0 0.0
  %2808 = vmatpush2.xpose.msra.mxu0 0.0
  %2809 = vmatprep.subr.mxu0 0.0
  %2810 = vmatpush2.xpose.msra.mxu0 0.0
  %2811 = vmatprep.subr.mxu0 0.0
  %2812 = vmatpush2.xpose.msra.mxu0 0.0
  %2813 = vmatprep.subr.mxu0 0.0
  %2814 = vmatpush2.xpose.msra.mxu0 0.0
  %2815 = vmatprep.subr.mxu0 0.0
  %2816 = vmatpush2.xpose.msra.mxu0 0.0
  %2817 = vmatprep.subr.mxu0 0.0
  %2818 = vmatpush2.xpose.msra.mxu0 0.0
  %2819 = vmatprep.subr.mxu0 0.0
  %2820 = vmatpush2.xpose.msra.mxu0 0.0
  %2821 = vmatprep.subr.mxu0 0.0
  %2822 = vmatpush2.xpose.msra.mxu0 0.0
  %2823 = vmatprep.subr.mxu0 0.0
  %2824 = vmatpush2.xpose.msra.mxu0 0.0
  %2825 = vmatprep.mubr.f32.mxu0 0.0
  %2826 = vmatmul.mubr.f32.gmra.mxu0 %v2757
  %v2827 = vpop.f32.mrf.mxu0
  %v2828 = vadd.f32 0.0, %v2827
  %v2829 = vpop.f32.mrf.mxu0
  %2830 = vdwg.mxu0
  %v2831 = vsel %vm56, %v2828, -1e+09
  %v2832 = vsel %vm216, %v2831, -inf
  %2833 = vmax.xlane.f32.xlu0 %v2832
  %v2834 = vpop.xlane.xlu0 %2833
  %v2835 = vsub.f32 %v2831, %v2834
  %v2836 = vmul.f32 %v2835, 1.442695
  %v2837 = vpow.pop %v2836
  %v2838 = vsel %vm216, %v2837, 0.0
  %2839 = vadd.xlane.f32.xlu0 %v2838
  %v2840 = vpop.xlane.xlu0 %2839
  %2842 = vrot.lane.b32.xlu0 %v2072, 64
  %v2843 = vpop.permute.xlu0 %2842
  %v2846 = vsel %vm216, %v2837, 0
  %2848 = vmatprep.subr.mxu0 0.0
  %2849 = vmatpush1.msra.mxu0 0.0
  %2850 = vmatprep.subr.mxu0 0.0
  %2851 = vmatpush1.msra.mxu0 0.0
  %2852 = vmatprep.subr.mxu0 0.0
  %2853 = vmatpush1.msra.mxu0 0.0
  %2854 = vmatprep.subr.mxu0 0.0
  %2855 = vmatpush1.msra.mxu0 0.0
  %2856 = vmatprep.subr.mxu0 0.0
  %2857 = vmatpush1.msra.mxu0 0.0
  %2858 = vmatprep.subr.mxu0 0.0
  %2859 = vmatpush1.msra.mxu0 0.0
  %2860 = vmatprep.subr.mxu0 0.0
  %2861 = vmatpush1.msra.mxu0 0.0
  %2862 = vmatprep.subr.mxu0 0.0
  %2863 = vmatpush1.msra.mxu0 0.0
  %2864 = vmatprep.subr.mxu0 0.0
  %2865 = vmatpush1.msra.mxu0 0.0
  %2866 = vmatprep.subr.mxu0 0.0
  %2867 = vmatpush1.msra.mxu0 0.0
  %2868 = vmatprep.subr.mxu0 0.0
  %2869 = vmatpush1.msra.mxu0 0.0
  %2870 = vmatprep.subr.mxu0 0.0
  %2871 = vmatpush1.msra.mxu0 0.0
  %2872 = vmatprep.subr.mxu0 0.0
  %2873 = vmatpush1.msra.mxu0 0.0
  %2874 = vmatprep.subr.mxu0 0.0
  %2875 = vmatpush1.msra.mxu0 0.0
  %2876 = vmatprep.subr.mxu0 0.0
  %2877 = vmatpush1.msra.mxu0 0.0
  %2878 = vmatprep.subr.mxu0 0.0
  %2879 = vmatpush1.msra.mxu0 %v2843
  %2880 = vmatprep.subr.mxu0 0.0
  %2881 = vmatpush2.msra.mxu0 0.0
  %2882 = vmatprep.subr.mxu0 0.0
  %2883 = vmatpush2.msra.mxu0 0.0
  %2884 = vmatprep.subr.mxu0 0.0
  %2885 = vmatpush2.msra.mxu0 0.0
  %2886 = vmatprep.subr.mxu0 0.0
  %2887 = vmatpush2.msra.mxu0 0.0
  %2888 = vmatprep.subr.mxu0 0.0
  %2889 = vmatpush2.msra.mxu0 0.0
  %2890 = vmatprep.subr.mxu0 0.0
  %2891 = vmatpush2.msra.mxu0 0.0
  %2892 = vmatprep.subr.mxu0 0.0
  %2893 = vmatpush2.msra.mxu0 0.0
  %2894 = vmatprep.subr.mxu0 0.0
  %2895 = vmatpush2.msra.mxu0 0.0
  %2896 = vmatprep.subr.mxu0 0.0
  %2897 = vmatpush2.msra.mxu0 0.0
  %2898 = vmatprep.subr.mxu0 0.0
  %2899 = vmatpush2.msra.mxu0 0.0
  %2900 = vmatprep.subr.mxu0 0.0
  %2901 = vmatpush2.msra.mxu0 0.0
  %2902 = vmatprep.subr.mxu0 0.0
  %2903 = vmatpush2.msra.mxu0 0.0
  %2904 = vmatprep.subr.mxu0 0.0
  %2905 = vmatpush2.msra.mxu0 0.0
  %2906 = vmatprep.subr.mxu0 0.0
  %2907 = vmatpush2.msra.mxu0 0.0
  %2908 = vmatprep.subr.mxu0 0.0
  %2909 = vmatpush2.msra.mxu0 0.0
  %2910 = vmatprep.subr.mxu0 0.0
  %2911 = vmatpush2.msra.mxu0 0.0
  %2912 = vmatprep.mubr.f32.mxu0 0.0
  %2913 = vmatmul.mubr.f32.gmra.mxu0 %v2846
  %v2914 = vpop.f32.mrf.mxu0
  %v2915 = vadd.f32 0.0, %v2914
  %v2916 = vpop.f32.mrf.mxu0
  %2917 = vdwg.mxu0
  %v2918 = vrcp.pop %v2840
  %v2919 = vmul.f32 %v2915, %v2918
  %2920 = vrot.lane.b32.xlu0 %v2050, 120
  %v2921 = vpop.permute.xlu0 %2920
  %2922 = vrot.lane.b32.xlu0 %v2061, 88
  %v2923 = vpop.permute.xlu0 %2922
  %v2924 = vsel %vm216, %v2921, 0
  %v2926 = vsel %vm216, %v2923, 0
  %2928 = vmatprep.subr.mxu0 0.0
  %2929 = vmatpush1.xpose.msra.mxu0 0.0
  %2930 = vmatprep.subr.mxu0 0.0
  %2931 = vmatpush1.xpose.msra.mxu0 0.0
  %2932 = vmatprep.subr.mxu0 0.0
  %2933 = vmatpush1.xpose.msra.mxu0 0.0
  %2934 = vmatprep.subr.mxu0 0.0
  %2935 = vmatpush1.xpose.msra.mxu0 0.0
  %2936 = vmatprep.subr.mxu0 0.0
  %2937 = vmatpush1.xpose.msra.mxu0 0.0
  %2938 = vmatprep.subr.mxu0 0.0
  %2939 = vmatpush1.xpose.msra.mxu0 0.0
  %2940 = vmatprep.subr.mxu0 0.0
  %2941 = vmatpush1.xpose.msra.mxu0 0.0
  %2942 = vmatprep.subr.mxu0 0.0
  %2943 = vmatpush1.xpose.msra.mxu0 0.0
  %2944 = vmatprep.subr.mxu0 0.0
  %2945 = vmatpush1.xpose.msra.mxu0 0.0
  %2946 = vmatprep.subr.mxu0 0.0
  %2947 = vmatpush1.xpose.msra.mxu0 0.0
  %2948 = vmatprep.subr.mxu0 0.0
  %2949 = vmatpush1.xpose.msra.mxu0 0.0
  %2950 = vmatprep.subr.mxu0 0.0
  %2951 = vmatpush1.xpose.msra.mxu0 0.0
  %2952 = vmatprep.subr.mxu0 0.0
  %2953 = vmatpush1.xpose.msra.mxu0 0.0
  %2954 = vmatprep.subr.mxu0 0.0
  %2955 = vmatpush1.xpose.msra.mxu0 0.0
  %2956 = vmatprep.subr.mxu0 0.0
  %2957 = vmatpush1.xpose.msra.mxu0 0.0
  %2958 = vmatprep.subr.mxu0 0.0
  %2959 = vmatpush1.xpose.msra.mxu0 %v2926
  %2960 = vmatprep.subr.mxu0 0.0
  %2961 = vmatpush2.xpose.msra.mxu0 0.0
  %2962 = vmatprep.subr.mxu0 0.0
  %2963 = vmatpush2.xpose.msra.mxu0 0.0
  %2964 = vmatprep.subr.mxu0 0.0
  %2965 = vmatpush2.xpose.msra.mxu0 0.0
  %2966 = vmatprep.subr.mxu0 0.0
  %2967 = vmatpush2.xpose.msra.mxu0 0.0
  %2968 = vmatprep.subr.mxu0 0.0
  %2969 = vmatpush2.xpose.msra.mxu0 0.0
  %2970 = vmatprep.subr.mxu0 0.0
  %2971 = vmatpush2.xpose.msra.mxu0 0.0
  %2972 = vmatprep.subr.mxu0 0.0
  %2973 = vmatpush2.xpose.msra.mxu0 0.0
  %2974 = vmatprep.subr.mxu0 0.0
  %2975 = vmatpush2.xpose.msra.mxu0 0.0
  %2976 = vmatprep.subr.mxu0 0.0
  %2977 = vmatpush2.xpose.msra.mxu0 0.0
  %2978 = vmatprep.subr.mxu0 0.0
  %2979 = vmatpush2.xpose.msra.mxu0 0.0
  %2980 = vmatprep.subr.mxu0 0.0
  %2981 = vmatpush2.xpose.msra.mxu0 0.0
  %2982 = vmatprep.subr.mxu0 0.0
  %2983 = vmatpush2.xpose.msra.mxu0 0.0
  %2984 = vmatprep.subr.mxu0 0.0
  %2985 = vmatpush2.xpose.msra.mxu0 0.0
  %2986 = vmatprep.subr.mxu0 0.0
  %2987 = vmatpush2.xpose.msra.mxu0 0.0
  %2988 = vmatprep.subr.mxu0 0.0
  %2989 = vmatpush2.xpose.msra.mxu0 0.0
  %2990 = vmatprep.subr.mxu0 0.0
  %2991 = vmatpush2.xpose.msra.mxu0 0.0
  %2992 = vmatprep.mubr.f32.mxu0 0.0
  %2993 = vmatmul.mubr.f32.gmra.mxu0 %v2924
  %v2994 = vpop.f32.mrf.mxu0
  %v2995 = vadd.f32 0.0, %v2994
  %v2996 = vpop.f32.mrf.mxu0
  %2997 = vdwg.mxu0
  %v2998 = vsel %vm56, %v2995, -1e+09
  %v2999 = vsel %vm216, %v2998, -inf
  %3000 = vmax.xlane.f32.xlu0 %v2999
  %v3001 = vpop.xlane.xlu0 %3000
  %v3002 = vsub.f32 %v2998, %v3001
  %v3003 = vmul.f32 %v3002, 1.442695
  %v3004 = vpow.pop %v3003
  %v3005 = vsel %vm216, %v3004, 0.0
  %3006 = vadd.xlane.f32.xlu0 %v3005
  %v3007 = vpop.xlane.xlu0 %3006
  %3008 = vrot.lane.b32.xlu0 %v2072, 56
  %v3009 = vpop.permute.xlu0 %3008
  %v3012 = vsel %vm216, %v3004, 0
  %3014 = vmatprep.subr.mxu0 0.0
  %3015 = vmatpush1.msra.mxu0 0.0
  %3016 = vmatprep.subr.mxu0 0.0
  %3017 = vmatpush1.msra.mxu0 0.0
  %3018 = vmatprep.subr.mxu0 0.0
  %3019 = vmatpush1.msra.mxu0 0.0
  %3020 = vmatprep.subr.mxu0 0.0
  %3021 = vmatpush1.msra.mxu0 0.0
  %3022 = vmatprep.subr.mxu0 0.0
  %3023 = vmatpush1.msra.mxu0 0.0
  %3024 = vmatprep.subr.mxu0 0.0
  %3025 = vmatpush1.msra.mxu0 0.0
  %3026 = vmatprep.subr.mxu0 0.0
  %3027 = vmatpush1.msra.mxu0 0.0
  %3028 = vmatprep.subr.mxu0 0.0
  %3029 = vmatpush1.msra.mxu0 0.0
  %3030 = vmatprep.subr.mxu0 0.0
  %3031 = vmatpush1.msra.mxu0 0.0
  %3032 = vmatprep.subr.mxu0 0.0
  %3033 = vmatpush1.msra.mxu0 0.0
  %3034 = vmatprep.subr.mxu0 0.0
  %3035 = vmatpush1.msra.mxu0 0.0
  %3036 = vmatprep.subr.mxu0 0.0
  %3037 = vmatpush1.msra.mxu0 0.0
  %3038 = vmatprep.subr.mxu0 0.0
  %3039 = vmatpush1.msra.mxu0 0.0
  %3040 = vmatprep.subr.mxu0 0.0
  %3041 = vmatpush1.msra.mxu0 0.0
  %3042 = vmatprep.subr.mxu0 0.0
  %3043 = vmatpush1.msra.mxu0 0.0
  %3044 = vmatprep.subr.mxu0 0.0
  %3045 = vmatpush1.msra.mxu0 %v3009
  %3046 = vmatprep.subr.mxu0 0.0
  %3047 = vmatpush2.msra.mxu0 0.0
  %3048 = vmatprep.subr.mxu0 0.0
  %3049 = vmatpush2.msra.mxu0 0.0
  %3050 = vmatprep.subr.mxu0 0.0
  %3051 = vmatpush2.msra.mxu0 0.0
  %3052 = vmatprep.subr.mxu0 0.0
  %3053 = vmatpush2.msra.mxu0 0.0
  %3054 = vmatprep.subr.mxu0 0.0
  %3055 = vmatpush2.msra.mxu0 0.0
  %3056 = vmatprep.subr.mxu0 0.0
  %3057 = vmatpush2.msra.mxu0 0.0
  %3058 = vmatprep.subr.mxu0 0.0
  %3059 = vmatpush2.msra.mxu0 0.0
  %3060 = vmatprep.subr.mxu0 0.0
  %3061 = vmatpush2.msra.mxu0 0.0
  %3062 = vmatprep.subr.mxu0 0.0
  %3063 = vmatpush2.msra.mxu0 0.0
  %3064 = vmatprep.subr.mxu0 0.0
  %3065 = vmatpush2.msra.mxu0 0.0
  %3066 = vmatprep.subr.mxu0 0.0
  %3067 = vmatpush2.msra.mxu0 0.0
  %3068 = vmatprep.subr.mxu0 0.0
  %3069 = vmatpush2.msra.mxu0 0.0
  %3070 = vmatprep.subr.mxu0 0.0
  %3071 = vmatpush2.msra.mxu0 0.0
  %3072 = vmatprep.subr.mxu0 0.0
  %3073 = vmatpush2.msra.mxu0 0.0
  %3074 = vmatprep.subr.mxu0 0.0
  %3075 = vmatpush2.msra.mxu0 0.0
  %3076 = vmatprep.subr.mxu0 0.0
  %3077 = vmatpush2.msra.mxu0 0.0
  %3078 = vmatprep.mubr.f32.mxu0 0.0
  %3079 = vmatmul.mubr.f32.gmra.mxu0 %v3012
  %v3080 = vpop.f32.mrf.mxu0
  %v3081 = vadd.f32 0.0, %v3080
  %v3082 = vpop.f32.mrf.mxu0
  %3083 = vdwg.mxu0
  %v3084 = vrcp.pop %v3007
  %v3085 = vmul.f32 %v3081, %v3084
  %3086 = vrot.lane.b32.xlu0 %v2050, 112
  %v3087 = vpop.permute.xlu0 %3086
  %3088 = vrot.lane.b32.xlu0 %v2061, 80
  %v3089 = vpop.permute.xlu0 %3088
  %v3090 = vsel %vm216, %v3087, 0
  %v3092 = vsel %vm216, %v3089, 0
  %3094 = vmatprep.subr.mxu0 0.0
  %3095 = vmatpush1.xpose.msra.mxu0 0.0
  %3096 = vmatprep.subr.mxu0 0.0
  %3097 = vmatpush1.xpose.msra.mxu0 0.0
  %3098 = vmatprep.subr.mxu0 0.0
  %3099 = vmatpush1.xpose.msra.mxu0 0.0
  %3100 = vmatprep.subr.mxu0 0.0
  %3101 = vmatpush1.xpose.msra.mxu0 0.0
  %3102 = vmatprep.subr.mxu0 0.0
  %3103 = vmatpush1.xpose.msra.mxu0 0.0
  %3104 = vmatprep.subr.mxu0 0.0
  %3105 = vmatpush1.xpose.msra.mxu0 0.0
  %3106 = vmatprep.subr.mxu0 0.0
  %3107 = vmatpush1.xpose.msra.mxu0 0.0
  %3108 = vmatprep.subr.mxu0 0.0
  %3109 = vmatpush1.xpose.msra.mxu0 0.0
  %3110 = vmatprep.subr.mxu0 0.0
  %3111 = vmatpush1.xpose.msra.mxu0 0.0
  %3112 = vmatprep.subr.mxu0 0.0
  %3113 = vmatpush1.xpose.msra.mxu0 0.0
  %3114 = vmatprep.subr.mxu0 0.0
  %3115 = vmatpush1.xpose.msra.mxu0 0.0
  %3116 = vmatprep.subr.mxu0 0.0
  %3117 = vmatpush1.xpose.msra.mxu0 0.0
  %3118 = vmatprep.subr.mxu0 0.0
  %3119 = vmatpush1.xpose.msra.mxu0 0.0
  %3120 = vmatprep.subr.mxu0 0.0
  %3121 = vmatpush1.xpose.msra.mxu0 0.0
  %3122 = vmatprep.subr.mxu0 0.0
  %3123 = vmatpush1.xpose.msra.mxu0 0.0
  %3124 = vmatprep.subr.mxu0 0.0
  %3125 = vmatpush1.xpose.msra.mxu0 %v3092
  %3126 = vmatprep.subr.mxu0 0.0
  %3127 = vmatpush2.xpose.msra.mxu0 0.0
  %3128 = vmatprep.subr.mxu0 0.0
  %3129 = vmatpush2.xpose.msra.mxu0 0.0
  %3130 = vmatprep.subr.mxu0 0.0
  %3131 = vmatpush2.xpose.msra.mxu0 0.0
  %3132 = vmatprep.subr.mxu0 0.0
  %3133 = vmatpush2.xpose.msra.mxu0 0.0
  %3134 = vmatprep.subr.mxu0 0.0
  %3135 = vmatpush2.xpose.msra.mxu0 0.0
  %3136 = vmatprep.subr.mxu0 0.0
  %3137 = vmatpush2.xpose.msra.mxu0 0.0
  %3138 = vmatprep.subr.mxu0 0.0
  %3139 = vmatpush2.xpose.msra.mxu0 0.0
  %3140 = vmatprep.subr.mxu0 0.0
  %3141 = vmatpush2.xpose.msra.mxu0 0.0
  %3142 = vmatprep.subr.mxu0 0.0
  %3143 = vmatpush2.xpose.msra.mxu0 0.0
  %3144 = vmatprep.subr.mxu0 0.0
  %3145 = vmatpush2.xpose.msra.mxu0 0.0
  %3146 = vmatprep.subr.mxu0 0.0
  %3147 = vmatpush2.xpose.msra.mxu0 0.0
  %3148 = vmatprep.subr.mxu0 0.0
  %3149 = vmatpush2.xpose.msra.mxu0 0.0
  %3150 = vmatprep.subr.mxu0 0.0
  %3151 = vmatpush2.xpose.msra.mxu0 0.0
  %3152 = vmatprep.subr.mxu0 0.0
  %3153 = vmatpush2.xpose.msra.mxu0 0.0
  %3154 = vmatprep.subr.mxu0 0.0
  %3155 = vmatpush2.xpose.msra.mxu0 0.0
  %3156 = vmatprep.subr.mxu0 0.0
  %3157 = vmatpush2.xpose.msra.mxu0 0.0
  %3158 = vmatprep.mubr.f32.mxu0 0.0
  %3159 = vmatmul.mubr.f32.gmra.mxu0 %v3090
  %v3160 = vpop.f32.mrf.mxu0
  %v3161 = vadd.f32 0.0, %v3160
  %v3162 = vpop.f32.mrf.mxu0
  %3163 = vdwg.mxu0
  %v3164 = vsel %vm56, %v3161, -1e+09
  %v3165 = vsel %vm216, %v3164, -inf
  %3166 = vmax.xlane.f32.xlu0 %v3165
  %v3167 = vpop.xlane.xlu0 %3166
  %v3168 = vsub.f32 %v3164, %v3167
  %v3169 = vmul.f32 %v3168, 1.442695
  %v3170 = vpow.pop %v3169
  %v3171 = vsel %vm216, %v3170, 0.0
  %3172 = vadd.xlane.f32.xlu0 %v3171
  %v3173 = vpop.xlane.xlu0 %3172
  %3174 = vrot.lane.b32.xlu0 %v2072, 48
  %v3175 = vpop.permute.xlu0 %3174
  %v3178 = vsel %vm216, %v3170, 0
  %3180 = vmatprep.subr.mxu0 0.0
  %3181 = vmatpush1.msra.mxu0 0.0
  %3182 = vmatprep.subr.mxu0 0.0
  %3183 = vmatpush1.msra.mxu0 0.0
  %3184 = vmatprep.subr.mxu0 0.0
  %3185 = vmatpush1.msra.mxu0 0.0
  %3186 = vmatprep.subr.mxu0 0.0
  %3187 = vmatpush1.msra.mxu0 0.0
  %3188 = vmatprep.subr.mxu0 0.0
  %3189 = vmatpush1.msra.mxu0 0.0
  %3190 = vmatprep.subr.mxu0 0.0
  %3191 = vmatpush1.msra.mxu0 0.0
  %3192 = vmatprep.subr.mxu0 0.0
  %3193 = vmatpush1.msra.mxu0 0.0
  %3194 = vmatprep.subr.mxu0 0.0
  %3195 = vmatpush1.msra.mxu0 0.0
  %3196 = vmatprep.subr.mxu0 0.0
  %3197 = vmatpush1.msra.mxu0 0.0
  %3198 = vmatprep.subr.mxu0 0.0
  %3199 = vmatpush1.msra.mxu0 0.0
  %3200 = vmatprep.subr.mxu0 0.0
  %3201 = vmatpush1.msra.mxu0 0.0
  %3202 = vmatprep.subr.mxu0 0.0
  %3203 = vmatpush1.msra.mxu0 0.0
  %3204 = vmatprep.subr.mxu0 0.0
  %3205 = vmatpush1.msra.mxu0 0.0
  %3206 = vmatprep.subr.mxu0 0.0
  %3207 = vmatpush1.msra.mxu0 0.0
  %3208 = vmatprep.subr.mxu0 0.0
  %3209 = vmatpush1.msra.mxu0 0.0
  %3210 = vmatprep.subr.mxu0 0.0
  %3211 = vmatpush1.msra.mxu0 %v3175
  %3212 = vmatprep.subr.mxu0 0.0
  %3213 = vmatpush2.msra.mxu0 0.0
  %3214 = vmatprep.subr.mxu0 0.0
  %3215 = vmatpush2.msra.mxu0 0.0
  %3216 = vmatprep.subr.mxu0 0.0
  %3217 = vmatpush2.msra.mxu0 0.0
  %3218 = vmatprep.subr.mxu0 0.0
  %3219 = vmatpush2.msra.mxu0 0.0
  %3220 = vmatprep.subr.mxu0 0.0
  %3221 = vmatpush2.msra.mxu0 0.0
  %3222 = vmatprep.subr.mxu0 0.0
  %3223 = vmatpush2.msra.mxu0 0.0
  %3224 = vmatprep.subr.mxu0 0.0
  %3225 = vmatpush2.msra.mxu0 0.0
  %3226 = vmatprep.subr.mxu0 0.0
  %3227 = vmatpush2.msra.mxu0 0.0
  %3228 = vmatprep.subr.mxu0 0.0
  %3229 = vmatpush2.msra.mxu0 0.0
  %3230 = vmatprep.subr.mxu0 0.0
  %3231 = vmatpush2.msra.mxu0 0.0
  %3232 = vmatprep.subr.mxu0 0.0
  %3233 = vmatpush2.msra.mxu0 0.0
  %3234 = vmatprep.subr.mxu0 0.0
  %3235 = vmatpush2.msra.mxu0 0.0
  %3236 = vmatprep.subr.mxu0 0.0
  %3237 = vmatpush2.msra.mxu0 0.0
  %3238 = vmatprep.subr.mxu0 0.0
  %3239 = vmatpush2.msra.mxu0 0.0
  %3240 = vmatprep.subr.mxu0 0.0
  %3241 = vmatpush2.msra.mxu0 0.0
  %3242 = vmatprep.subr.mxu0 0.0
  %3243 = vmatpush2.msra.mxu0 0.0
  %3244 = vmatprep.mubr.f32.mxu0 0.0
  %3245 = vmatmul.mubr.f32.gmra.mxu0 %v3178
  %v3246 = vpop.f32.mrf.mxu0
  %v3247 = vadd.f32 0.0, %v3246
  %v3248 = vpop.f32.mrf.mxu0
  %3249 = vdwg.mxu0
  %v3250 = vrcp.pop %v3173
  %v3251 = vmul.f32 %v3247, %v3250
  %3252 = vrot.lane.b32.xlu0 %v2050, 104
  %v3253 = vpop.permute.xlu0 %3252
  %3254 = vrot.lane.b32.xlu0 %v2061, 72
  %v3255 = vpop.permute.xlu0 %3254
  %v3256 = vsel %vm216, %v3253, 0
  %v3258 = vsel %vm216, %v3255, 0
  %3260 = vmatprep.subr.mxu0 0.0
  %3261 = vmatpush1.xpose.msra.mxu0 0.0
  %3262 = vmatprep.subr.mxu0 0.0
  %3263 = vmatpush1.xpose.msra.mxu0 0.0
  %3264 = vmatprep.subr.mxu0 0.0
  %3265 = vmatpush1.xpose.msra.mxu0 0.0
  %3266 = vmatprep.subr.mxu0 0.0
  %3267 = vmatpush1.xpose.msra.mxu0 0.0
  %3268 = vmatprep.subr.mxu0 0.0
  %3269 = vmatpush1.xpose.msra.mxu0 0.0
  %3270 = vmatprep.subr.mxu0 0.0
  %3271 = vmatpush1.xpose.msra.mxu0 0.0
  %3272 = vmatprep.subr.mxu0 0.0
  %3273 = vmatpush1.xpose.msra.mxu0 0.0
  %3274 = vmatprep.subr.mxu0 0.0
  %3275 = vmatpush1.xpose.msra.mxu0 0.0
  %3276 = vmatprep.subr.mxu0 0.0
  %3277 = vmatpush1.xpose.msra.mxu0 0.0
  %3278 = vmatprep.subr.mxu0 0.0
  %3279 = vmatpush1.xpose.msra.mxu0 0.0
  %3280 = vmatprep.subr.mxu0 0.0
  %3281 = vmatpush1.xpose.msra.mxu0 0.0
  %3282 = vmatprep.subr.mxu0 0.0
  %3283 = vmatpush1.xpose.msra.mxu0 0.0
  %3284 = vmatprep.subr.mxu0 0.0
  %3285 = vmatpush1.xpose.msra.mxu0 0.0
  %3286 = vmatprep.subr.mxu0 0.0
  %3287 = vmatpush1.xpose.msra.mxu0 0.0
  %3288 = vmatprep.subr.mxu0 0.0
  %3289 = vmatpush1.xpose.msra.mxu0 0.0
  %3290 = vmatprep.subr.mxu0 0.0
  %3291 = vmatpush1.xpose.msra.mxu0 %v3258
  %3292 = vmatprep.subr.mxu0 0.0
  %3293 = vmatpush2.xpose.msra.mxu0 0.0
  %3294 = vmatprep.subr.mxu0 0.0
  %3295 = vmatpush2.xpose.msra.mxu0 0.0
  %3296 = vmatprep.subr.mxu0 0.0
  %3297 = vmatpush2.xpose.msra.mxu0 0.0
  %3298 = vmatprep.subr.mxu0 0.0
  %3299 = vmatpush2.xpose.msra.mxu0 0.0
  %3300 = vmatprep.subr.mxu0 0.0
  %3301 = vmatpush2.xpose.msra.mxu0 0.0
  %3302 = vmatprep.subr.mxu0 0.0
  %3303 = vmatpush2.xpose.msra.mxu0 0.0
  %3304 = vmatprep.subr.mxu0 0.0
  %3305 = vmatpush2.xpose.msra.mxu0 0.0
  %3306 = vmatprep.subr.mxu0 0.0
  %3307 = vmatpush2.xpose.msra.mxu0 0.0
  %3308 = vmatprep.subr.mxu0 0.0
  %3309 = vmatpush2.xpose.msra.mxu0 0.0
  %3310 = vmatprep.subr.mxu0 0.0
  %3311 = vmatpush2.xpose.msra.mxu0 0.0
  %3312 = vmatprep.subr.mxu0 0.0
  %3313 = vmatpush2.xpose.msra.mxu0 0.0
  %3314 = vmatprep.subr.mxu0 0.0
  %3315 = vmatpush2.xpose.msra.mxu0 0.0
  %3316 = vmatprep.subr.mxu0 0.0
  %3317 = vmatpush2.xpose.msra.mxu0 0.0
  %3318 = vmatprep.subr.mxu0 0.0
  %3319 = vmatpush2.xpose.msra.mxu0 0.0
  %3320 = vmatprep.subr.mxu0 0.0
  %3321 = vmatpush2.xpose.msra.mxu0 0.0
  %3322 = vmatprep.subr.mxu0 0.0
  %3323 = vmatpush2.xpose.msra.mxu0 0.0
  %3324 = vmatprep.mubr.f32.mxu0 0.0
  %3325 = vmatmul.mubr.f32.gmra.mxu0 %v3256
  %v3326 = vpop.f32.mrf.mxu0
  %v3327 = vadd.f32 0.0, %v3326
  %v3328 = vpop.f32.mrf.mxu0
  %3329 = vdwg.mxu0
  %v3330 = vsel %vm56, %v3327, -1e+09
  %v3331 = vsel %vm216, %v3330, -inf
  %3332 = vmax.xlane.f32.xlu0 %v3331
  %v3333 = vpop.xlane.xlu0 %3332
  %v3334 = vsub.f32 %v3330, %v3333
  %v3335 = vmul.f32 %v3334, 1.442695
  %v3336 = vpow.pop %v3335
  %v3337 = vsel %vm216, %v3336, 0.0
  %3338 = vadd.xlane.f32.xlu0 %v3337
  %v3339 = vpop.xlane.xlu0 %3338
  %3340 = vrot.lane.b32.xlu0 %v2072, 40
  %v3341 = vpop.permute.xlu0 %3340
  %v3344 = vsel %vm216, %v3336, 0
  %3346 = vmatprep.subr.mxu0 0.0
  %3347 = vmatpush1.msra.mxu0 0.0
  %3348 = vmatprep.subr.mxu0 0.0
  %3349 = vmatpush1.msra.mxu0 0.0
  %3350 = vmatprep.subr.mxu0 0.0
  %3351 = vmatpush1.msra.mxu0 0.0
  %3352 = vmatprep.subr.mxu0 0.0
  %3353 = vmatpush1.msra.mxu0 0.0
  %3354 = vmatprep.subr.mxu0 0.0
  %3355 = vmatpush1.msra.mxu0 0.0
  %3356 = vmatprep.subr.mxu0 0.0
  %3357 = vmatpush1.msra.mxu0 0.0
  %3358 = vmatprep.subr.mxu0 0.0
  %3359 = vmatpush1.msra.mxu0 0.0
  %3360 = vmatprep.subr.mxu0 0.0
  %3361 = vmatpush1.msra.mxu0 0.0
  %3362 = vmatprep.subr.mxu0 0.0
  %3363 = vmatpush1.msra.mxu0 0.0
  %3364 = vmatprep.subr.mxu0 0.0
  %3365 = vmatpush1.msra.mxu0 0.0
  %3366 = vmatprep.subr.mxu0 0.0
  %3367 = vmatpush1.msra.mxu0 0.0
  %3368 = vmatprep.subr.mxu0 0.0
  %3369 = vmatpush1.msra.mxu0 0.0
  %3370 = vmatprep.subr.mxu0 0.0
  %3371 = vmatpush1.msra.mxu0 0.0
  %3372 = vmatprep.subr.mxu0 0.0
  %3373 = vmatpush1.msra.mxu0 0.0
  %3374 = vmatprep.subr.mxu0 0.0
  %3375 = vmatpush1.msra.mxu0 0.0
  %3376 = vmatprep.subr.mxu0 0.0
  %3377 = vmatpush1.msra.mxu0 %v3341
  %3378 = vmatprep.subr.mxu0 0.0
  %3379 = vmatpush2.msra.mxu0 0.0
  %3380 = vmatprep.subr.mxu0 0.0
  %3381 = vmatpush2.msra.mxu0 0.0
  %3382 = vmatprep.subr.mxu0 0.0
  %3383 = vmatpush2.msra.mxu0 0.0
  %3384 = vmatprep.subr.mxu0 0.0
  %3385 = vmatpush2.msra.mxu0 0.0
  %3386 = vmatprep.subr.mxu0 0.0
  %3387 = vmatpush2.msra.mxu0 0.0
  %3388 = vmatprep.subr.mxu0 0.0
  %3389 = vmatpush2.msra.mxu0 0.0
  %3390 = vmatprep.subr.mxu0 0.0
  %3391 = vmatpush2.msra.mxu0 0.0
  %3392 = vmatprep.subr.mxu0 0.0
  %3393 = vmatpush2.msra.mxu0 0.0
  %3394 = vmatprep.subr.mxu0 0.0
  %3395 = vmatpush2.msra.mxu0 0.0
  %3396 = vmatprep.subr.mxu0 0.0
  %3397 = vmatpush2.msra.mxu0 0.0
  %3398 = vmatprep.subr.mxu0 0.0
  %3399 = vmatpush2.msra.mxu0 0.0
  %3400 = vmatprep.subr.mxu0 0.0
  %3401 = vmatpush2.msra.mxu0 0.0
  %3402 = vmatprep.subr.mxu0 0.0
  %3403 = vmatpush2.msra.mxu0 0.0
  %3404 = vmatprep.subr.mxu0 0.0
  %3405 = vmatpush2.msra.mxu0 0.0
  %3406 = vmatprep.subr.mxu0 0.0
  %3407 = vmatpush2.msra.mxu0 0.0
  %3408 = vmatprep.subr.mxu0 0.0
  %3409 = vmatpush2.msra.mxu0 0.0
  %3410 = vmatprep.mubr.f32.mxu0 0.0
  %3411 = vmatmul.mubr.f32.gmra.mxu0 %v3344
  %v3412 = vpop.f32.mrf.mxu0
  %v3413 = vadd.f32 0.0, %v3412
  %v3414 = vpop.f32.mrf.mxu0
  %3415 = vdwg.mxu0
  %v3416 = vrcp.pop %v3339
  %v3417 = vmul.f32 %v3413, %v3416
  %3419 = vrot.lane.b32.xlu0 %v3085, 8
  %v3420 = vpop.permute.xlu0 %3419
  %3423 = vrot.lane.b32.xlu0 %v3251, 16
  %v3424 = vpop.permute.xlu0 %3423
  %3427 = vrot.lane.b32.xlu0 %v3417, 24
  %v3428 = vpop.permute.xlu0 %3427
  %v3430 = vsel %vm216, %v2919, %v3420
  %v3431 = vsel %vm892, %v3430, %v3424
  %v3432 = vsel %vm894, %v3431, %v3428
  %s3433 = scalar_lea.vmem %s5, 32
  %v3434 = vld [vmem:[%s3433] sm:$0xff]
  %v3435 = vld [vmem:[%s3433 + $0x8] sm:$0xff]
  %v3436 = vld [vmem:[%s3433 + $0x10] sm:$0xff]
  %v3437 = vld [vmem:[%s3433 + $0x18] sm:$0xff]
  %v3439 = vsel %vm59, %v2752, 0
  %v3442 = vsel %vm59, %v3432, 0
  %3444 = vmatprep.subr.mxu0 0.0
  %3445 = vmatpush1.msra.mxu0 0.0
  %3446 = vmatprep.subr.mxu0 0.0
  %3447 = vmatpush1.msra.mxu0 0.0
  %3448 = vmatprep.subr.mxu0 0.0
  %3449 = vmatpush1.msra.mxu0 0.0
  %3450 = vmatprep.subr.mxu0 0.0
  %3451 = vmatpush1.msra.mxu0 0.0
  %3452 = vmatprep.subr.mxu0 0.0
  %3453 = vmatpush1.msra.mxu0 0.0
  %3454 = vmatprep.subr.mxu0 0.0
  %3455 = vmatpush1.msra.mxu0 0.0
  %3456 = vmatprep.subr.mxu0 0.0
  %3457 = vmatpush1.msra.mxu0 0.0
  %3458 = vmatprep.subr.mxu0 0.0
  %3459 = vmatpush1.msra.mxu0 0.0
  %3460 = vmatprep.subr.mxu0 0.0
  %3461 = vmatpush1.msra.mxu0 0.0
  %3462 = vmatprep.subr.mxu0 0.0
  %3463 = vmatpush1.msra.mxu0 0.0
  %3464 = vmatprep.subr.mxu0 0.0
  %3465 = vmatpush1.msra.mxu0 0.0
  %3466 = vmatprep.subr.mxu0 0.0
  %3467 = vmatpush1.msra.mxu0 0.0
  %3468 = vmatprep.subr.mxu0 0.0
  %3469 = vmatpush1.msra.mxu0 %v3437
  %3470 = vmatprep.subr.mxu0 0.0
  %3471 = vmatpush1.msra.mxu0 %v3436
  %3472 = vmatprep.subr.mxu0 0.0
  %3473 = vmatpush1.msra.mxu0 %v3435
  %3474 = vmatprep.subr.mxu0 0.0
  %3475 = vmatpush1.msra.mxu0 %v3434
  %3476 = vmatprep.subr.mxu0 0.0
  %3477 = vmatpush2.msra.mxu0 0.0
  %3478 = vmatprep.subr.mxu0 0.0
  %3479 = vmatpush2.msra.mxu0 0.0
  %3480 = vmatprep.subr.mxu0 0.0
  %3481 = vmatpush2.msra.mxu0 0.0
  %3482 = vmatprep.subr.mxu0 0.0
  %3483 = vmatpush2.msra.mxu0 0.0
  %3484 = vmatprep.subr.mxu0 0.0
  %3485 = vmatpush2.msra.mxu0 0.0
  %3486 = vmatprep.subr.mxu0 0.0
  %3487 = vmatpush2.msra.mxu0 0.0
  %3488 = vmatprep.subr.mxu0 0.0
  %3489 = vmatpush2.msra.mxu0 0.0
  %3490 = vmatprep.subr.mxu0 0.0
  %3491 = vmatpush2.msra.mxu0 0.0
  %3492 = vmatprep.subr.mxu0 0.0
  %3493 = vmatpush2.msra.mxu0 0.0
  %3494 = vmatprep.subr.mxu0 0.0
  %3495 = vmatpush2.msra.mxu0 0.0
  %3496 = vmatprep.subr.mxu0 0.0
  %3497 = vmatpush2.msra.mxu0 0.0
  %3498 = vmatprep.subr.mxu0 0.0
  %3499 = vmatpush2.msra.mxu0 0.0
  %3500 = vmatprep.subr.mxu0 0.0
  %3501 = vmatpush2.msra.mxu0 0.0
  %3502 = vmatprep.subr.mxu0 0.0
  %3503 = vmatpush2.msra.mxu0 0.0
  %3504 = vmatprep.subr.mxu0 0.0
  %3505 = vmatpush2.msra.mxu0 0.0
  %3506 = vmatprep.subr.mxu0 0.0
  %3507 = vmatpush2.msra.mxu0 0.0
  %3508 = vmatprep.mubr.f32.mxu0 0.0
  %3509 = vmatmul.mubr.f32.gmra.mxu0 %v3439
  %v3510 = vpop.f32.mrf.mxu0
  %v3511 = vadd.f32 0.0, %v3510
  %v3512 = vpop.f32.mrf.mxu0
  %3513 = vmatprep.mubr.f32.mxu0 0.0
  %3514 = vmatmul.mubr.f32.gmra.mxu0 %v3442
  %v3515 = vpop.f32.mrf.mxu0
  %v3516 = vadd.f32 0.0, %v3515
  %v3517 = vpop.f32.mrf.mxu0
  %3518 = vdwg.mxu0
  %v3519 = vadd.f32 %v1916, %v3511
  %v3520 = vadd.f32 %v1917, %v3516
  %v3521 = vld [vmem:[%s2 + $0x10] sm:$0x1]
  %v3522 = vlaneseq
  %v3523 = vshrl.u32 %v3522, 7
  %v3524 = vsub.s32 0, %v3523
  %v3525 = vrot.slane %v3521, %v3524
  %v3526 = vadd.f32 %v3519, %v3525
  %v3527 = vadd.f32 %v3520, %v3525
  %v3528 = vld [vmem:[%s2 + $0xb] sm:$0x1]
  %v3529 = vld [vmem:[%s2 + $0xc] sm:$0x1]
  %v3530 = vsel %vm59, %v3526, 0.0
  %3531 = vadd.xlane.f32.xlu0 %v3530
  %v3532 = vpop.xlane.xlu0 %3531
  %v3533 = vsel %vm59, %v3527, 0.0
  %3534 = vadd.xlane.f32.xlu0 %v3533
  %v3535 = vpop.xlane.xlu0 %3534
  %v3536 = vmul.f32 %v3532, %v66
  %v3537 = vmul.f32 %v3535, %v66
  %v3538 = vsub.f32 %v3526, %v3536
  %v3539 = vsub.f32 %v3527, %v3537
  %v3540 = vmul.f32 %v3538, %v3538
  %v3541 = vmul.f32 %v3539, %v3539
  %v3542 = vsel %vm59, %v3540, 0.0
  %3543 = vadd.xlane.f32.xlu0 %v3542
  %v3544 = vpop.xlane.xlu0 %3543
  %v3545 = vsel %vm59, %v3541, 0.0
  %3546 = vadd.xlane.f32.xlu0 %v3545
  %v3547 = vpop.xlane.xlu0 %3546
  %v3548 = vmul.f32 %v3544, %v66
  %v3549 = vmul.f32 %v3547, %v66
  %v3550 = vadd.f32 %v3548, 1e-05
  %v3551 = vadd.f32 %v3549, 1e-05
  %v3552 = vrsqrt.pop %v3550
  %v3553 = vrsqrt.pop %v3551
  %v3554 = vmul.f32 %v3538, %v3552
  %v3555 = vmul.f32 %v3539, %v3553
  %v3556 = vlaneseq
  %v3557 = vshrl.u32 %v3556, 7
  %v3558 = vsub.s32 0, %v3557
  %v3559 = vrot.slane %v3528, %v3558
  %v3560 = vmul.f32 %v3554, %v3559
  %v3561 = vmul.f32 %v3555, %v3559
  %v3562 = vlaneseq
  %v3563 = vshrl.u32 %v3562, 7
  %v3564 = vsub.s32 0, %v3563
  %v3565 = vrot.slane %v3529, %v3564
  %v3566 = vadd.f32 %v3560, %v3565
  %v3567 = vadd.f32 %v3561, %v3565
  %s3568 = scalar_lea.vmem %s6, 32
  %v3569 = vld [vmem:[%s3568] sm:$0xff]
  %v3570 = vld [vmem:[%s3568 + $0x8] sm:$0xff]
  %v3571 = vld [vmem:[%s3568 + $0x10] sm:$0xff]
  %v3572 = vld [vmem:[%s3568 + $0x18] sm:$0xff]
  %v3573 = vld [vmem:[%s3 + $0x1] sm:$0x1]
  %v3574 = vlaneseq
  %v3575 = vshrl.u32 %v3574, 7
  %v3576 = vsub.s32 0, %v3575
  %v3577 = vrot.slane %v3573, %v3576
  %v3579 = vsel %vm59, %v3566, 0
  %v3582 = vsel %vm59, %v3567, 0
  %3584 = vmatprep.subr.mxu0 0.0
  %3585 = vmatpush1.msra.mxu0 0.0
  %3586 = vmatprep.subr.mxu0 0.0
  %3587 = vmatpush1.msra.mxu0 0.0
  %3588 = vmatprep.subr.mxu0 0.0
  %3589 = vmatpush1.msra.mxu0 0.0
  %3590 = vmatprep.subr.mxu0 0.0
  %3591 = vmatpush1.msra.mxu0 0.0
  %3592 = vmatprep.subr.mxu0 0.0
  %3593 = vmatpush1.msra.mxu0 0.0
  %3594 = vmatprep.subr.mxu0 0.0
  %3595 = vmatpush1.msra.mxu0 0.0
  %3596 = vmatprep.subr.mxu0 0.0
  %3597 = vmatpush1.msra.mxu0 0.0
  %3598 = vmatprep.subr.mxu0 0.0
  %3599 = vmatpush1.msra.mxu0 0.0
  %3600 = vmatprep.subr.mxu0 0.0
  %3601 = vmatpush1.msra.mxu0 0.0
  %3602 = vmatprep.subr.mxu0 0.0
  %3603 = vmatpush1.msra.mxu0 0.0
  %3604 = vmatprep.subr.mxu0 0.0
  %3605 = vmatpush1.msra.mxu0 0.0
  %3606 = vmatprep.subr.mxu0 0.0
  %3607 = vmatpush1.msra.mxu0 0.0
  %3608 = vmatprep.subr.mxu0 0.0
  %3609 = vmatpush1.msra.mxu0 %v3572
  %3610 = vmatprep.subr.mxu0 0.0
  %3611 = vmatpush1.msra.mxu0 %v3571
  %3612 = vmatprep.subr.mxu0 0.0
  %3613 = vmatpush1.msra.mxu0 %v3570
  %3614 = vmatprep.subr.mxu0 0.0
  %3615 = vmatpush1.msra.mxu0 %v3569
  %3616 = vmatprep.subr.mxu0 0.0
  %3617 = vmatpush2.msra.mxu0 0.0
  %3618 = vmatprep.subr.mxu0 0.0
  %3619 = vmatpush2.msra.mxu0 0.0
  %3620 = vmatprep.subr.mxu0 0.0
  %3621 = vmatpush2.msra.mxu0 0.0
  %3622 = vmatprep.subr.mxu0 0.0
  %3623 = vmatpush2.msra.mxu0 0.0
  %3624 = vmatprep.subr.mxu0 0.0
  %3625 = vmatpush2.msra.mxu0 0.0
  %3626 = vmatprep.subr.mxu0 0.0
  %3627 = vmatpush2.msra.mxu0 0.0
  %3628 = vmatprep.subr.mxu0 0.0
  %3629 = vmatpush2.msra.mxu0 0.0
  %3630 = vmatprep.subr.mxu0 0.0
  %3631 = vmatpush2.msra.mxu0 0.0
  %3632 = vmatprep.subr.mxu0 0.0
  %3633 = vmatpush2.msra.mxu0 0.0
  %3634 = vmatprep.subr.mxu0 0.0
  %3635 = vmatpush2.msra.mxu0 0.0
  %3636 = vmatprep.subr.mxu0 0.0
  %3637 = vmatpush2.msra.mxu0 0.0
  %3638 = vmatprep.subr.mxu0 0.0
  %3639 = vmatpush2.msra.mxu0 0.0
  %3640 = vmatprep.subr.mxu0 0.0
  %3641 = vmatpush2.msra.mxu0 0.0
  %3642 = vmatprep.subr.mxu0 0.0
  %3643 = vmatpush2.msra.mxu0 0.0
  %3644 = vmatprep.subr.mxu0 0.0
  %3645 = vmatpush2.msra.mxu0 0.0
  %3646 = vmatprep.subr.mxu0 0.0
  %3647 = vmatpush2.msra.mxu0 0.0
  %3648 = vmatprep.mubr.f32.mxu0 0.0
  %3649 = vmatmul.mubr.f32.gmra.mxu0 %v3579
  %v3650 = vpop.f32.mrf.mxu0
  %v3651 = vadd.f32 %v3577, %v3650
  %v3652 = vpop.f32.mrf.mxu0
  %3653 = vmatprep.mubr.f32.mxu0 0.0
  %3654 = vmatmul.mubr.f32.gmra.mxu0 %v3582
  %v3655 = vpop.f32.mrf.mxu0
  %v3656 = vadd.f32 %v3577, %v3655
  %v3657 = vpop.f32.mrf.mxu0
  %3658 = vdwg.mxu0
  %v3659 = vmul.f32 %v3651, 0.5
  %v3660 = vmul.f32 %v3656, 0.5
  %v3661 = vmul.f32 %v3651, 0.044715
  %v3662 = vmul.f32 %v3656, 0.044715
  %v3663 = vmul.f32 %v3661, %v3651
  %v3664 = vmul.f32 %v3662, %v3656
  %v3665 = vmul.f32 %v3663, %v3651
  %v3666 = vmul.f32 %v3664, %v3656
  %v3667 = vadd.f32 %v3651, %v3665
  %v3668 = vadd.f32 %v3656, %v3666
  %v3669 = vmul.f32 %v3667, 0.7978846
  %v3670 = vmul.f32 %v3668, 0.7978846
  %v3671 = vtanh.pop %v3669
  %v3672 = vtanh.pop %v3670
  %v3673 = vadd.f32 %v3671, 1.0
  %v3674 = vadd.f32 %v3672, 1.0
  %v3675 = vmul.f32 %v3659, %v3673
  %v3676 = vmul.f32 %v3660, %v3674
  %s3677 = scalar_lea.vmem %s7, 128
  %v3678 = vld [vmem:[%s3677] sm:$0xff]
  %v3679 = vld [vmem:[%s3677 + $0x8] sm:$0xff]
  %v3680 = vld [vmem:[%s3677 + $0x10] sm:$0xff]
  %v3681 = vld [vmem:[%s3677 + $0x18] sm:$0xff]
  %v3682 = vld [vmem:[%s3677 + $0x20] sm:$0xff]
  %v3683 = vld [vmem:[%s3677 + $0x28] sm:$0xff]
  %v3684 = vld [vmem:[%s3677 + $0x30] sm:$0xff]
  %v3685 = vld [vmem:[%s3677 + $0x38] sm:$0xff]
  %v3686 = vld [vmem:[%s3677 + $0x40] sm:$0xff]
  %v3687 = vld [vmem:[%s3677 + $0x48] sm:$0xff]
  %v3688 = vld [vmem:[%s3677 + $0x50] sm:$0xff]
  %v3689 = vld [vmem:[%s3677 + $0x58] sm:$0xff]
  %v3690 = vld [vmem:[%s3677 + $0x60] sm:$0xff]
  %v3691 = vld [vmem:[%s3677 + $0x68] sm:$0xff]
  %v3692 = vld [vmem:[%s3677 + $0x70] sm:$0xff]
  %v3693 = vld [vmem:[%s3677 + $0x78] sm:$0xff]
  %3694 = vmatprep.subr.mxu0 0.0
  %3695 = vmatpush1.msra.mxu0 %v3693
  %3696 = vmatprep.subr.mxu0 0.0
  %3697 = vmatpush1.msra.mxu0 %v3692
  %3698 = vmatprep.subr.mxu0 0.0
  %3699 = vmatpush1.msra.mxu0 %v3691
  %3700 = vmatprep.subr.mxu0 0.0
  %3701 = vmatpush1.msra.mxu0 %v3690
  %3702 = vmatprep.subr.mxu0 0.0
  %3703 = vmatpush1.msra.mxu0 %v3689
  %3704 = vmatprep.subr.mxu0 0.0
  %3705 = vmatpush1.msra.mxu0 %v3688
  %3706 = vmatprep.subr.mxu0 0.0
  %3707 = vmatpush1.msra.mxu0 %v3687
  %3708 = vmatprep.subr.mxu0 0.0
  %3709 = vmatpush1.msra.mxu0 %v3686
  %3710 = vmatprep.subr.mxu0 0.0
  %3711 = vmatpush1.msra.mxu0 %v3685
  %3712 = vmatprep.subr.mxu0 0.0
  %3713 = vmatpush1.msra.mxu0 %v3684
  %3714 = vmatprep.subr.mxu0 0.0
  %3715 = vmatpush1.msra.mxu0 %v3683
  %3716 = vmatprep.subr.mxu0 0.0
  %3717 = vmatpush1.msra.mxu0 %v3682
  %3718 = vmatprep.subr.mxu0 0.0
  %3719 = vmatpush1.msra.mxu0 %v3681
  %3720 = vmatprep.subr.mxu0 0.0
  %3721 = vmatpush1.msra.mxu0 %v3680
  %3722 = vmatprep.subr.mxu0 0.0
  %3723 = vmatpush1.msra.mxu0 %v3679
  %3724 = vmatprep.subr.mxu0 0.0
  %3725 = vmatpush1.msra.mxu0 %v3678
  %3726 = vmatprep.subr.mxu0 0.0
  %3727 = vmatpush2.msra.mxu0 0.0
  %3728 = vmatprep.subr.mxu0 0.0
  %3729 = vmatpush2.msra.mxu0 0.0
  %3730 = vmatprep.subr.mxu0 0.0
  %3731 = vmatpush2.msra.mxu0 0.0
  %3732 = vmatprep.subr.mxu0 0.0
  %3733 = vmatpush2.msra.mxu0 0.0
  %3734 = vmatprep.subr.mxu0 0.0
  %3735 = vmatpush2.msra.mxu0 0.0
  %3736 = vmatprep.subr.mxu0 0.0
  %3737 = vmatpush2.msra.mxu0 0.0
  %3738 = vmatprep.subr.mxu0 0.0
  %3739 = vmatpush2.msra.mxu0 0.0
  %3740 = vmatprep.subr.mxu0 0.0
  %3741 = vmatpush2.msra.mxu0 0.0
  %3742 = vmatprep.subr.mxu0 0.0
  %3743 = vmatpush2.msra.mxu0 0.0
  %3744 = vmatprep.subr.mxu0 0.0
  %3745 = vmatpush2.msra.mxu0 0.0
  %3746 = vmatprep.subr.mxu0 0.0
  %3747 = vmatpush2.msra.mxu0 0.0
  %3748 = vmatprep.subr.mxu0 0.0
  %3749 = vmatpush2.msra.mxu0 0.0
  %3750 = vmatprep.subr.mxu0 0.0
  %3751 = vmatpush2.msra.mxu0 0.0
  %3752 = vmatprep.subr.mxu0 0.0
  %3753 = vmatpush2.msra.mxu0 0.0
  %3754 = vmatprep.subr.mxu0 0.0
  %3755 = vmatpush2.msra.mxu0 0.0
  %3756 = vmatprep.subr.mxu0 0.0
  %3757 = vmatpush2.msra.mxu0 0.0
  %3758 = vmatprep.mubr.f32.mxu0 0.0
  %3759 = vmatmul.mubr.f32.gmra.mxu0 %v3675
  %v3760 = vpop.f32.mrf.mxu0
  %v3761 = vadd.f32 0.0, %v3760
  %v3762 = vpop.f32.mrf.mxu0
  %3763 = vmatprep.mubr.f32.mxu0 0.0
  %3764 = vmatmul.mubr.f32.gmra.mxu0 %v3676
  %v3765 = vpop.f32.mrf.mxu0
  %v3766 = vadd.f32 0.0, %v3765
  %v3767 = vpop.f32.mrf.mxu0
  %3768 = vdwg.mxu0
  %v3769 = vadd.f32 %v3526, %v3761
  %v3770 = vadd.f32 %v3527, %v3766
  %v3771 = vld [vmem:[%s2 + $0x11] sm:$0x1]
  %v3772 = vlaneseq
  %v3773 = vshrl.u32 %v3772, 7
  %v3774 = vsub.s32 0, %v3773
  %v3775 = vrot.slane %v3771, %v3774
  %v3776 = vadd.f32 %v3769, %v3775
  %v3777 = vadd.f32 %v3770, %v3775
  %v3778 = vld [vmem:[%s2 + $0x12] sm:$0x1]
  %v3779 = vld [vmem:[%s2 + $0x13] sm:$0x1]
  %v3780 = vsel %vm59, %v3776, 0.0
  %3781 = vadd.xlane.f32.xlu0 %v3780
  %v3782 = vpop.xlane.xlu0 %3781
  %v3783 = vsel %vm59, %v3777, 0.0
  %3784 = vadd.xlane.f32.xlu0 %v3783
  %v3785 = vpop.xlane.xlu0 %3784
  %v3786 = vmul.f32 %v3782, %v66
  %v3787 = vmul.f32 %v3785, %v66
  %v3788 = vsub.f32 %v3776, %v3786
  %v3789 = vsub.f32 %v3777, %v3787
  %v3790 = vmul.f32 %v3788, %v3788
  %v3791 = vmul.f32 %v3789, %v3789
  %v3792 = vsel %vm59, %v3790, 0.0
  %3793 = vadd.xlane.f32.xlu0 %v3792
  %v3794 = vpop.xlane.xlu0 %3793
  %v3795 = vsel %vm59, %v3791, 0.0
  %3796 = vadd.xlane.f32.xlu0 %v3795
  %v3797 = vpop.xlane.xlu0 %3796
  %v3798 = vmul.f32 %v3794, %v66
  %v3799 = vmul.f32 %v3797, %v66
  %v3800 = vadd.f32 %v3798, 1e-05
  %v3801 = vadd.f32 %v3799, 1e-05
  %v3802 = vrsqrt.pop %v3800
  %v3803 = vrsqrt.pop %v3801
  %v3804 = vmul.f32 %v3788, %v3802
  %v3805 = vmul.f32 %v3789, %v3803
  %v3806 = vlaneseq
  %v3807 = vshrl.u32 %v3806, 7
  %v3808 = vsub.s32 0, %v3807
  %v3809 = vrot.slane %v3778, %v3808
  %v3810 = vmul.f32 %v3804, %v3809
  %v3811 = vmul.f32 %v3805, %v3809
  %v3812 = vlaneseq
  %v3813 = vshrl.u32 %v3812, 7
  %v3814 = vsub.s32 0, %v3813
  %v3815 = vrot.slane %v3779, %v3814
  %v3816 = vadd.f32 %v3810, %v3815
  %v3817 = vadd.f32 %v3811, %v3815
  %v3818 = vld [vmem:[%s8] sm:$0xff]
  %v3819 = vld [vmem:[%s8 + $0x8] sm:$0xff]
  %v3820 = vld [vmem:[%s8 + $0x10] sm:$0xff]
  %v3821 = vld [vmem:[%s8 + $0x18] sm:$0xff]
  %v3823 = vsel %vm59, %v3816, 0
  %v3826 = vsel %vm59, %v3817, 0
  %3828 = vmatprep.subr.mxu0 0.0
  %3829 = vmatpush1.msra.mxu0 0.0
  %3830 = vmatprep.subr.mxu0 0.0
  %3831 = vmatpush1.msra.mxu0 0.0
  %3832 = vmatprep.subr.mxu0 0.0
  %3833 = vmatpush1.msra.mxu0 0.0
  %3834 = vmatprep.subr.mxu0 0.0
  %3835 = vmatpush1.msra.mxu0 0.0
  %3836 = vmatprep.subr.mxu0 0.0
  %3837 = vmatpush1.msra.mxu0 0.0
  %3838 = vmatprep.subr.mxu0 0.0
  %3839 = vmatpush1.msra.mxu0 0.0
  %3840 = vmatprep.subr.mxu0 0.0
  %3841 = vmatpush1.msra.mxu0 0.0
  %3842 = vmatprep.subr.mxu0 0.0
  %3843 = vmatpush1.msra.mxu0 0.0
  %3844 = vmatprep.subr.mxu0 0.0
  %3845 = vmatpush1.msra.mxu0 0.0
  %3846 = vmatprep.subr.mxu0 0.0
  %3847 = vmatpush1.msra.mxu0 0.0
  %3848 = vmatprep.subr.mxu0 0.0
  %3849 = vmatpush1.msra.mxu0 0.0
  %3850 = vmatprep.subr.mxu0 0.0
  %3851 = vmatpush1.msra.mxu0 0.0
  %3852 = vmatprep.subr.mxu0 0.0
  %3853 = vmatpush1.msra.mxu0 %v3821
  %3854 = vmatprep.subr.mxu0 0.0
  %3855 = vmatpush1.msra.mxu0 %v3820
  %3856 = vmatprep.subr.mxu0 0.0
  %3857 = vmatpush1.msra.mxu0 %v3819
  %3858 = vmatprep.subr.mxu0 0.0
  %3859 = vmatpush1.msra.mxu0 %v3818
  %3860 = vmatprep.subr.mxu0 0.0
  %3861 = vmatpush2.msra.mxu0 0.0
  %3862 = vmatprep.subr.mxu0 0.0
  %3863 = vmatpush2.msra.mxu0 0.0
  %3864 = vmatprep.subr.mxu0 0.0
  %3865 = vmatpush2.msra.mxu0 0.0
  %3866 = vmatprep.subr.mxu0 0.0
  %3867 = vmatpush2.msra.mxu0 0.0
  %3868 = vmatprep.subr.mxu0 0.0
  %3869 = vmatpush2.msra.mxu0 0.0
  %3870 = vmatprep.subr.mxu0 0.0
  %3871 = vmatpush2.msra.mxu0 0.0
  %3872 = vmatprep.subr.mxu0 0.0
  %3873 = vmatpush2.msra.mxu0 0.0
  %3874 = vmatprep.subr.mxu0 0.0
  %3875 = vmatpush2.msra.mxu0 0.0
  %3876 = vmatprep.subr.mxu0 0.0
  %3877 = vmatpush2.msra.mxu0 0.0
  %3878 = vmatprep.subr.mxu0 0.0
  %3879 = vmatpush2.msra.mxu0 0.0
  %3880 = vmatprep.subr.mxu0 0.0
  %3881 = vmatpush2.msra.mxu0 0.0
  %3882 = vmatprep.subr.mxu0 0.0
  %3883 = vmatpush2.msra.mxu0 0.0
  %3884 = vmatprep.subr.mxu0 0.0
  %3885 = vmatpush2.msra.mxu0 0.0
  %3886 = vmatprep.subr.mxu0 0.0
  %3887 = vmatpush2.msra.mxu0 0.0
  %3888 = vmatprep.subr.mxu0 0.0
  %3889 = vmatpush2.msra.mxu0 0.0
  %3890 = vmatprep.subr.mxu0 0.0
  %3891 = vmatpush2.msra.mxu0 0.0
  %3892 = vmatprep.mubr.f32.mxu0 0.0
  %3893 = vmatmul.mubr.f32.gmra.mxu0 %v3823
  %v3894 = vpop.f32.mrf.mxu0
  %v3895 = vadd.f32 0.0, %v3894
  %v3896 = vpop.f32.mrf.mxu0
  %3897 = vmatprep.mubr.f32.mxu0 0.0
  %3898 = vmatmul.mubr.f32.gmra.mxu0 %v3826
  %v3899 = vpop.f32.mrf.mxu0
  %v3900 = vadd.f32 0.0, %v3899
  %v3901 = vpop.f32.mrf.mxu0
  %3902 = vdwg.mxu0
  %3903 = vst [vmem:[%s9] sm:$0xff] %v3895
  %3904 = vst [vmem:[%s9 + $0x8] sm:$0xff] %v3900
  // Predicated region
  $region38: #{text_decoder_forward.1} parent=0 // pred_check
    _
  $region39: #{text_decoder_forward.1} parent=0 // pred_check_branch
    %3906 = sbr.rel (0) target = $region41
  $region40: #{text_decoder_forward.1} parent=0 // pred_region
    _
  $region41: #{text_decoder_forward.1} parent=0 // pred_fallthru
    _
  // Predicated region
  $region42: #{text_decoder_forward.1} parent=0 // pred_check
    _
  $region43: #{text_decoder_forward.1} parent=0 // pred_check_branch
    %3908 = sbr.rel (0) target = $region45
  $region44: #{text_decoder_forward.1} parent=0 // pred_region
    _
  $region45: #{text_decoder_forward.1} parent=0 // pred_fallthru
    _

</llo_original>
